<compile_context>
chip_gen: v7x
topology: tpu7x:2x2x1
jax: 0.10.0
libtpu: 0.0.40
codegen_flags: <defaults>
</compile_context>

<pallas_src>
import functools

import jax
import jax.numpy as jnp
from jax import lax
from jax.experimental import pallas as pl
from jax.experimental.pallas import tpu as pltpu

# ---------------------------- configuration ---------------------------------
B = 2          # batch
C = 32         # num_features (channels)
HEADS = 4
D = C // HEADS # per-head dim
W = 8          # spatial "width"  (MHSA width arg)
H = 16         # spatial "height" (MHSA height arg)
N = W * H      # flattened spatial = 128 (lane-friendly)
EPS = 1e-5


# ------------------------------ Pallas kernel --------------------------------
def vit_kernel(x_ref, wqkv_ref, cvec_ref, pos_ref, o_ref, *, heads, batch_block, n):
    # x_ref:    (C, BB*N)  channel-major, lane-dense input for this block
    # wqkv_ref: (3C, C)    stacked [Wq; Wk; scale*Wv] 1x1-conv weights
    # cvec_ref: (3C, 1)    stacked [bq; bk; bn_shift'] (bv folded into shift)
    # pos_ref:  (C, N)     rel_h + rel_w, per-head (D, N) slabs stacked head-major
    # o_ref:    (C, BB*N)  output (lane-dense)
    c = wqkv_ref.shape[1]
    d = c // heads

    # Fused QKV projection for every batch element in this block:
    # one MXU matmul (M=3C, K=C, N=BB*N).
    qkv = jnp.dot(wqkv_ref[...], x_ref[...],
                  preferred_element_type=jnp.float32)            # (3C, BB*N)
    cvec = cvec_ref[...]                                         # (3C, 1)
    pos = pos_ref[...]                                           # (C, N)

    for bb in range(batch_block):                  # unrolled (BB is 1 or 2)
        l0, l1 = bb * n, (bb + 1) * n              # 128-aligned lane slice
        for hh in range(heads):                    # unrolled; D=8 sublane-aligned
            lo, hi = hh * d, (hh + 1) * d
            qh = qkv[lo:hi, l0:l1] + cvec[lo:hi]                 # (D, N)
            kh = qkv[c + lo:c + hi, l0:l1] + cvec[c + lo:c + hi] # (D, N)
            vh = qkv[2 * c + lo:2 * c + hi, l0:l1]               # (D, N) BN scale folded in
            ph = pos[lo:hi]                                      # (D, N)

            # energy^T in ONE K=2D matmul (rows = keys, cols = queries):
            #   energy^T[k, q] = sum_d kh[d,k] qh[d,q] + sum_d qh[d,k] ph[d,q]
            # Contraction over dim 0 of both operands -> no XLU transpose.
            lhs = jnp.concatenate([kh, qh], axis=0)              # (2D, Nk)
            rhs = jnp.concatenate([qh, ph], axis=0)              # (2D, Nq)
            energy_t = lax.dot_general(lhs, rhs, (((0,), (0,)), ((), ())),
                                       preferred_element_type=jnp.float32)  # (Nk, Nq)

            # softmax over keys == axis 0 (EUP exp dominates; reductions on XLU)
            m = jnp.max(energy_t, axis=0, keepdims=True)         # (1, Nq)
            p = jnp.exp(energy_t - m)                            # (Nk, Nq) f32
            s = jnp.sum(p, axis=0, keepdims=True)                # (1, Nq)

            # PV with UNNORMALIZED p: plain (D,Nk)x(Nk,Nq) MXU contraction.
            o_un = jnp.dot(vh, p, preferred_element_type=jnp.float32)  # (D, Nq)

            # Deferred, EXACT normalization on the small (D, Nq) output.
            # (Exactness keeps the folded-bv "rows sum to 1" identity valid.)
            out_h = o_un * (1.0 / s)

            # Per-head epilogue written straight into o_ref (bounds liveness):
            # eval-mode BN (scale folded into Wv) + ReLU + residual.
            shift_h = cvec[2 * c + lo:2 * c + hi]                # (D, 1)
            xh = x_ref[lo:hi, l0:l1]                             # (D, N) residual
            o_ref[lo:hi, l0:l1] = (
                jnp.maximum(out_h + shift_h, 0.0) + xh
            ).astype(o_ref.dtype)


# ------------------------------- wrappers -------------------------------------
def prepare_params(params):
    """One-time parameter folding (outside the per-call hot path)."""
    scale = params["bn_gamma"] * lax.rsqrt(params["bn_var"] + EPS)        # (C,)
    # bv passes through the softmax unchanged (rows sum to 1) -> fold into shift.
    shift = params["bn_beta"] - params["bn_mean"] * scale + scale * params["bv"]
    wv_scaled = params["wv"] * scale[:, None]                              # fold BN scale into Wv
    wqkv = jnp.concatenate([params["wq"], params["wk"], wv_scaled], axis=0)  # (3C, C)
    cvec = jnp.concatenate([params["bq"], params["bk"], shift], axis=0).reshape(3 * C, 1)
    pos = (params["rel_h"] + params["rel_w"]).reshape(C, N)                # (C, N)
    return {"wqkv": wqkv, "cvec": cvec, "pos": pos}


def _prefer_batch_grid() -> bool:
    """True on chips with 2 TensorCores per chip (v7x): shard batch across TCs.

    Single-TC chips (v5e/v6e) — and the CPU interpreter — get a collapsed
    single-step grid with an in-kernel batch loop (saves one ~0.35us grid step
    and fuses the QKV matmul to N = B*N)."""
    try:
        kind = jax.devices()[0].device_kind.lower()
    except Exception:
        return False
    return ("v7" in kind) or ("7x" in kind)


@functools.partial(jax.jit, static_argnames=("batch_grid",))
def vit_module_forward(x_nchw, wqkv, cvec, pos, batch_grid=False):
    """x_nchw: (B, C, W, H) float32. Returns (B, C, W, H)."""
    b, c, w, h = x_nchw.shape
    n = w * h
    # Lane-dense channel-major layout (layout plumbing done by XLA, tiny arrays):
    # x_cn[:, bb*n + p] == x[bb, :, p]
    x_cn = x_nchw.reshape(b, c, n).transpose(1, 0, 2).reshape(c, b * n)

    if batch_grid:
        grid, bb, sem = (b,), 1, ("parallel",)        # one batch element per TC
    else:
        grid, bb, sem = (1,), b, ("arbitrary",)       # single step, in-kernel batch loop

    d = c // HEADS
    cost = pl.CostEstimate(
        flops=2 * b * (3 * c * c * n) + 2 * b * HEADS * (2 * d * n * n + d * n * n),
        transcendentals=b * HEADS * n * n,            # exp
        bytes_accessed=4 * (2 * b * c * n + 3 * c * c + 3 * c + c * n),
    )

    kernel = functools.partial(vit_kernel, heads=HEADS, batch_block=bb, n=n)

    out_cn = pl.pallas_call(
        kernel,
        out_shape=jax.ShapeDtypeStruct((c, b * n), jnp.float32),
        grid_spec=pltpu.PrefetchScalarGridSpec(
            num_scalar_prefetch=0,
            grid=grid,
            in_specs=[
                pl.BlockSpec((c, bb * n), lambda bi: (0, bi)),   # x (channel-major)
                pl.BlockSpec((3 * c, c),  lambda bi: (0, 0)),    # stacked Wqkv
                pl.BlockSpec((3 * c, 1),  lambda bi: (0, 0)),    # [bq; bk; shift']
                pl.BlockSpec((c, n),      lambda bi: (0, 0)),    # rel-pos (C, N)
            ],
            out_specs=pl.BlockSpec((c, bb * n), lambda bi: (0, bi)),
        ),
        compiler_params=pltpu.CompilerParams(dimension_semantics=sem),
        cost_estimate=cost,
    )(x_cn, wqkv, cvec, pos)

    return out_cn.reshape(c, b, n).transpose(1, 0, 2).reshape(b, c, w, h)


# ---------------------------- pure-JAX reference ------------------------------
def ref_forward(x_nchw, params):
    b, c, w, h = x_nchw.shape
    n = w * h
    d = c // HEADS
    xf = x_nchw.reshape(b, c, n)

    def proj(wt, bs):
        return jnp.einsum("oc,bcn->bon", wt, xf) + bs[None, :, None]

    q = proj(params["wq"], params["bq"]).reshape(b, HEADS, d, n)
    k = proj(params["wk"], params["bk"]).reshape(b, HEADS, d, n)
    v = proj(params["wv"], params["bv"]).reshape(b, HEADS, d, n)

    cc = jnp.einsum("bhdn,bhdm->bhnm", q, k)
    pos = (params["rel_h"] + params["rel_w"]).reshape(1, HEADS, d, n)
    pos_t = jnp.transpose(pos, (0, 1, 3, 2))                         # (1, heads, N, d)
    cp = jnp.einsum("xhnd,bhdm->bhnm", pos_t, q)
    energy = cc + cp
    attn = jax.nn.softmax(energy, axis=-1)
    out = jnp.einsum("bhdn,bhmn->bhdm", v, attn)                     # v @ attn^T
    feat = out.reshape(b, c, n)

    scale = params["bn_gamma"] / jnp.sqrt(params["bn_var"] + EPS)
    shift = params["bn_beta"] - params["bn_mean"] * scale
    feat = feat * scale[None, :, None] + shift[None, :, None]
    feat = jnp.maximum(feat, 0.0)
    return (feat + xf).reshape(b, c, w, h)


# ----------------------------------- main -------------------------------------
if __name__ == "__main__":
    key = jax.random.PRNGKey(0)
    keys = jax.random.split(key, 16)

    # deterministic synthetic parameters (shapes follow the PyTorch __init__)
    params = {
        # 1x1 conv weights/biases for query/key/value: (C, C) / (C,)
        "wq": jax.random.normal(keys[0], (C, C), jnp.float32) * 0.1,
        "bq": jax.random.normal(keys[1], (C,), jnp.float32) * 0.1,
        "wk": jax.random.normal(keys[2], (C, C), jnp.float32) * 0.1,
        "bk": jax.random.normal(keys[3], (C,), jnp.float32) * 0.1,
        "wv": jax.random.normal(keys[4], (C, C), jnp.float32) * 0.1,
        "bv": jax.random.normal(keys[5], (C,), jnp.float32) * 0.1,
        # relative position embeddings: rel_h (1,heads,d,1,H), rel_w (1,heads,d,W,1)
        "rel_h": jax.random.normal(keys[6], (1, HEADS, D, 1, H), jnp.float32) * 0.1,
        "rel_w": jax.random.normal(keys[7], (1, HEADS, D, W, 1), jnp.float32) * 0.1,
        # bn1 (eval-mode BatchNorm2d folded into per-channel affine)
        # TODO(synk): PyTorch default training-mode BN uses batch statistics;
        # inference-mode BN (running stats) is implemented here.
        "bn_gamma": jax.random.uniform(keys[8], (C,), jnp.float32, 0.5, 1.5),
        "bn_beta":  jax.random.normal(keys[9], (C,), jnp.float32) * 0.1,
        "bn_mean":  jax.random.normal(keys[10], (C,), jnp.float32) * 0.1,
        "bn_var":   jax.random.uniform(keys[11], (C,), jnp.float32, 0.5, 1.5),
    }

    x = jax.random.normal(keys[12], (B, C, W, H), jnp.float32)

    folded = prepare_params(params)          # one-time folding, not per call
    out = vit_module_forward(x, folded["wqkv"], folded["cvec"], folded["pos"],
                             batch_grid=_prefer_batch_grid())
    out = jax.block_until_ready(out)

    ref = ref_forward(x, params)
    assert out.shape == (B, C, W, H)
    # Softmax normalization is now exact (no approx reciprocal), so the error is
    # dominated by f32 matmul rounding — comfortably inside 1e-3.
    assert jnp.allclose(out, ref, atol=1e-3, rtol=1e-3), \
        f"max abs err {jnp.max(jnp.abs(out - ref))}"

    print("KERNEL_OK")
</pallas_src>

<mosaic_0001>
module attributes {stable_mosaic.version = 11 : i64} {
  func.func @vit_kernel(%arg0: i32, %arg1: memref<32x256xf32, #tpu.memory_space<vmem>>, %arg2: memref<96x32xf32, #tpu.memory_space<vmem>>, %arg3: memref<96x1xf32, #tpu.memory_space<vmem>>, %arg4: memref<32x128xf32, #tpu.memory_space<vmem>>, %arg5: memref<32x256xf32, #tpu.memory_space<vmem>>) attributes {dimension_semantics = [#tpu.dimension_semantics<arbitrary>], iteration_bounds = array<i64: 1>, scalar_prefetch = 0 : i64, scratch_operands = 0 : i64, tpu.core_type = #tpu.core_type<tc>, window_params = [{transform_indices = @transform_0, window_bounds = array<i64: 32, 256>}, {pipeline_mode = #tpu.pipeline_mode<synchronous>, transform_indices = @transform_1, window_bounds = array<i64: 96, 32>}, {pipeline_mode = #tpu.pipeline_mode<synchronous>, transform_indices = @transform_2, window_bounds = array<i64: 96, 1>}, {pipeline_mode = #tpu.pipeline_mode<synchronous>, transform_indices = @transform_3, window_bounds = array<i64: 32, 128>}, {transform_indices = @transform_4, window_bounds = array<i64: 32, 256>}]} {
    %c0 = arith.constant 0 : index
    %c0_0 = arith.constant 0 : index
    %0 = vector.load %arg2[%c0, %c0_0] : memref<96x32xf32, #tpu.memory_space<vmem>>, vector<96x32xf32>
    %c0_1 = arith.constant 0 : index
    %c0_2 = arith.constant 0 : index
    %1 = vector.load %arg1[%c0_1, %c0_2] : memref<32x256xf32, #tpu.memory_space<vmem>>, vector<32x256xf32>
    %cst = arith.constant dense<0.000000e+00> : vector<96x256xf32>
    %2 = tpu.matmul %0, %1, %cst {dimension_numbers = #tpu.dot_dimension_numbers<[1], [0], [0], [1], [0, 0, 1, 1], [], []>} : vector<96x32xf32>, vector<32x256xf32>, vector<96x256xf32> -> vector<96x256xf32>
    %c0_3 = arith.constant 0 : index
    %c0_4 = arith.constant 0 : index
    %3 = vector.load %arg3[%c0_3, %c0_4] : memref<96x1xf32, #tpu.memory_space<vmem>>, vector<96x1xf32>
    %c0_5 = arith.constant 0 : index
    %c0_6 = arith.constant 0 : index
    %4 = vector.load %arg4[%c0_5, %c0_6] : memref<32x128xf32, #tpu.memory_space<vmem>>, vector<32x128xf32>
    %5 = vector.extract_strided_slice %2 {offsets = [0, 0], sizes = [8, 128], strides = [1, 1]} : vector<96x256xf32> to vector<8x128xf32>
    %6 = vector.extract_strided_slice %3 {offsets = [0, 0], sizes = [8, 1], strides = [1, 1]} : vector<96x1xf32> to vector<8x1xf32>
    %7 = vector.broadcast %6 : vector<8x1xf32> to vector<8x128xf32>
    %8 = arith.addf %5, %7 : vector<8x128xf32>
    %9 = vector.extract_strided_slice %2 {offsets = [32, 0], sizes = [8, 128], strides = [1, 1]} : vector<96x256xf32> to vector<8x128xf32>
    %10 = vector.extract_strided_slice %3 {offsets = [32, 0], sizes = [8, 1], strides = [1, 1]} : vector<96x1xf32> to vector<8x1xf32>
    %11 = vector.broadcast %10 : vector<8x1xf32> to vector<8x128xf32>
    %12 = arith.addf %9, %11 : vector<8x128xf32>
    %13 = vector.extract_strided_slice %2 {offsets = [64, 0], sizes = [8, 128], strides = [1, 1]} : vector<96x256xf32> to vector<8x128xf32>
    %14 = vector.extract_strided_slice %4 {offsets = [0, 0], sizes = [8, 128], strides = [1, 1]} : vector<32x128xf32> to vector<8x128xf32>
    %15 = tpu.concatenate %12, %8 in 0 : vector<8x128xf32>, vector<8x128xf32> -> vector<16x128xf32>
    %16 = tpu.concatenate %8, %14 in 0 : vector<8x128xf32>, vector<8x128xf32> -> vector<16x128xf32>
    %cst_7 = arith.constant dense<0.000000e+00> : vector<128x128xf32>
    %17 = tpu.matmul %15, %16, %cst_7 {dimension_numbers = #tpu.dot_dimension_numbers<[0], [0], [1], [1], [0, 1, 1, 1], [], []>} : vector<16x128xf32>, vector<16x128xf32>, vector<128x128xf32> -> vector<128x128xf32>
    %cst_8 = arith.constant dense<0xFF800000> : vector<128xf32>
    %18 = vector.multi_reduction <maximumf>, %17, %cst_8 [0] : vector<128x128xf32> to vector<128xf32>
    %19 = vector.shape_cast %18 : vector<128xf32> to vector<1x128xf32>
    %20 = vector.broadcast %19 : vector<1x128xf32> to vector<128x128xf32>
    %21 = arith.subf %17, %20 : vector<128x128xf32>
    %22 = math.exp %21 : vector<128x128xf32>
    %cst_9 = arith.constant dense<0.000000e+00> : vector<128xf32>
    %23 = vector.multi_reduction <add>, %22, %cst_9 [0] : vector<128x128xf32> to vector<128xf32>
    %24 = vector.shape_cast %23 : vector<128xf32> to vector<1x128xf32>
    %cst_10 = arith.constant dense<0.000000e+00> : vector<8x128xf32>
    %25 = tpu.matmul %13, %22, %cst_10 {dimension_numbers = #tpu.dot_dimension_numbers<[1], [0], [0], [1], [0, 0, 1, 1], [], []>} : vector<8x128xf32>, vector<128x128xf32>, vector<8x128xf32> -> vector<8x128xf32>
    %cst_11 = arith.constant 1.000000e+00 : f32
    %26 = vector.broadcast %cst_11 : f32 to vector<1x128xf32>
    %27 = arith.divf %26, %24 : vector<1x128xf32>
    %28 = vector.broadcast %27 : vector<1x128xf32> to vector<8x128xf32>
    %29 = arith.mulf %25, %28 : vector<8x128xf32>
    %30 = vector.extract_strided_slice %3 {offsets = [64, 0], sizes = [8, 1], strides = [1, 1]} : vector<96x1xf32> to vector<8x1xf32>
    %c0_12 = arith.constant 0 : index
    %c0_13 = arith.constant 0 : index
    %31 = vector.load %arg1[%c0_12, %c0_13] : memref<32x256xf32, #tpu.memory_space<vmem>>, vector<8x128xf32>
    %32 = vector.broadcast %30 : vector<8x1xf32> to vector<8x128xf32>
    %33 = arith.addf %29, %32 : vector<8x128xf32>
    %cst_14 = arith.constant 0.000000e+00 : f32
    %34 = vector.broadcast %cst_14 : f32 to vector<8x128xf32>
    %35 = arith.maximumf %33, %34 : vector<8x128xf32>
    %36 = arith.addf %35, %31 : vector<8x128xf32>
    %c0_15 = arith.constant 0 : index
    %c0_16 = arith.constant 0 : index
    %37 = vector.load %arg5[%c0_15, %c0_16] : memref<32x256xf32, #tpu.memory_space<vmem>>, vector<8x128xf32>
    tpu.vector_store %arg5[%c0_15, %c0_16], %36 {strides = array<i32>} : memref<32x256xf32, #tpu.memory_space<vmem>>, vector<8x128xf32>,
    %38 = vector.extract_strided_slice %2 {offsets = [8, 0], sizes = [8, 128], strides = [1, 1]} : vector<96x256xf32> to vector<8x128xf32>
    %39 = vector.extract_strided_slice %3 {offsets = [8, 0], sizes = [8, 1], strides = [1, 1]} : vector<96x1xf32> to vector<8x1xf32>
    %40 = vector.broadcast %39 : vector<8x1xf32> to vector<8x128xf32>
    %41 = arith.addf %38, %40 : vector<8x128xf32>
    %42 = vector.extract_strided_slice %2 {offsets = [40, 0], sizes = [8, 128], strides = [1, 1]} : vector<96x256xf32> to vector<8x128xf32>
    %43 = vector.extract_strided_slice %3 {offsets = [40, 0], sizes = [8, 1], strides = [1, 1]} : vector<96x1xf32> to vector<8x1xf32>
    %44 = vector.broadcast %43 : vector<8x1xf32> to vector<8x128xf32>
    %45 = arith.addf %42, %44 : vector<8x128xf32>
    %46 = vector.extract_strided_slice %2 {offsets = [72, 0], sizes = [8, 128], strides = [1, 1]} : vector<96x256xf32> to vector<8x128xf32>
    %47 = vector.extract_strided_slice %4 {offsets = [8, 0], sizes = [8, 128], strides = [1, 1]} : vector<32x128xf32> to vector<8x128xf32>
    %48 = tpu.concatenate %45, %41 in 0 : vector<8x128xf32>, vector<8x128xf32> -> vector<16x128xf32>
    %49 = tpu.concatenate %41, %47 in 0 : vector<8x128xf32>, vector<8x128xf32> -> vector<16x128xf32>
    %cst_17 = arith.constant dense<0.000000e+00> : vector<128x128xf32>
    %50 = tpu.matmul %48, %49, %cst_17 {dimension_numbers = #tpu.dot_dimension_numbers<[0], [0], [1], [1], [0, 1, 1, 1], [], []>} : vector<16x128xf32>, vector<16x128xf32>, vector<128x128xf32> -> vector<128x128xf32>
    %cst_18 = arith.constant dense<0xFF800000> : vector<128xf32>
    %51 = vector.multi_reduction <maximumf>, %50, %cst_18 [0] : vector<128x128xf32> to vector<128xf32>
    %52 = vector.shape_cast %51 : vector<128xf32> to vector<1x128xf32>
    %53 = vector.broadcast %52 : vector<1x128xf32> to vector<128x128xf32>
    %54 = arith.subf %50, %53 : vector<128x128xf32>
    %55 = math.exp %54 : vector<128x128xf32>
    %cst_19 = arith.constant dense<0.000000e+00> : vector<128xf32>
    %56 = vector.multi_reduction <add>, %55, %cst_19 [0] : vector<128x128xf32> to vector<128xf32>
    %57 = vector.shape_cast %56 : vector<128xf32> to vector<1x128xf32>
    %cst_20 = arith.constant dense<0.000000e+00> : vector<8x128xf32>
    %58 = tpu.matmul %46, %55, %cst_20 {dimension_numbers = #tpu.dot_dimension_numbers<[1], [0], [0], [1], [0, 0, 1, 1], [], []>} : vector<8x128xf32>, vector<128x128xf32>, vector<8x128xf32> -> vector<8x128xf32>
    %cst_21 = arith.constant 1.000000e+00 : f32
    %59 = vector.broadcast %cst_21 : f32 to vector<1x128xf32>
    %60 = arith.divf %59, %57 : vector<1x128xf32>
    %61 = vector.broadcast %60 : vector<1x128xf32> to vector<8x128xf32>
    %62 = arith.mulf %58, %61 : vector<8x128xf32>
    %63 = vector.extract_strided_slice %3 {offsets = [72, 0], sizes = [8, 1], strides = [1, 1]} : vector<96x1xf32> to vector<8x1xf32>
    %c8 = arith.constant 8 : index
    %c0_22 = arith.constant 0 : index
    %64 = vector.load %arg1[%c8, %c0_22] : memref<32x256xf32, #tpu.memory_space<vmem>>, vector<8x128xf32>
    %65 = vector.broadcast %63 : vector<8x1xf32> to vector<8x128xf32>
    %66 = arith.addf %62, %65 : vector<8x128xf32>
    %cst_23 = arith.constant 0.000000e+00 : f32
    %67 = vector.broadcast %cst_23 : f32 to vector<8x128xf32>
    %68 = arith.maximumf %66, %67 : vector<8x128xf32>
    %69 = arith.addf %68, %64 : vector<8x128xf32>
    %c8_24 = arith.constant 8 : index
    %c0_25 = arith.constant 0 : index
    %70 = vector.load %arg5[%c8_24, %c0_25] : memref<32x256xf32, #tpu.memory_space<vmem>>, vector<8x128xf32>
    tpu.vector_store %arg5[%c8_24, %c0_25], %69 {strides = array<i32>} : memref<32x256xf32, #tpu.memory_space<vmem>>, vector<8x128xf32>,
    %71 = vector.extract_strided_slice %2 {offsets = [16, 0], sizes = [8, 128], strides = [1, 1]} : vector<96x256xf32> to vector<8x128xf32>
    %72 = vector.extract_strided_slice %3 {offsets = [16, 0], sizes = [8, 1], strides = [1, 1]} : vector<96x1xf32> to vector<8x1xf32>
    %73 = vector.broadcast %72 : vector<8x1xf32> to vector<8x128xf32>
    %74 = arith.addf %71, %73 : vector<8x128xf32>
    %75 = vector.extract_strided_slice %2 {offsets = [48, 0], sizes = [8, 128], strides = [1, 1]} : vector<96x256xf32> to vector<8x128xf32>
    %76 = vector.extract_strided_slice %3 {offsets = [48, 0], sizes = [8, 1], strides = [1, 1]} : vector<96x1xf32> to vector<8x1xf32>
    %77 = vector.broadcast %76 : vector<8x1xf32> to vector<8x128xf32>
    %78 = arith.addf %75, %77 : vector<8x128xf32>
    %79 = vector.extract_strided_slice %2 {offsets = [80, 0], sizes = [8, 128], strides = [1, 1]} : vector<96x256xf32> to vector<8x128xf32>
    %80 = vector.extract_strided_slice %4 {offsets = [16, 0], sizes = [8, 128], strides = [1, 1]} : vector<32x128xf32> to vector<8x128xf32>
    %81 = tpu.concatenate %78, %74 in 0 : vector<8x128xf32>, vector<8x128xf32> -> vector<16x128xf32>
    %82 = tpu.concatenate %74, %80 in 0 : vector<8x128xf32>, vector<8x128xf32> -> vector<16x128xf32>
    %cst_26 = arith.constant dense<0.000000e+00> : vector<128x128xf32>
    %83 = tpu.matmul %81, %82, %cst_26 {dimension_numbers = #tpu.dot_dimension_numbers<[0], [0], [1], [1], [0, 1, 1, 1], [], []>} : vector<16x128xf32>, vector<16x128xf32>, vector<128x128xf32> -> vector<128x128xf32>
    %cst_27 = arith.constant dense<0xFF800000> : vector<128xf32>
    %84 = vector.multi_reduction <maximumf>, %83, %cst_27 [0] : vector<128x128xf32> to vector<128xf32>
    %85 = vector.shape_cast %84 : vector<128xf32> to vector<1x128xf32>
    %86 = vector.broadcast %85 : vector<1x128xf32> to vector<128x128xf32>
    %87 = arith.subf %83, %86 : vector<128x128xf32>
    %88 = math.exp %87 : vector<128x128xf32>
    %cst_28 = arith.constant dense<0.000000e+00> : vector<128xf32>
    %89 = vector.multi_reduction <add>, %88, %cst_28 [0] : vector<128x128xf32> to vector<128xf32>
    %90 = vector.shape_cast %89 : vector<128xf32> to vector<1x128xf32>
    %cst_29 = arith.constant dense<0.000000e+00> : vector<8x128xf32>
    %91 = tpu.matmul %79, %88, %cst_29 {dimension_numbers = #tpu.dot_dimension_numbers<[1], [0], [0], [1], [0, 0, 1, 1], [], []>} : vector<8x128xf32>, vector<128x128xf32>, vector<8x128xf32> -> vector<8x128xf32>
    %cst_30 = arith.constant 1.000000e+00 : f32
    %92 = vector.broadcast %cst_30 : f32 to vector<1x128xf32>
    %93 = arith.divf %92, %90 : vector<1x128xf32>
    %94 = vector.broadcast %93 : vector<1x128xf32> to vector<8x128xf32>
    %95 = arith.mulf %91, %94 : vector<8x128xf32>
    %96 = vector.extract_strided_slice %3 {offsets = [80, 0], sizes = [8, 1], strides = [1, 1]} : vector<96x1xf32> to vector<8x1xf32>
    %c16 = arith.constant 16 : index
    %c0_31 = arith.constant 0 : index
    %97 = vector.load %arg1[%c16, %c0_31] : memref<32x256xf32, #tpu.memory_space<vmem>>, vector<8x128xf32>
    %98 = vector.broadcast %96 : vector<8x1xf32> to vector<8x128xf32>
    %99 = arith.addf %95, %98 : vector<8x128xf32>
    %cst_32 = arith.constant 0.000000e+00 : f32
    %100 = vector.broadcast %cst_32 : f32 to vector<8x128xf32>
    %101 = arith.maximumf %99, %100 : vector<8x128xf32>
    %102 = arith.addf %101, %97 : vector<8x128xf32>
    %c16_33 = arith.constant 16 : index
    %c0_34 = arith.constant 0 : index
    %103 = vector.load %arg5[%c16_33, %c0_34] : memref<32x256xf32, #tpu.memory_space<vmem>>, vector<8x128xf32>
    tpu.vector_store %arg5[%c16_33, %c0_34], %102 {strides = array<i32>} : memref<32x256xf32, #tpu.memory_space<vmem>>, vector<8x128xf32>,
    %104 = vector.extract_strided_slice %2 {offsets = [24, 0], sizes = [8, 128], strides = [1, 1]} : vector<96x256xf32> to vector<8x128xf32>
    %105 = vector.extract_strided_slice %3 {offsets = [24, 0], sizes = [8, 1], strides = [1, 1]} : vector<96x1xf32> to vector<8x1xf32>
    %106 = vector.broadcast %105 : vector<8x1xf32> to vector<8x128xf32>
    %107 = arith.addf %104, %106 : vector<8x128xf32>
    %108 = vector.extract_strided_slice %2 {offsets = [56, 0], sizes = [8, 128], strides = [1, 1]} : vector<96x256xf32> to vector<8x128xf32>
    %109 = vector.extract_strided_slice %3 {offsets = [56, 0], sizes = [8, 1], strides = [1, 1]} : vector<96x1xf32> to vector<8x1xf32>
    %110 = vector.broadcast %109 : vector<8x1xf32> to vector<8x128xf32>
    %111 = arith.addf %108, %110 : vector<8x128xf32>
    %112 = vector.extract_strided_slice %2 {offsets = [88, 0], sizes = [8, 128], strides = [1, 1]} : vector<96x256xf32> to vector<8x128xf32>
    %113 = vector.extract_strided_slice %4 {offsets = [24, 0], sizes = [8, 128], strides = [1, 1]} : vector<32x128xf32> to vector<8x128xf32>
    %114 = tpu.concatenate %111, %107 in 0 : vector<8x128xf32>, vector<8x128xf32> -> vector<16x128xf32>
    %115 = tpu.concatenate %107, %113 in 0 : vector<8x128xf32>, vector<8x128xf32> -> vector<16x128xf32>
    %cst_35 = arith.constant dense<0.000000e+00> : vector<128x128xf32>
    %116 = tpu.matmul %114, %115, %cst_35 {dimension_numbers = #tpu.dot_dimension_numbers<[0], [0], [1], [1], [0, 1, 1, 1], [], []>} : vector<16x128xf32>, vector<16x128xf32>, vector<128x128xf32> -> vector<128x128xf32>
    %cst_36 = arith.constant dense<0xFF800000> : vector<128xf32>
    %117 = vector.multi_reduction <maximumf>, %116, %cst_36 [0] : vector<128x128xf32> to vector<128xf32>
    %118 = vector.shape_cast %117 : vector<128xf32> to vector<1x128xf32>
    %119 = vector.broadcast %118 : vector<1x128xf32> to vector<128x128xf32>
    %120 = arith.subf %116, %119 : vector<128x128xf32>
    %121 = math.exp %120 : vector<128x128xf32>
    %cst_37 = arith.constant dense<0.000000e+00> : vector<128xf32>
    %122 = vector.multi_reduction <add>, %121, %cst_37 [0] : vector<128x128xf32> to vector<128xf32>
    %123 = vector.shape_cast %122 : vector<128xf32> to vector<1x128xf32>
    %cst_38 = arith.constant dense<0.000000e+00> : vector<8x128xf32>
    %124 = tpu.matmul %112, %121, %cst_38 {dimension_numbers = #tpu.dot_dimension_numbers<[1], [0], [0], [1], [0, 0, 1, 1], [], []>} : vector<8x128xf32>, vector<128x128xf32>, vector<8x128xf32> -> vector<8x128xf32>
    %cst_39 = arith.constant 1.000000e+00 : f32
    %125 = vector.broadcast %cst_39 : f32 to vector<1x128xf32>
    %126 = arith.divf %125, %123 : vector<1x128xf32>
    %127 = vector.broadcast %126 : vector<1x128xf32> to vector<8x128xf32>
    %128 = arith.mulf %124, %127 : vector<8x128xf32>
    %129 = vector.extract_strided_slice %3 {offsets = [88, 0], sizes = [8, 1], strides = [1, 1]} : vector<96x1xf32> to vector<8x1xf32>
    %c24 = arith.constant 24 : index
    %c0_40 = arith.constant 0 : index
    %130 = vector.load %arg1[%c24, %c0_40] : memref<32x256xf32, #tpu.memory_space<vmem>>, vector<8x128xf32>
    %131 = vector.broadcast %129 : vector<8x1xf32> to vector<8x128xf32>
    %132 = arith.addf %128, %131 : vector<8x128xf32>
    %cst_41 = arith.constant 0.000000e+00 : f32
    %133 = vector.broadcast %cst_41 : f32 to vector<8x128xf32>
    %134 = arith.maximumf %132, %133 : vector<8x128xf32>
    %135 = arith.addf %134, %130 : vector<8x128xf32>
    %c24_42 = arith.constant 24 : index
    %c0_43 = arith.constant 0 : index
    %136 = vector.load %arg5[%c24_42, %c0_43] : memref<32x256xf32, #tpu.memory_space<vmem>>, vector<8x128xf32>
    tpu.vector_store %arg5[%c24_42, %c0_43], %135 {strides = array<i32>} : memref<32x256xf32, #tpu.memory_space<vmem>>, vector<8x128xf32>,
    %137 = vector.extract_strided_slice %2 {offsets = [0, 128], sizes = [8, 128], strides = [1, 1]} : vector<96x256xf32> to vector<8x128xf32>
    %138 = vector.extract_strided_slice %3 {offsets = [0, 0], sizes = [8, 1], strides = [1, 1]} : vector<96x1xf32> to vector<8x1xf32>
    %139 = vector.broadcast %138 : vector<8x1xf32> to vector<8x128xf32>
    %140 = arith.addf %137, %139 : vector<8x128xf32>
    %141 = vector.extract_strided_slice %2 {offsets = [32, 128], sizes = [8, 128], strides = [1, 1]} : vector<96x256xf32> to vector<8x128xf32>
    %142 = vector.extract_strided_slice %3 {offsets = [32, 0], sizes = [8, 1], strides = [1, 1]} : vector<96x1xf32> to vector<8x1xf32>
    %143 = vector.broadcast %142 : vector<8x1xf32> to vector<8x128xf32>
    %144 = arith.addf %141, %143 : vector<8x128xf32>
    %145 = vector.extract_strided_slice %2 {offsets = [64, 128], sizes = [8, 128], strides = [1, 1]} : vector<96x256xf32> to vector<8x128xf32>
    %146 = vector.extract_strided_slice %4 {offsets = [0, 0], sizes = [8, 128], strides = [1, 1]} : vector<32x128xf32> to vector<8x128xf32>
    %147 = tpu.concatenate %144, %140 in 0 : vector<8x128xf32>, vector<8x128xf32> -> vector<16x128xf32>
    %148 = tpu.concatenate %140, %146 in 0 : vector<8x128xf32>, vector<8x128xf32> -> vector<16x128xf32>
    %cst_44 = arith.constant dense<0.000000e+00> : vector<128x128xf32>
    %149 = tpu.matmul %147, %148, %cst_44 {dimension_numbers = #tpu.dot_dimension_numbers<[0], [0], [1], [1], [0, 1, 1, 1], [], []>} : vector<16x128xf32>, vector<16x128xf32>, vector<128x128xf32> -> vector<128x128xf32>
    %cst_45 = arith.constant dense<0xFF800000> : vector<128xf32>
    %150 = vector.multi_reduction <maximumf>, %149, %cst_45 [0] : vector<128x128xf32> to vector<128xf32>
    %151 = vector.shape_cast %150 : vector<128xf32> to vector<1x128xf32>
    %152 = vector.broadcast %151 : vector<1x128xf32> to vector<128x128xf32>
    %153 = arith.subf %149, %152 : vector<128x128xf32>
    %154 = math.exp %153 : vector<128x128xf32>
    %cst_46 = arith.constant dense<0.000000e+00> : vector<128xf32>
    %155 = vector.multi_reduction <add>, %154, %cst_46 [0] : vector<128x128xf32> to vector<128xf32>
    %156 = vector.shape_cast %155 : vector<128xf32> to vector<1x128xf32>
    %cst_47 = arith.constant dense<0.000000e+00> : vector<8x128xf32>
    %157 = tpu.matmul %145, %154, %cst_47 {dimension_numbers = #tpu.dot_dimension_numbers<[1], [0], [0], [1], [0, 0, 1, 1], [], []>} : vector<8x128xf32>, vector<128x128xf32>, vector<8x128xf32> -> vector<8x128xf32>
    %cst_48 = arith.constant 1.000000e+00 : f32
    %158 = vector.broadcast %cst_48 : f32 to vector<1x128xf32>
    %159 = arith.divf %158, %156 : vector<1x128xf32>
    %160 = vector.broadcast %159 : vector<1x128xf32> to vector<8x128xf32>
    %161 = arith.mulf %157, %160 : vector<8x128xf32>
    %162 = vector.extract_strided_slice %3 {offsets = [64, 0], sizes = [8, 1], strides = [1, 1]} : vector<96x1xf32> to vector<8x1xf32>
    %c0_49 = arith.constant 0 : index
    %c128 = arith.constant 128 : index
    %163 = vector.load %arg1[%c0_49, %c128] : memref<32x256xf32, #tpu.memory_space<vmem>>, vector<8x128xf32>
    %164 = vector.broadcast %162 : vector<8x1xf32> to vector<8x128xf32>
    %165 = arith.addf %161, %164 : vector<8x128xf32>
    %cst_50 = arith.constant 0.000000e+00 : f32
    %166 = vector.broadcast %cst_50 : f32 to vector<8x128xf32>
    %167 = arith.maximumf %165, %166 : vector<8x128xf32>
    %168 = arith.addf %167, %163 : vector<8x128xf32>
    %c0_51 = arith.constant 0 : index
    %c128_52 = arith.constant 128 : index
    %169 = vector.load %arg5[%c0_51, %c128_52] : memref<32x256xf32, #tpu.memory_space<vmem>>, vector<8x128xf32>
    tpu.vector_store %arg5[%c0_51, %c128_52], %168 {strides = array<i32>} : memref<32x256xf32, #tpu.memory_space<vmem>>, vector<8x128xf32>,
    %170 = vector.extract_strided_slice %2 {offsets = [8, 128], sizes = [8, 128], strides = [1, 1]} : vector<96x256xf32> to vector<8x128xf32>
    %171 = vector.extract_strided_slice %3 {offsets = [8, 0], sizes = [8, 1], strides = [1, 1]} : vector<96x1xf32> to vector<8x1xf32>
    %172 = vector.broadcast %171 : vector<8x1xf32> to vector<8x128xf32>
    %173 = arith.addf %170, %172 : vector<8x128xf32>
    %174 = vector.extract_strided_slice %2 {offsets = [40, 128], sizes = [8, 128], strides = [1, 1]} : vector<96x256xf32> to vector<8x128xf32>
    %175 = vector.extract_strided_slice %3 {offsets = [40, 0], sizes = [8, 1], strides = [1, 1]} : vector<96x1xf32> to vector<8x1xf32>
    %176 = vector.broadcast %175 : vector<8x1xf32> to vector<8x128xf32>
    %177 = arith.addf %174, %176 : vector<8x128xf32>
    %178 = vector.extract_strided_slice %2 {offsets = [72, 128], sizes = [8, 128], strides = [1, 1]} : vector<96x256xf32> to vector<8x128xf32>
    %179 = vector.extract_strided_slice %4 {offsets = [8, 0], sizes = [8, 128], strides = [1, 1]} : vector<32x128xf32> to vector<8x128xf32>
    %180 = tpu.concatenate %177, %173 in 0 : vector<8x128xf32>, vector<8x128xf32> -> vector<16x128xf32>
    %181 = tpu.concatenate %173, %179 in 0 : vector<8x128xf32>, vector<8x128xf32> -> vector<16x128xf32>
    %cst_53 = arith.constant dense<0.000000e+00> : vector<128x128xf32>
    %182 = tpu.matmul %180, %181, %cst_53 {dimension_numbers = #tpu.dot_dimension_numbers<[0], [0], [1], [1], [0, 1, 1, 1], [], []>} : vector<16x128xf32>, vector<16x128xf32>, vector<128x128xf32> -> vector<128x128xf32>
    %cst_54 = arith.constant dense<0xFF800000> : vector<128xf32>
    %183 = vector.multi_reduction <maximumf>, %182, %cst_54 [0] : vector<128x128xf32> to vector<128xf32>
    %184 = vector.shape_cast %183 : vector<128xf32> to vector<1x128xf32>
    %185 = vector.broadcast %184 : vector<1x128xf32> to vector<128x128xf32>
    %186 = arith.subf %182, %185 : vector<128x128xf32>
    %187 = math.exp %186 : vector<128x128xf32>
    %cst_55 = arith.constant dense<0.000000e+00> : vector<128xf32>
    %188 = vector.multi_reduction <add>, %187, %cst_55 [0] : vector<128x128xf32> to vector<128xf32>
    %189 = vector.shape_cast %188 : vector<128xf32> to vector<1x128xf32>
    %cst_56 = arith.constant dense<0.000000e+00> : vector<8x128xf32>
    %190 = tpu.matmul %178, %187, %cst_56 {dimension_numbers = #tpu.dot_dimension_numbers<[1], [0], [0], [1], [0, 0, 1, 1], [], []>} : vector<8x128xf32>, vector<128x128xf32>, vector<8x128xf32> -> vector<8x128xf32>
    %cst_57 = arith.constant 1.000000e+00 : f32
    %191 = vector.broadcast %cst_57 : f32 to vector<1x128xf32>
    %192 = arith.divf %191, %189 : vector<1x128xf32>
    %193 = vector.broadcast %192 : vector<1x128xf32> to vector<8x128xf32>
    %194 = arith.mulf %190, %193 : vector<8x128xf32>
    %195 = vector.extract_strided_slice %3 {offsets = [72, 0], sizes = [8, 1], strides = [1, 1]} : vector<96x1xf32> to vector<8x1xf32>
    %c8_58 = arith.constant 8 : index
    %c128_59 = arith.constant 128 : index
    %196 = vector.load %arg1[%c8_58, %c128_59] : memref<32x256xf32, #tpu.memory_space<vmem>>, vector<8x128xf32>
    %197 = vector.broadcast %195 : vector<8x1xf32> to vector<8x128xf32>
    %198 = arith.addf %194, %197 : vector<8x128xf32>
    %cst_60 = arith.constant 0.000000e+00 : f32
    %199 = vector.broadcast %cst_60 : f32 to vector<8x128xf32>
    %200 = arith.maximumf %198, %199 : vector<8x128xf32>
    %201 = arith.addf %200, %196 : vector<8x128xf32>
    %c8_61 = arith.constant 8 : index
    %c128_62 = arith.constant 128 : index
    %202 = vector.load %arg5[%c8_61, %c128_62] : memref<32x256xf32, #tpu.memory_space<vmem>>, vector<8x128xf32>
    tpu.vector_store %arg5[%c8_61, %c128_62], %201 {strides = array<i32>} : memref<32x256xf32, #tpu.memory_space<vmem>>, vector<8x128xf32>,
    %203 = vector.extract_strided_slice %2 {offsets = [16, 128], sizes = [8, 128], strides = [1, 1]} : vector<96x256xf32> to vector<8x128xf32>
    %204 = vector.extract_strided_slice %3 {offsets = [16, 0], sizes = [8, 1], strides = [1, 1]} : vector<96x1xf32> to vector<8x1xf32>
    %205 = vector.broadcast %204 : vector<8x1xf32> to vector<8x128xf32>
    %206 = arith.addf %203, %205 : vector<8x128xf32>
    %207 = vector.extract_strided_slice %2 {offsets = [48, 128], sizes = [8, 128], strides = [1, 1]} : vector<96x256xf32> to vector<8x128xf32>
    %208 = vector.extract_strided_slice %3 {offsets = [48, 0], sizes = [8, 1], strides = [1, 1]} : vector<96x1xf32> to vector<8x1xf32>
    %209 = vector.broadcast %208 : vector<8x1xf32> to vector<8x128xf32>
    %210 = arith.addf %207, %209 : vector<8x128xf32>
    %211 = vector.extract_strided_slice %2 {offsets = [80, 128], sizes = [8, 128], strides = [1, 1]} : vector<96x256xf32> to vector<8x128xf32>
    %212 = vector.extract_strided_slice %4 {offsets = [16, 0], sizes = [8, 128], strides = [1, 1]} : vector<32x128xf32> to vector<8x128xf32>
    %213 = tpu.concatenate %210, %206 in 0 : vector<8x128xf32>, vector<8x128xf32> -> vector<16x128xf32>
    %214 = tpu.concatenate %206, %212 in 0 : vector<8x128xf32>, vector<8x128xf32> -> vector<16x128xf32>
    %cst_63 = arith.constant dense<0.000000e+00> : vector<128x128xf32>
    %215 = tpu.matmul %213, %214, %cst_63 {dimension_numbers = #tpu.dot_dimension_numbers<[0], [0], [1], [1], [0, 1, 1, 1], [], []>} : vector<16x128xf32>, vector<16x128xf32>, vector<128x128xf32> -> vector<128x128xf32>
    %cst_64 = arith.constant dense<0xFF800000> : vector<128xf32>
    %216 = vector.multi_reduction <maximumf>, %215, %cst_64 [0] : vector<128x128xf32> to vector<128xf32>
    %217 = vector.shape_cast %216 : vector<128xf32> to vector<1x128xf32>
    %218 = vector.broadcast %217 : vector<1x128xf32> to vector<128x128xf32>
    %219 = arith.subf %215, %218 : vector<128x128xf32>
    %220 = math.exp %219 : vector<128x128xf32>
    %cst_65 = arith.constant dense<0.000000e+00> : vector<128xf32>
    %221 = vector.multi_reduction <add>, %220, %cst_65 [0] : vector<128x128xf32> to vector<128xf32>
    %222 = vector.shape_cast %221 : vector<128xf32> to vector<1x128xf32>
    %cst_66 = arith.constant dense<0.000000e+00> : vector<8x128xf32>
    %223 = tpu.matmul %211, %220, %cst_66 {dimension_numbers = #tpu.dot_dimension_numbers<[1], [0], [0], [1], [0, 0, 1, 1], [], []>} : vector<8x128xf32>, vector<128x128xf32>, vector<8x128xf32> -> vector<8x128xf32>
    %cst_67 = arith.constant 1.000000e+00 : f32
    %224 = vector.broadcast %cst_67 : f32 to vector<1x128xf32>
    %225 = arith.divf %224, %222 : vector<1x128xf32>
    %226 = vector.broadcast %225 : vector<1x128xf32> to vector<8x128xf32>
    %227 = arith.mulf %223, %226 : vector<8x128xf32>
    %228 = vector.extract_strided_slice %3 {offsets = [80, 0], sizes = [8, 1], strides = [1, 1]} : vector<96x1xf32> to vector<8x1xf32>
    %c16_68 = arith.constant 16 : index
    %c128_69 = arith.constant 128 : index
    %229 = vector.load %arg1[%c16_68, %c128_69] : memref<32x256xf32, #tpu.memory_space<vmem>>, vector<8x128xf32>
    %230 = vector.broadcast %228 : vector<8x1xf32> to vector<8x128xf32>
    %231 = arith.addf %227, %230 : vector<8x128xf32>
    %cst_70 = arith.constant 0.000000e+00 : f32
    %232 = vector.broadcast %cst_70 : f32 to vector<8x128xf32>
    %233 = arith.maximumf %231, %232 : vector<8x128xf32>
    %234 = arith.addf %233, %229 : vector<8x128xf32>
    %c16_71 = arith.constant 16 : index
    %c128_72 = arith.constant 128 : index
    %235 = vector.load %arg5[%c16_71, %c128_72] : memref<32x256xf32, #tpu.memory_space<vmem>>, vector<8x128xf32>
    tpu.vector_store %arg5[%c16_71, %c128_72], %234 {strides = array<i32>} : memref<32x256xf32, #tpu.memory_space<vmem>>, vector<8x128xf32>,
    %236 = vector.extract_strided_slice %2 {offsets = [24, 128], sizes = [8, 128], strides = [1, 1]} : vector<96x256xf32> to vector<8x128xf32>
    %237 = vector.extract_strided_slice %3 {offsets = [24, 0], sizes = [8, 1], strides = [1, 1]} : vector<96x1xf32> to vector<8x1xf32>
    %238 = vector.broadcast %237 : vector<8x1xf32> to vector<8x128xf32>
    %239 = arith.addf %236, %238 : vector<8x128xf32>
    %240 = vector.extract_strided_slice %2 {offsets = [56, 128], sizes = [8, 128], strides = [1, 1]} : vector<96x256xf32> to vector<8x128xf32>
    %241 = vector.extract_strided_slice %3 {offsets = [56, 0], sizes = [8, 1], strides = [1, 1]} : vector<96x1xf32> to vector<8x1xf32>
    %242 = vector.broadcast %241 : vector<8x1xf32> to vector<8x128xf32>
    %243 = arith.addf %240, %242 : vector<8x128xf32>
    %244 = vector.extract_strided_slice %2 {offsets = [88, 128], sizes = [8, 128], strides = [1, 1]} : vector<96x256xf32> to vector<8x128xf32>
    %245 = vector.extract_strided_slice %4 {offsets = [24, 0], sizes = [8, 128], strides = [1, 1]} : vector<32x128xf32> to vector<8x128xf32>
    %246 = tpu.concatenate %243, %239 in 0 : vector<8x128xf32>, vector<8x128xf32> -> vector<16x128xf32>
    %247 = tpu.concatenate %239, %245 in 0 : vector<8x128xf32>, vector<8x128xf32> -> vector<16x128xf32>
    %cst_73 = arith.constant dense<0.000000e+00> : vector<128x128xf32>
    %248 = tpu.matmul %246, %247, %cst_73 {dimension_numbers = #tpu.dot_dimension_numbers<[0], [0], [1], [1], [0, 1, 1, 1], [], []>} : vector<16x128xf32>, vector<16x128xf32>, vector<128x128xf32> -> vector<128x128xf32>
    %cst_74 = arith.constant dense<0xFF800000> : vector<128xf32>
    %249 = vector.multi_reduction <maximumf>, %248, %cst_74 [0] : vector<128x128xf32> to vector<128xf32>
    %250 = vector.shape_cast %249 : vector<128xf32> to vector<1x128xf32>
    %251 = vector.broadcast %250 : vector<1x128xf32> to vector<128x128xf32>
    %252 = arith.subf %248, %251 : vector<128x128xf32>
    %253 = math.exp %252 : vector<128x128xf32>
    %cst_75 = arith.constant dense<0.000000e+00> : vector<128xf32>
    %254 = vector.multi_reduction <add>, %253, %cst_75 [0] : vector<128x128xf32> to vector<128xf32>
    %255 = vector.shape_cast %254 : vector<128xf32> to vector<1x128xf32>
    %cst_76 = arith.constant dense<0.000000e+00> : vector<8x128xf32>
    %256 = tpu.matmul %244, %253, %cst_76 {dimension_numbers = #tpu.dot_dimension_numbers<[1], [0], [0], [1], [0, 0, 1, 1], [], []>} : vector<8x128xf32>, vector<128x128xf32>, vector<8x128xf32> -> vector<8x128xf32>
    %cst_77 = arith.constant 1.000000e+00 : f32
    %257 = vector.broadcast %cst_77 : f32 to vector<1x128xf32>
    %258 = arith.divf %257, %255 : vector<1x128xf32>
    %259 = vector.broadcast %258 : vector<1x128xf32> to vector<8x128xf32>
    %260 = arith.mulf %256, %259 : vector<8x128xf32>
    %261 = vector.extract_strided_slice %3 {offsets = [88, 0], sizes = [8, 1], strides = [1, 1]} : vector<96x1xf32> to vector<8x1xf32>
    %c24_78 = arith.constant 24 : index
    %c128_79 = arith.constant 128 : index
    %262 = vector.load %arg1[%c24_78, %c128_79] : memref<32x256xf32, #tpu.memory_space<vmem>>, vector<8x128xf32>
    %263 = vector.broadcast %261 : vector<8x1xf32> to vector<8x128xf32>
    %264 = arith.addf %260, %263 : vector<8x128xf32>
    %cst_80 = arith.constant 0.000000e+00 : f32
    %265 = vector.broadcast %cst_80 : f32 to vector<8x128xf32>
    %266 = arith.maximumf %264, %265 : vector<8x128xf32>
    %267 = arith.addf %266, %262 : vector<8x128xf32>
    %c24_81 = arith.constant 24 : index
    %c128_82 = arith.constant 128 : index
    %268 = vector.load %arg5[%c24_81, %c128_82] : memref<32x256xf32, #tpu.memory_space<vmem>>, vector<8x128xf32>
    tpu.vector_store %arg5[%c24_81, %c128_82], %267 {strides = array<i32>} : memref<32x256xf32, #tpu.memory_space<vmem>>, vector<8x128xf32>,
    return
  }
  func.func @transform_0(%arg0: i32) -> (i32, i32) {
    %c0_i32 = arith.constant 0 : i32
    %c0_i32_0 = arith.constant 0 : i32
    return %c0_i32, %arg0 : i32, i32
  }
  func.func @transform_1(%arg0: i32) -> (i32, i32) {
    %c0_i32 = arith.constant 0 : i32
    %c0_i32_0 = arith.constant 0 : i32
    %c0_i32_1 = arith.constant 0 : i32
    return %c0_i32, %c0_i32_0 : i32, i32
  }
  func.func @transform_2(%arg0: i32) -> (i32, i32) {
    %c0_i32 = arith.constant 0 : i32
    %c0_i32_0 = arith.constant 0 : i32
    %c0_i32_1 = arith.constant 0 : i32
    return %c0_i32, %c0_i32_0 : i32, i32
  }
  func.func @transform_3(%arg0: i32) -> (i32, i32) {
    %c0_i32 = arith.constant 0 : i32
    %c0_i32_0 = arith.constant 0 : i32
    %c0_i32_1 = arith.constant 0 : i32
    return %c0_i32, %c0_i32_0 : i32, i32
  }
  func.func @transform_4(%arg0: i32) -> (i32, i32) {
    %c0_i32 = arith.constant 0 : i32
    %c0_i32_0 = arith.constant 0 : i32
    return %c0_i32, %arg0 : i32, i32
  }
}

</mosaic_0001>

<llo_original>
// kernel: vit_module_forward.1
$region0: #{vit_module_forward.1}
  #allocation0 [shape = 'u32[]', space=smem, size = 0x4, offset = 0x4, fixed_abs, tag = 'smem constant byte address 0x4 - core index']
  #allocation1 [shape = 'u32[144,128]{1,0:T(1,128)}', space=vmem, size = 0x12000, scoped, tag = 'internal scratch']
  %s0 = inlined_call_operand.vmem [shape: f32[32,256], index: 0, kind: input, shape index: {}]
  %s1 = inlined_call_operand.vmem [shape: f32[96,32], index: 1, kind: input, shape index: {}]
  %s2 = inlined_call_operand.vmem [shape: f32[96,1], index: 2, kind: input, shape index: {}]
  %s3 = inlined_call_operand.vmem [shape: f32[32,128], index: 3, kind: input, shape index: {}]
  %s4 = inlined_call_operand.vmem [shape: f32[32,256], index: 4, kind: output, shape index: {}]
  %s5 = sld [smem:[#allocation0]]
  $region26: #{vit_module_forward.1} parent=0
    _
  %s7 = ssub.s32 1, %s5
  %s8 = scalar_select 0, %s7, %s5
  // Predicated region
  $region2: #{vit_module_forward.1} parent=0 // pred_check
    _
  $region3: #{vit_module_forward.1} parent=0 // pred_check_branch
    %10 = sbr.rel (0) target = $region5
  $region4: #{vit_module_forward.1} parent=0 // pred_region
    _
  $region5: #{vit_module_forward.1} parent=0 // pred_fallthru
    _
  // Predicated region
  $region6: #{vit_module_forward.1} parent=0 // pred_check
    _
  $region7: #{vit_module_forward.1} parent=0 // pred_check_branch
    %12 = sbr.rel (0) target = $region9
  $region8: #{vit_module_forward.1} parent=0 // pred_region
    _
  $region9: #{vit_module_forward.1} parent=0 // pred_fallthru
    _
  // Predicated region
  $region10: #{vit_module_forward.1} parent=0 // pred_check
    _
  $region11: #{vit_module_forward.1} parent=0 // pred_check_branch
    %14 = sbr.rel (0) target = $region13
  $region12: #{vit_module_forward.1} parent=0 // pred_region
    _
  $region13: #{vit_module_forward.1} parent=0 // pred_fallthru
    _
  // Predicated region
  $region14: #{vit_module_forward.1} parent=0 // pred_check
    _
  $region15: #{vit_module_forward.1} parent=0 // pred_check_branch
    %16 = sbr.rel (0) target = $region17
  $region16: #{vit_module_forward.1} parent=0 // pred_region
    _
  $region17: #{vit_module_forward.1} parent=0 // pred_fallthru
    _
  %v17 = vld [vmem:[%s1] sm:$0xff]
  %v18 = vld [vmem:[%s1 + $0x8] sm:$0xff]
  %v19 = vld [vmem:[%s1 + $0x10] sm:$0xff]
  %v20 = vld [vmem:[%s1 + $0x18] sm:$0xff]
  %v21 = vld [vmem:[%s1 + $0x20] sm:$0xff]
  %v22 = vld [vmem:[%s1 + $0x28] sm:$0xff]
  %v23 = vld [vmem:[%s1 + $0x30] sm:$0xff]
  %v24 = vld [vmem:[%s1 + $0x38] sm:$0xff]
  %v25 = vld [vmem:[%s1 + $0x40] sm:$0xff]
  %v26 = vld [vmem:[%s1 + $0x48] sm:$0xff]
  %v27 = vld [vmem:[%s1 + $0x50] sm:$0xff]
  %v28 = vld [vmem:[%s1 + $0x58] sm:$0xff]
  %v29 = vld [vmem:[%s0] sm:$0xff]
  %v30 = vld [vmem:[%s0 + $0x8] sm:$0xff]
  %v31 = vld [vmem:[%s0 + $0x10] sm:$0xff]
  %v32 = vld [vmem:[%s0 + $0x18] sm:$0xff]
  %v33 = vld [vmem:[%s0 + $0x20] sm:$0xff]
  %v34 = vld [vmem:[%s0 + $0x28] sm:$0xff]
  %v35 = vld [vmem:[%s0 + $0x30] sm:$0xff]
  %v36 = vld [vmem:[%s0 + $0x38] sm:$0xff]
  %vm37 = vcmask 261120
  %v39 = vsel %vm37, %v17, 0
  %v42 = vsel %vm37, %v18, 0
  %v45 = vsel %vm37, %v19, 0
  %v48 = vsel %vm37, %v20, 0
  %v51 = vsel %vm37, %v21, 0
  %v54 = vsel %vm37, %v22, 0
  %v57 = vsel %vm37, %v23, 0
  %v60 = vsel %vm37, %v24, 0
  %v63 = vsel %vm37, %v25, 0
  %v66 = vsel %vm37, %v26, 0
  %v69 = vsel %vm37, %v27, 0
  %v72 = vsel %vm37, %v28, 0
  %74 = vmatprep.subr.mxu0 %v30
  %75 = vmatpush1.msra.mxu0 %v29
  %76 = vmatprep.subr.mxu0 %v32
  %77 = vmatpush1.msra.mxu0 %v31
  %78 = vmatprep.subr.mxu0 %v34
  %79 = vmatpush1.msra.mxu0 %v33
  %80 = vmatprep.subr.mxu0 %v36
  %81 = vmatpush1.msra.mxu0 %v35
  %82 = vmatprep.subr.mxu0 0.0
  %83 = vmatpush1.msra.mxu0 0.0
  %84 = vmatprep.subr.mxu0 0.0
  %85 = vmatpush1.msra.mxu0 0.0
  %86 = vmatprep.subr.mxu0 0.0
  %87 = vmatpush1.msra.mxu0 0.0
  %88 = vmatprep.subr.mxu0 0.0
  %89 = vmatpush1.msra.mxu0 0.0
  %90 = vmatprep.subr.mxu0 0.0
  %91 = vmatpush1.msra.mxu0 0.0
  %92 = vmatprep.subr.mxu0 0.0
  %93 = vmatpush1.msra.mxu0 0.0
  %94 = vmatprep.subr.mxu0 0.0
  %95 = vmatpush1.msra.mxu0 0.0
  %96 = vmatprep.subr.mxu0 0.0
  %97 = vmatpush1.msra.mxu0 0.0
  %98 = vmatprep.subr.mxu0 0.0
  %99 = vmatpush1.msra.mxu0 0.0
  %100 = vmatprep.subr.mxu0 0.0
  %101 = vmatpush1.msra.mxu0 0.0
  %102 = vmatprep.subr.mxu0 0.0
  %103 = vmatpush1.msra.mxu0 0.0
  %104 = vmatprep.subr.mxu0 0.0
  %105 = vmatpush1.msra.mxu0 0.0
  %106 = vmatprep.subr.mxu0 0.0
  %107 = vmatpush1.msra.mxu0 0.0
  %108 = vmatprep.subr.mxu0 0.0
  %109 = vmatpush1.msra.mxu0 0.0
  %110 = vmatprep.subr.mxu0 0.0
  %111 = vmatpush1.msra.mxu0 0.0
  %112 = vmatprep.subr.mxu0 0.0
  %113 = vmatpush1.msra.mxu0 0.0
  %114 = vmatprep.subr.mxu0 0.0
  %115 = vmatpush1.msra.mxu0 0.0
  %116 = vmatprep.subr.mxu0 0.0
  %117 = vmatpush1.msra.mxu0 0.0
  %118 = vmatprep.subr.mxu0 0.0
  %119 = vmatpush1.msra.mxu0 0.0
  %120 = vmatprep.subr.mxu0 0.0
  %121 = vmatpush1.msra.mxu0 0.0
  %122 = vmatprep.subr.mxu0 0.0
  %123 = vmatpush1.msra.mxu0 0.0
  %124 = vmatprep.subr.mxu0 0.0
  %125 = vmatpush1.msra.mxu0 0.0
  %126 = vmatprep.subr.mxu0 0.0
  %127 = vmatpush1.msra.mxu0 0.0
  %128 = vmatprep.subr.mxu0 0.0
  %129 = vmatpush1.msra.mxu0 0.0
  %130 = vmatprep.subr.mxu0 0.0
  %131 = vmatpush1.msra.mxu0 0.0
  %132 = vmatprep.subr.mxu0 0.0
  %133 = vmatpush1.msra.mxu0 0.0
  %134 = vmatprep.subr.mxu0 0.0
  %135 = vmatpush1.msra.mxu0 0.0
  %136 = vmatprep.subr.mxu0 0.0
  %137 = vmatpush1.msra.mxu0 0.0
  %138 = vmatprep.mubr.f32.mxu0 0.0
  %139 = vmatmul.mubr.f32.gmra.mrb[0].mxu0 %v39
  %v140 = vpop.f32.mrb[0].mxu0
  %v141 = vadd.f32 0.0, %v140
  %v142 = vpop.f32.mrb[0].mxu0
  %v143 = vadd.f32 0.0, %v142
  %144 = vmatprep.mubr.f32.mxu0 0.0
  %145 = vmatmul.mubr.f32.gmra.mrb[0].mxu0 %v42
  %v146 = vpop.f32.mrb[0].mxu0
  %v147 = vadd.f32 0.0, %v146
  %v148 = vpop.f32.mrb[0].mxu0
  %v149 = vadd.f32 0.0, %v148
  %150 = vmatprep.mubr.f32.mxu0 0.0
  %151 = vmatmul.mubr.f32.gmra.mrb[0].mxu0 %v45
  %v152 = vpop.f32.mrb[0].mxu0
  %v153 = vadd.f32 0.0, %v152
  %v154 = vpop.f32.mrb[0].mxu0
  %v155 = vadd.f32 0.0, %v154
  %156 = vmatprep.mubr.f32.mxu0 0.0
  %157 = vmatmul.mubr.f32.gmra.mrb[0].mxu0 %v48
  %v158 = vpop.f32.mrb[0].mxu0
  %v159 = vadd.f32 0.0, %v158
  %v160 = vpop.f32.mrb[0].mxu0
  %v161 = vadd.f32 0.0, %v160
  %162 = vmatprep.mubr.f32.mxu0 0.0
  %163 = vmatmul.mubr.f32.gmra.mrb[0].mxu0 %v51
  %v164 = vpop.f32.mrb[0].mxu0
  %v165 = vadd.f32 0.0, %v164
  %v166 = vpop.f32.mrb[0].mxu0
  %v167 = vadd.f32 0.0, %v166
  %168 = vmatprep.mubr.f32.mxu0 0.0
  %169 = vmatmul.mubr.f32.gmra.mrb[0].mxu0 %v54
  %v170 = vpop.f32.mrb[0].mxu0
  %v171 = vadd.f32 0.0, %v170
  %v172 = vpop.f32.mrb[0].mxu0
  %v173 = vadd.f32 0.0, %v172
  %174 = vmatprep.mubr.f32.mxu0 0.0
  %175 = vmatmul.mubr.f32.gmra.mrb[0].mxu0 %v57
  %v176 = vpop.f32.mrb[0].mxu0
  %v177 = vadd.f32 0.0, %v176
  %v178 = vpop.f32.mrb[0].mxu0
  %v179 = vadd.f32 0.0, %v178
  %180 = vmatprep.mubr.f32.mxu0 0.0
  %181 = vmatmul.mubr.f32.gmra.mrb[0].mxu0 %v60
  %v182 = vpop.f32.mrb[0].mxu0
  %v183 = vadd.f32 0.0, %v182
  %v184 = vpop.f32.mrb[0].mxu0
  %v185 = vadd.f32 0.0, %v184
  %186 = vmatprep.mubr.f32.mxu0 0.0
  %187 = vmatmul.mubr.f32.gmra.mrb[0].mxu0 %v63
  %v188 = vpop.f32.mrb[0].mxu0
  %v189 = vadd.f32 0.0, %v188
  %v190 = vpop.f32.mrb[0].mxu0
  %v191 = vadd.f32 0.0, %v190
  %192 = vmatprep.mubr.f32.mxu0 0.0
  %193 = vmatmul.mubr.f32.gmra.mrb[0].mxu0 %v66
  %v194 = vpop.f32.mrb[0].mxu0
  %v195 = vadd.f32 0.0, %v194
  %v196 = vpop.f32.mrb[0].mxu0
  %v197 = vadd.f32 0.0, %v196
  %198 = vmatprep.mubr.f32.mxu0 0.0
  %199 = vmatmul.mubr.f32.gmra.mrb[0].mxu0 %v69
  %v200 = vpop.f32.mrb[0].mxu0
  %v201 = vadd.f32 0.0, %v200
  %v202 = vpop.f32.mrb[0].mxu0
  %v203 = vadd.f32 0.0, %v202
  %204 = vmatprep.mubr.f32.mxu0 0.0
  %205 = vmatmul.mubr.f32.gmra.mrb[0].mxu0 %v72
  %v206 = vpop.f32.mrb[0].mxu0
  %v207 = vadd.f32 0.0, %v206
  %v208 = vpop.f32.mrb[0].mxu0
  %v209 = vadd.f32 0.0, %v208
  %210 = vdwg.mxu0
  %v211 = vld [vmem:[%s2] sm:$0xff]
  %v212 = vld [vmem:[%s2 + $0x8] sm:$0xff]
  %v213 = vld [vmem:[%s2 + $0x10] sm:$0xff]
  %v214 = vld [vmem:[%s2 + $0x18] sm:$0xff]
  %v215 = vld [vmem:[%s2 + $0x20] sm:$0xff]
  %v216 = vld [vmem:[%s2 + $0x28] sm:$0xff]
  %v217 = vld [vmem:[%s2 + $0x30] sm:$0xff]
  %v218 = vld [vmem:[%s2 + $0x38] sm:$0xff]
  %v219 = vld [vmem:[%s2 + $0x40] sm:$0xff]
  %v220 = vld [vmem:[%s2 + $0x48] sm:$0xff]
  %v221 = vld [vmem:[%s2 + $0x50] sm:$0xff]
  %v222 = vld [vmem:[%s2 + $0x58] sm:$0xff]
  %v223 = vld [vmem:[%s3] sm:$0xff]
  %v224 = vld [vmem:[%s3 + $0x8] sm:$0xff]
  %v225 = vld [vmem:[%s3 + $0x10] sm:$0xff]
  %v226 = vld [vmem:[%s3 + $0x18] sm:$0xff]
  %228 = vset.pattern.permute.xlu0 0
  %229 = vperm.xlu0 %228, %v211
  %v230 = vpop.permute.xlu0 %229
  %v232 = vadd.f32 %v141, %v230
  %234 = vset.pattern.permute.xlu0 0
  %235 = vperm.xlu0 %234, %v215
  %v236 = vpop.permute.xlu0 %235
  %v238 = vadd.f32 %v165, %v236
  %239 = vxpose.xlu0.b32.start [1/16] %v238, 128
  %240 = vxpose.xlu0.b32.cont [2/16] %v232, 128
  %241 = vxpose.xlu0.b32.cont [3/16] 0.0, 128
  %242 = vxpose.xlu0.b32.cont [4/16] 0.0, 128
  %243 = vxpose.xlu0.b32.cont [5/16] 0.0, 128
  %244 = vxpose.xlu0.b32.cont [6/16] 0.0, 128
  %245 = vxpose.xlu0.b32.cont [7/16] 0.0, 128
  %246 = vxpose.xlu0.b32.cont [8/16] 0.0, 128
  %247 = vxpose.xlu0.b32.cont [9/16] 0.0, 128
  %248 = vxpose.xlu0.b32.cont [10/16] 0.0, 128
  %249 = vxpose.xlu0.b32.cont [11/16] 0.0, 128
  %250 = vxpose.xlu0.b32.cont [12/16] 0.0, 128
  %251 = vxpose.xlu0.b32.cont [13/16] 0.0, 128
  %252 = vxpose.xlu0.b32.cont [14/16] 0.0, 128
  %253 = vxpose.xlu0.b32.cont [15/16] 0.0, 128
  %254 = vxpose.xlu0.b32.end [16/16] 0.0, 128
  %v255 = vpop.trf.xlu0
  %v256 = vpop.trf.xlu0
  %v257 = vpop.trf.xlu0
  %v258 = vpop.trf.xlu0
  %v259 = vpop.trf.xlu0
  %v260 = vpop.trf.xlu0
  %v261 = vpop.trf.xlu0
  %v262 = vpop.trf.xlu0
  %v263 = vpop.trf.xlu0
  %v264 = vpop.trf.xlu0
  %v265 = vpop.trf.xlu0
  %v266 = vpop.trf.xlu0
  %v267 = vpop.trf.xlu0
  %v268 = vpop.trf.xlu0
  %v269 = vpop.trf.xlu0
  %v270 = vpop.trf.xlu0
  %vm271 = vcmask 130048
  %v273 = vsel %vm271, %v255, 0
  %v276 = vsel %vm271, %v256, 0
  %v279 = vsel %vm271, %v257, 0
  %v282 = vsel %vm271, %v258, 0
  %v285 = vsel %vm271, %v259, 0
  %v288 = vsel %vm271, %v260, 0
  %v291 = vsel %vm271, %v261, 0
  %v294 = vsel %vm271, %v262, 0
  %v297 = vsel %vm271, %v263, 0
  %v300 = vsel %vm271, %v264, 0
  %v303 = vsel %vm271, %v265, 0
  %v306 = vsel %vm271, %v266, 0
  %v309 = vsel %vm271, %v267, 0
  %v312 = vsel %vm271, %v268, 0
  %v315 = vsel %vm271, %v269, 0
  %v318 = vsel %vm271, %v270, 0
  %320 = vmatprep.subr.mxu0 0.0
  %321 = vmatpush1.msra.mxu0 %v232
  %322 = vmatprep.subr.mxu0 0.0
  %323 = vmatpush1.msra.mxu0 %v223
  %324 = vmatprep.subr.mxu0 0.0
  %325 = vmatpush1.msra.mxu0 0.0
  %326 = vmatprep.subr.mxu0 0.0
  %327 = vmatpush1.msra.mxu0 0.0
  %328 = vmatprep.subr.mxu0 0.0
  %329 = vmatpush1.msra.mxu0 0.0
  %330 = vmatprep.subr.mxu0 0.0
  %331 = vmatpush1.msra.mxu0 0.0
  %332 = vmatprep.subr.mxu0 0.0
  %333 = vmatpush1.msra.mxu0 0.0
  %334 = vmatprep.subr.mxu0 0.0
  %335 = vmatpush1.msra.mxu0 0.0
  %336 = vmatprep.subr.mxu0 0.0
  %337 = vmatpush1.msra.mxu0 0.0
  %338 = vmatprep.subr.mxu0 0.0
  %339 = vmatpush1.msra.mxu0 0.0
  %340 = vmatprep.subr.mxu0 0.0
  %341 = vmatpush1.msra.mxu0 0.0
  %342 = vmatprep.subr.mxu0 0.0
  %343 = vmatpush1.msra.mxu0 0.0
  %344 = vmatprep.subr.mxu0 0.0
  %345 = vmatpush1.msra.mxu0 0.0
  %346 = vmatprep.subr.mxu0 0.0
  %347 = vmatpush1.msra.mxu0 0.0
  %348 = vmatprep.subr.mxu0 0.0
  %349 = vmatpush1.msra.mxu0 0.0
  %350 = vmatprep.subr.mxu0 0.0
  %351 = vmatpush1.msra.mxu0 0.0
  %352 = vmatprep.subr.mxu0 0.0
  %353 = vmatpush1.msra.mxu0 0.0
  %354 = vmatprep.subr.mxu0 0.0
  %355 = vmatpush1.msra.mxu0 0.0
  %356 = vmatprep.subr.mxu0 0.0
  %357 = vmatpush1.msra.mxu0 0.0
  %358 = vmatprep.subr.mxu0 0.0
  %359 = vmatpush1.msra.mxu0 0.0
  %360 = vmatprep.subr.mxu0 0.0
  %361 = vmatpush1.msra.mxu0 0.0
  %362 = vmatprep.subr.mxu0 0.0
  %363 = vmatpush1.msra.mxu0 0.0
  %364 = vmatprep.subr.mxu0 0.0
  %365 = vmatpush1.msra.mxu0 0.0
  %366 = vmatprep.subr.mxu0 0.0
  %367 = vmatpush1.msra.mxu0 0.0
  %368 = vmatprep.subr.mxu0 0.0
  %369 = vmatpush1.msra.mxu0 0.0
  %370 = vmatprep.subr.mxu0 0.0
  %371 = vmatpush1.msra.mxu0 0.0
  %372 = vmatprep.subr.mxu0 0.0
  %373 = vmatpush1.msra.mxu0 0.0
  %374 = vmatprep.subr.mxu0 0.0
  %375 = vmatpush1.msra.mxu0 0.0
  %376 = vmatprep.subr.mxu0 0.0
  %377 = vmatpush1.msra.mxu0 0.0
  %378 = vmatprep.subr.mxu0 0.0
  %379 = vmatpush1.msra.mxu0 0.0
  %380 = vmatprep.subr.mxu0 0.0
  %381 = vmatpush1.msra.mxu0 0.0
  %382 = vmatprep.subr.mxu0 0.0
  %383 = vmatpush1.msra.mxu0 0.0
  %384 = vmatprep.mubr.f32.mxu0 0.0
  %385 = vmatmul.mubr.f32.gmra.mrb[0].mxu0 %v273
  %v386 = vpop.f32.mrb[0].mxu0
  %v387 = vadd.f32 0.0, %v386
  %v388 = vpop.f32.mrb[0].mxu0
  %389 = vmatprep.mubr.f32.mxu0 0.0
  %390 = vmatmul.mubr.f32.gmra.mrb[0].mxu0 %v276
  %v391 = vpop.f32.mrb[0].mxu0
  %v392 = vadd.f32 0.0, %v391
  %v393 = vpop.f32.mrb[0].mxu0
  %394 = vmatprep.mubr.f32.mxu0 0.0
  %395 = vmatmul.mubr.f32.gmra.mrb[0].mxu0 %v279
  %v396 = vpop.f32.mrb[0].mxu0
  %v397 = vadd.f32 0.0, %v396
  %v398 = vpop.f32.mrb[0].mxu0
  %399 = vmatprep.mubr.f32.mxu0 0.0
  %400 = vmatmul.mubr.f32.gmra.mrb[0].mxu0 %v282
  %v401 = vpop.f32.mrb[0].mxu0
  %v402 = vadd.f32 0.0, %v401
  %v403 = vpop.f32.mrb[0].mxu0
  %404 = vmatprep.mubr.f32.mxu0 0.0
  %405 = vmatmul.mubr.f32.gmra.mrb[0].mxu0 %v285
  %v406 = vpop.f32.mrb[0].mxu0
  %v407 = vadd.f32 0.0, %v406
  %v408 = vpop.f32.mrb[0].mxu0
  %409 = vmatprep.mubr.f32.mxu0 0.0
  %410 = vmatmul.mubr.f32.gmra.mrb[0].mxu0 %v288
  %v411 = vpop.f32.mrb[0].mxu0
  %v412 = vadd.f32 0.0, %v411
  %v413 = vpop.f32.mrb[0].mxu0
  %414 = vmatprep.mubr.f32.mxu0 0.0
  %415 = vmatmul.mubr.f32.gmra.mrb[0].mxu0 %v291
  %v416 = vpop.f32.mrb[0].mxu0
  %v417 = vadd.f32 0.0, %v416
  %v418 = vpop.f32.mrb[0].mxu0
  %419 = vmatprep.mubr.f32.mxu0 0.0
  %420 = vmatmul.mubr.f32.gmra.mrb[0].mxu0 %v294
  %v421 = vpop.f32.mrb[0].mxu0
  %v422 = vadd.f32 0.0, %v421
  %v423 = vpop.f32.mrb[0].mxu0
  %424 = vmatprep.mubr.f32.mxu0 0.0
  %425 = vmatmul.mubr.f32.gmra.mrb[0].mxu0 %v297
  %v426 = vpop.f32.mrb[0].mxu0
  %v427 = vadd.f32 0.0, %v426
  %v428 = vpop.f32.mrb[0].mxu0
  %429 = vmatprep.mubr.f32.mxu0 0.0
  %430 = vmatmul.mubr.f32.gmra.mrb[0].mxu0 %v300
  %v431 = vpop.f32.mrb[0].mxu0
  %v432 = vadd.f32 0.0, %v431
  %v433 = vpop.f32.mrb[0].mxu0
  %434 = vmatprep.mubr.f32.mxu0 0.0
  %435 = vmatmul.mubr.f32.gmra.mrb[0].mxu0 %v303
  %v436 = vpop.f32.mrb[0].mxu0
  %v437 = vadd.f32 0.0, %v436
  %v438 = vpop.f32.mrb[0].mxu0
  %439 = vmatprep.mubr.f32.mxu0 0.0
  %440 = vmatmul.mubr.f32.gmra.mrb[0].mxu0 %v306
  %v441 = vpop.f32.mrb[0].mxu0
  %v442 = vadd.f32 0.0, %v441
  %v443 = vpop.f32.mrb[0].mxu0
  %444 = vmatprep.mubr.f32.mxu0 0.0
  %445 = vmatmul.mubr.f32.gmra.mrb[0].mxu0 %v309
  %v446 = vpop.f32.mrb[0].mxu0
  %v447 = vadd.f32 0.0, %v446
  %v448 = vpop.f32.mrb[0].mxu0
  %449 = vmatprep.mubr.f32.mxu0 0.0
  %450 = vmatmul.mubr.f32.gmra.mrb[0].mxu0 %v312
  %v451 = vpop.f32.mrb[0].mxu0
  %v452 = vadd.f32 0.0, %v451
  %v453 = vpop.f32.mrb[0].mxu0
  %454 = vmatprep.mubr.f32.mxu0 0.0
  %455 = vmatmul.mubr.f32.gmra.mrb[0].mxu0 %v315
  %v456 = vpop.f32.mrb[0].mxu0
  %v457 = vadd.f32 0.0, %v456
  %v458 = vpop.f32.mrb[0].mxu0
  %459 = vmatprep.mubr.f32.mxu0 0.0
  %460 = vmatmul.mubr.f32.gmra.mrb[0].mxu0 %v318
  %v461 = vpop.f32.mrb[0].mxu0
  %v462 = vadd.f32 0.0, %v461
  %v463 = vpop.f32.mrb[0].mxu0
  %464 = vdwg.mxu0
  %v465 = vmax.f32 %v387, %v407
  %v466 = vmax.f32 %v392, %v412
  %v467 = vmax.f32 %v397, %v417
  %v468 = vmax.f32 %v402, %v422
  %v469 = vmax.f32 %v465, %v427
  %v470 = vmax.f32 %v466, %v432
  %v471 = vmax.f32 %v467, %v437
  %v472 = vmax.f32 %v468, %v442
  %v473 = vmax.f32 %v469, %v447
  %v474 = vmax.f32 %v470, %v452
  %v475 = vmax.f32 %v471, %v457
  %v476 = vmax.f32 %v472, %v462
  %v477 = vmax.f32 %v473, %v474
  %v478 = vmax.f32 %v475, %v476
  %v479 = vmax.f32 %v477, %v478
  %v480 = vrot.slane %v479, 4
  %v481 = vmax.f32 %v479, %v480
  %v482 = vrot.slane %v481, 2
  %v483 = vmax.f32 %v481, %v482
  %v484 = vrot.slane %v483, 1
  %v485 = vmax.f32 %v483, %v484
  %v486 = vsub.f32 %v387, %v485
  %v487 = vsub.f32 %v392, %v485
  %v488 = vsub.f32 %v397, %v485
  %v489 = vsub.f32 %v402, %v485
  %v490 = vsub.f32 %v407, %v485
  %v491 = vsub.f32 %v412, %v485
  %v492 = vsub.f32 %v417, %v485
  %v493 = vsub.f32 %v422, %v485
  %v494 = vsub.f32 %v427, %v485
  %v495 = vsub.f32 %v432, %v485
  %v496 = vsub.f32 %v437, %v485
  %v497 = vsub.f32 %v442, %v485
  %v498 = vsub.f32 %v447, %v485
  %v499 = vsub.f32 %v452, %v485
  %v500 = vsub.f32 %v457, %v485
  %v501 = vsub.f32 %v462, %v485
  %v502 = vmul.f32 %v486, 1.442695
  %v503 = vpow.pop %v502
  %v504 = vmul.f32 %v487, 1.442695
  %v505 = vpow.pop %v504
  %v506 = vmul.f32 %v488, 1.442695
  %v507 = vpow.pop %v506
  %v508 = vmul.f32 %v489, 1.442695
  %v509 = vpow.pop %v508
  %v510 = vmul.f32 %v490, 1.442695
  %v511 = vpow.pop %v510
  %v512 = vmul.f32 %v491, 1.442695
  %v513 = vpow.pop %v512
  %v514 = vmul.f32 %v492, 1.442695
  %v515 = vpow.pop %v514
  %v516 = vmul.f32 %v493, 1.442695
  %v517 = vpow.pop %v516
  %v518 = vmul.f32 %v494, 1.442695
  %v519 = vpow.pop %v518
  %v520 = vmul.f32 %v495, 1.442695
  %v521 = vpow.pop %v520
  %v522 = vmul.f32 %v496, 1.442695
  %v523 = vpow.pop %v522
  %v524 = vmul.f32 %v497, 1.442695
  %v525 = vpow.pop %v524
  %v526 = vmul.f32 %v498, 1.442695
  %v527 = vpow.pop %v526
  %v528 = vmul.f32 %v499, 1.442695
  %v529 = vpow.pop %v528
  %v530 = vmul.f32 %v500, 1.442695
  %v531 = vpow.pop %v530
  %v532 = vmul.f32 %v501, 1.442695
  %v533 = vpow.pop %v532
  %v534 = vadd.f32 %v503, %v505
  %v535 = vadd.f32 %v534, %v507
  %v536 = vadd.f32 %v535, %v509
  %v537 = vadd.f32 %v536, %v511
  %v538 = vadd.f32 %v537, %v513
  %v539 = vadd.f32 %v538, %v515
  %v540 = vadd.f32 %v539, %v517
  %v541 = vadd.f32 %v540, %v519
  %v542 = vadd.f32 %v541, %v521
  %v543 = vadd.f32 %v542, %v523
  %v544 = vadd.f32 %v543, %v525
  %v545 = vadd.f32 %v544, %v527
  %v546 = vadd.f32 %v545, %v529
  %v547 = vadd.f32 %v546, %v531
  %v548 = vadd.f32 %v547, %v533
  %v549 = vrot.slane %v548, 4
  %v550 = vadd.f32 %v548, %v549
  %v551 = vrot.slane %v550, 2
  %v552 = vadd.f32 %v550, %v551
  %v553 = vrot.slane %v552, 1
  %v554 = vadd.f32 %v552, %v553
  %555 = vmatprep.subr.mxu0 0.0
  %556 = vmatpush1.msra.mxu0 %v503
  %557 = vmatprep.subr.mxu0 0.0
  %558 = vmatpush1.msra.mxu0 %v505
  %559 = vmatprep.subr.mxu0 0.0
  %560 = vmatpush1.msra.mxu0 %v507
  %561 = vmatprep.subr.mxu0 0.0
  %562 = vmatpush1.msra.mxu0 %v509
  %563 = vmatprep.subr.mxu0 0.0
  %564 = vmatpush1.msra.mxu0 %v511
  %565 = vmatprep.subr.mxu0 0.0
  %566 = vmatpush1.msra.mxu0 %v513
  %567 = vmatprep.subr.mxu0 0.0
  %568 = vmatpush1.msra.mxu0 %v515
  %569 = vmatprep.subr.mxu0 0.0
  %570 = vmatpush1.msra.mxu0 %v517
  %571 = vmatprep.subr.mxu0 0.0
  %572 = vmatpush1.msra.mxu0 %v519
  %573 = vmatprep.subr.mxu0 0.0
  %574 = vmatpush1.msra.mxu0 %v521
  %575 = vmatprep.subr.mxu0 0.0
  %576 = vmatpush1.msra.mxu0 %v523
  %577 = vmatprep.subr.mxu0 0.0
  %578 = vmatpush1.msra.mxu0 %v525
  %579 = vmatprep.subr.mxu0 0.0
  %580 = vmatpush1.msra.mxu0 %v527
  %581 = vmatprep.subr.mxu0 0.0
  %582 = vmatpush1.msra.mxu0 %v529
  %583 = vmatprep.subr.mxu0 0.0
  %584 = vmatpush1.msra.mxu0 %v531
  %585 = vmatprep.subr.mxu0 0.0
  %586 = vmatpush1.msra.mxu0 %v533
  %587 = vmatprep.subr.mxu0 0.0
  %588 = vmatpush1.msra.mxu0 0.0
  %589 = vmatprep.subr.mxu0 0.0
  %590 = vmatpush1.msra.mxu0 0.0
  %591 = vmatprep.subr.mxu0 0.0
  %592 = vmatpush1.msra.mxu0 0.0
  %593 = vmatprep.subr.mxu0 0.0
  %594 = vmatpush1.msra.mxu0 0.0
  %595 = vmatprep.subr.mxu0 0.0
  %596 = vmatpush1.msra.mxu0 0.0
  %597 = vmatprep.subr.mxu0 0.0
  %598 = vmatpush1.msra.mxu0 0.0
  %599 = vmatprep.subr.mxu0 0.0
  %600 = vmatpush1.msra.mxu0 0.0
  %601 = vmatprep.subr.mxu0 0.0
  %602 = vmatpush1.msra.mxu0 0.0
  %603 = vmatprep.subr.mxu0 0.0
  %604 = vmatpush1.msra.mxu0 0.0
  %605 = vmatprep.subr.mxu0 0.0
  %606 = vmatpush1.msra.mxu0 0.0
  %607 = vmatprep.subr.mxu0 0.0
  %608 = vmatpush1.msra.mxu0 0.0
  %609 = vmatprep.subr.mxu0 0.0
  %610 = vmatpush1.msra.mxu0 0.0
  %611 = vmatprep.subr.mxu0 0.0
  %612 = vmatpush1.msra.mxu0 0.0
  %613 = vmatprep.subr.mxu0 0.0
  %614 = vmatpush1.msra.mxu0 0.0
  %615 = vmatprep.subr.mxu0 0.0
  %616 = vmatpush1.msra.mxu0 0.0
  %617 = vmatprep.subr.mxu0 0.0
  %618 = vmatpush1.msra.mxu0 0.0
  %619 = vmatprep.mubr.f32.mxu0 0.0
  %620 = vmatmul.mubr.f32.gmra.mrb[0].mxu0 %v189
  %v621 = vpop.f32.mrb[0].mxu0
  %v622 = vadd.f32 0.0, %v621
  %v623 = vpop.f32.mrb[0].mxu0
  %624 = vdwg.mxu0
  %v625 = vrcp.pop %v554
  %v626 = vmul.f32 1.0, %v625
  %v627 = vmul.f32 %v622, %v626
  %v628 = vld [vmem:[%s0] sm:$0xff]
  %630 = vset.pattern.permute.xlu0 0
  %631 = vperm.xlu0 %630, %v219
  %v632 = vpop.permute.xlu0 %631
  %v634 = vadd.f32 %v627, %v632
  %v635 = vmax.f32 %v634, 0.0
  %v636 = vadd.f32 %v635, %v628
  %637 = vst [vmem:[%s4] sm:$0xff] %v636
  %639 = vset.pattern.permute.xlu0 0
  %640 = vperm.xlu0 %639, %v212
  %v641 = vpop.permute.xlu0 %640
  %v643 = vadd.f32 %v147, %v641
  %645 = vset.pattern.permute.xlu0 0
  %646 = vperm.xlu0 %645, %v216
  %v647 = vpop.permute.xlu0 %646
  %v649 = vadd.f32 %v171, %v647
  %650 = vxpose.xlu0.b32.start [1/16] %v649, 128
  %651 = vxpose.xlu0.b32.cont [2/16] %v643, 128
  %652 = vxpose.xlu0.b32.cont [3/16] 0.0, 128
  %653 = vxpose.xlu0.b32.cont [4/16] 0.0, 128
  %654 = vxpose.xlu0.b32.cont [5/16] 0.0, 128
  %655 = vxpose.xlu0.b32.cont [6/16] 0.0, 128
  %656 = vxpose.xlu0.b32.cont [7/16] 0.0, 128
  %657 = vxpose.xlu0.b32.cont [8/16] 0.0, 128
  %658 = vxpose.xlu0.b32.cont [9/16] 0.0, 128
  %659 = vxpose.xlu0.b32.cont [10/16] 0.0, 128
  %660 = vxpose.xlu0.b32.cont [11/16] 0.0, 128
  %661 = vxpose.xlu0.b32.cont [12/16] 0.0, 128
  %662 = vxpose.xlu0.b32.cont [13/16] 0.0, 128
  %663 = vxpose.xlu0.b32.cont [14/16] 0.0, 128
  %664 = vxpose.xlu0.b32.cont [15/16] 0.0, 128
  %665 = vxpose.xlu0.b32.end [16/16] 0.0, 128
  %v666 = vpop.trf.xlu0
  %v667 = vpop.trf.xlu0
  %v668 = vpop.trf.xlu0
  %v669 = vpop.trf.xlu0
  %v670 = vpop.trf.xlu0
  %v671 = vpop.trf.xlu0
  %v672 = vpop.trf.xlu0
  %v673 = vpop.trf.xlu0
  %v674 = vpop.trf.xlu0
  %v675 = vpop.trf.xlu0
  %v676 = vpop.trf.xlu0
  %v677 = vpop.trf.xlu0
  %v678 = vpop.trf.xlu0
  %v679 = vpop.trf.xlu0
  %v680 = vpop.trf.xlu0
  %v681 = vpop.trf.xlu0
  %v683 = vsel %vm271, %v666, 0
  %v686 = vsel %vm271, %v667, 0
  %v689 = vsel %vm271, %v668, 0
  %v692 = vsel %vm271, %v669, 0
  %v695 = vsel %vm271, %v670, 0
  %v698 = vsel %vm271, %v671, 0
  %v701 = vsel %vm271, %v672, 0
  %v704 = vsel %vm271, %v673, 0
  %v707 = vsel %vm271, %v674, 0
  %v710 = vsel %vm271, %v675, 0
  %v713 = vsel %vm271, %v676, 0
  %v716 = vsel %vm271, %v677, 0
  %v719 = vsel %vm271, %v678, 0
  %v722 = vsel %vm271, %v679, 0
  %v725 = vsel %vm271, %v680, 0
  %v728 = vsel %vm271, %v681, 0
  %730 = vmatprep.subr.mxu0 0.0
  %731 = vmatpush1.msra.mxu0 %v643
  %732 = vmatprep.subr.mxu0 0.0
  %733 = vmatpush1.msra.mxu0 %v224
  %734 = vmatprep.subr.mxu0 0.0
  %735 = vmatpush1.msra.mxu0 0.0
  %736 = vmatprep.subr.mxu0 0.0
  %737 = vmatpush1.msra.mxu0 0.0
  %738 = vmatprep.subr.mxu0 0.0
  %739 = vmatpush1.msra.mxu0 0.0
  %740 = vmatprep.subr.mxu0 0.0
  %741 = vmatpush1.msra.mxu0 0.0
  %742 = vmatprep.subr.mxu0 0.0
  %743 = vmatpush1.msra.mxu0 0.0
  %744 = vmatprep.subr.mxu0 0.0
  %745 = vmatpush1.msra.mxu0 0.0
  %746 = vmatprep.subr.mxu0 0.0
  %747 = vmatpush1.msra.mxu0 0.0
  %748 = vmatprep.subr.mxu0 0.0
  %749 = vmatpush1.msra.mxu0 0.0
  %750 = vmatprep.subr.mxu0 0.0
  %751 = vmatpush1.msra.mxu0 0.0
  %752 = vmatprep.subr.mxu0 0.0
  %753 = vmatpush1.msra.mxu0 0.0
  %754 = vmatprep.subr.mxu0 0.0
  %755 = vmatpush1.msra.mxu0 0.0
  %756 = vmatprep.subr.mxu0 0.0
  %757 = vmatpush1.msra.mxu0 0.0
  %758 = vmatprep.subr.mxu0 0.0
  %759 = vmatpush1.msra.mxu0 0.0
  %760 = vmatprep.subr.mxu0 0.0
  %761 = vmatpush1.msra.mxu0 0.0
  %762 = vmatprep.subr.mxu0 0.0
  %763 = vmatpush1.msra.mxu0 0.0
  %764 = vmatprep.subr.mxu0 0.0
  %765 = vmatpush1.msra.mxu0 0.0
  %766 = vmatprep.subr.mxu0 0.0
  %767 = vmatpush1.msra.mxu0 0.0
  %768 = vmatprep.subr.mxu0 0.0
  %769 = vmatpush1.msra.mxu0 0.0
  %770 = vmatprep.subr.mxu0 0.0
  %771 = vmatpush1.msra.mxu0 0.0
  %772 = vmatprep.subr.mxu0 0.0
  %773 = vmatpush1.msra.mxu0 0.0
  %774 = vmatprep.subr.mxu0 0.0
  %775 = vmatpush1.msra.mxu0 0.0
  %776 = vmatprep.subr.mxu0 0.0
  %777 = vmatpush1.msra.mxu0 0.0
  %778 = vmatprep.subr.mxu0 0.0
  %779 = vmatpush1.msra.mxu0 0.0
  %780 = vmatprep.subr.mxu0 0.0
  %781 = vmatpush1.msra.mxu0 0.0
  %782 = vmatprep.subr.mxu0 0.0
  %783 = vmatpush1.msra.mxu0 0.0
  %784 = vmatprep.subr.mxu0 0.0
  %785 = vmatpush1.msra.mxu0 0.0
  %786 = vmatprep.subr.mxu0 0.0
  %787 = vmatpush1.msra.mxu0 0.0
  %788 = vmatprep.subr.mxu0 0.0
  %789 = vmatpush1.msra.mxu0 0.0
  %790 = vmatprep.subr.mxu0 0.0
  %791 = vmatpush1.msra.mxu0 0.0
  %792 = vmatprep.subr.mxu0 0.0
  %793 = vmatpush1.msra.mxu0 0.0
  %794 = vmatprep.mubr.f32.mxu0 0.0
  %795 = vmatmul.mubr.f32.gmra.mrb[0].mxu0 %v683
  %v796 = vpop.f32.mrb[0].mxu0
  %v797 = vadd.f32 0.0, %v796
  %v798 = vpop.f32.mrb[0].mxu0
  %799 = vmatprep.mubr.f32.mxu0 0.0
  %800 = vmatmul.mubr.f32.gmra.mrb[0].mxu0 %v686
  %v801 = vpop.f32.mrb[0].mxu0
  %v802 = vadd.f32 0.0, %v801
  %v803 = vpop.f32.mrb[0].mxu0
  %804 = vmatprep.mubr.f32.mxu0 0.0
  %805 = vmatmul.mubr.f32.gmra.mrb[0].mxu0 %v689
  %v806 = vpop.f32.mrb[0].mxu0
  %v807 = vadd.f32 0.0, %v806
  %v808 = vpop.f32.mrb[0].mxu0
  %809 = vmatprep.mubr.f32.mxu0 0.0
  %810 = vmatmul.mubr.f32.gmra.mrb[0].mxu0 %v692
  %v811 = vpop.f32.mrb[0].mxu0
  %v812 = vadd.f32 0.0, %v811
  %v813 = vpop.f32.mrb[0].mxu0
  %814 = vmatprep.mubr.f32.mxu0 0.0
  %815 = vmatmul.mubr.f32.gmra.mrb[0].mxu0 %v695
  %v816 = vpop.f32.mrb[0].mxu0
  %v817 = vadd.f32 0.0, %v816
  %v818 = vpop.f32.mrb[0].mxu0
  %819 = vmatprep.mubr.f32.mxu0 0.0
  %820 = vmatmul.mubr.f32.gmra.mrb[0].mxu0 %v698
  %v821 = vpop.f32.mrb[0].mxu0
  %v822 = vadd.f32 0.0, %v821
  %v823 = vpop.f32.mrb[0].mxu0
  %824 = vmatprep.mubr.f32.mxu0 0.0
  %825 = vmatmul.mubr.f32.gmra.mrb[0].mxu0 %v701
  %v826 = vpop.f32.mrb[0].mxu0
  %v827 = vadd.f32 0.0, %v826
  %v828 = vpop.f32.mrb[0].mxu0
  %829 = vmatprep.mubr.f32.mxu0 0.0
  %830 = vmatmul.mubr.f32.gmra.mrb[0].mxu0 %v704
  %v831 = vpop.f32.mrb[0].mxu0
  %v832 = vadd.f32 0.0, %v831
  %v833 = vpop.f32.mrb[0].mxu0
  %834 = vmatprep.mubr.f32.mxu0 0.0
  %835 = vmatmul.mubr.f32.gmra.mrb[0].mxu0 %v707
  %v836 = vpop.f32.mrb[0].mxu0
  %v837 = vadd.f32 0.0, %v836
  %v838 = vpop.f32.mrb[0].mxu0
  %839 = vmatprep.mubr.f32.mxu0 0.0
  %840 = vmatmul.mubr.f32.gmra.mrb[0].mxu0 %v710
  %v841 = vpop.f32.mrb[0].mxu0
  %v842 = vadd.f32 0.0, %v841
  %v843 = vpop.f32.mrb[0].mxu0
  %844 = vmatprep.mubr.f32.mxu0 0.0
  %845 = vmatmul.mubr.f32.gmra.mrb[0].mxu0 %v713
  %v846 = vpop.f32.mrb[0].mxu0
  %v847 = vadd.f32 0.0, %v846
  %v848 = vpop.f32.mrb[0].mxu0
  %849 = vmatprep.mubr.f32.mxu0 0.0
  %850 = vmatmul.mubr.f32.gmra.mrb[0].mxu0 %v716
  %v851 = vpop.f32.mrb[0].mxu0
  %v852 = vadd.f32 0.0, %v851
  %v853 = vpop.f32.mrb[0].mxu0
  %854 = vmatprep.mubr.f32.mxu0 0.0
  %855 = vmatmul.mubr.f32.gmra.mrb[0].mxu0 %v719
  %v856 = vpop.f32.mrb[0].mxu0
  %v857 = vadd.f32 0.0, %v856
  %v858 = vpop.f32.mrb[0].mxu0
  %859 = vmatprep.mubr.f32.mxu0 0.0
  %860 = vmatmul.mubr.f32.gmra.mrb[0].mxu0 %v722
  %v861 = vpop.f32.mrb[0].mxu0
  %v862 = vadd.f32 0.0, %v861
  %v863 = vpop.f32.mrb[0].mxu0
  %864 = vmatprep.mubr.f32.mxu0 0.0
  %865 = vmatmul.mubr.f32.gmra.mrb[0].mxu0 %v725
  %v866 = vpop.f32.mrb[0].mxu0
  %v867 = vadd.f32 0.0, %v866
  %v868 = vpop.f32.mrb[0].mxu0
  %869 = vmatprep.mubr.f32.mxu0 0.0
  %870 = vmatmul.mubr.f32.gmra.mrb[0].mxu0 %v728
  %v871 = vpop.f32.mrb[0].mxu0
  %v872 = vadd.f32 0.0, %v871
  %v873 = vpop.f32.mrb[0].mxu0
  %874 = vdwg.mxu0
  %v875 = vmax.f32 %v797, %v817
  %v876 = vmax.f32 %v802, %v822
  %v877 = vmax.f32 %v807, %v827
  %v878 = vmax.f32 %v812, %v832
  %v879 = vmax.f32 %v875, %v837
  %v880 = vmax.f32 %v876, %v842
  %v881 = vmax.f32 %v877, %v847
  %v882 = vmax.f32 %v878, %v852
  %v883 = vmax.f32 %v879, %v857
  %v884 = vmax.f32 %v880, %v862
  %v885 = vmax.f32 %v881, %v867
  %v886 = vmax.f32 %v882, %v872
  %v887 = vmax.f32 %v883, %v884
  %v888 = vmax.f32 %v885, %v886
  %v889 = vmax.f32 %v887, %v888
  %v890 = vrot.slane %v889, 4
  %v891 = vmax.f32 %v889, %v890
  %v892 = vrot.slane %v891, 2
  %v893 = vmax.f32 %v891, %v892
  %v894 = vrot.slane %v893, 1
  %v895 = vmax.f32 %v893, %v894
  %v896 = vsub.f32 %v797, %v895
  %v897 = vsub.f32 %v802, %v895
  %v898 = vsub.f32 %v807, %v895
  %v899 = vsub.f32 %v812, %v895
  %v900 = vsub.f32 %v817, %v895
  %v901 = vsub.f32 %v822, %v895
  %v902 = vsub.f32 %v827, %v895
  %v903 = vsub.f32 %v832, %v895
  %v904 = vsub.f32 %v837, %v895
  %v905 = vsub.f32 %v842, %v895
  %v906 = vsub.f32 %v847, %v895
  %v907 = vsub.f32 %v852, %v895
  %v908 = vsub.f32 %v857, %v895
  %v909 = vsub.f32 %v862, %v895
  %v910 = vsub.f32 %v867, %v895
  %v911 = vsub.f32 %v872, %v895
  %v912 = vmul.f32 %v896, 1.442695
  %v913 = vpow.pop %v912
  %v914 = vmul.f32 %v897, 1.442695
  %v915 = vpow.pop %v914
  %v916 = vmul.f32 %v898, 1.442695
  %v917 = vpow.pop %v916
  %v918 = vmul.f32 %v899, 1.442695
  %v919 = vpow.pop %v918
  %v920 = vmul.f32 %v900, 1.442695
  %v921 = vpow.pop %v920
  %v922 = vmul.f32 %v901, 1.442695
  %v923 = vpow.pop %v922
  %v924 = vmul.f32 %v902, 1.442695
  %v925 = vpow.pop %v924
  %v926 = vmul.f32 %v903, 1.442695
  %v927 = vpow.pop %v926
  %v928 = vmul.f32 %v904, 1.442695
  %v929 = vpow.pop %v928
  %v930 = vmul.f32 %v905, 1.442695
  %v931 = vpow.pop %v930
  %v932 = vmul.f32 %v906, 1.442695
  %v933 = vpow.pop %v932
  %v934 = vmul.f32 %v907, 1.442695
  %v935 = vpow.pop %v934
  %v936 = vmul.f32 %v908, 1.442695
  %v937 = vpow.pop %v936
  %v938 = vmul.f32 %v909, 1.442695
  %v939 = vpow.pop %v938
  %v940 = vmul.f32 %v910, 1.442695
  %v941 = vpow.pop %v940
  %v942 = vmul.f32 %v911, 1.442695
  %v943 = vpow.pop %v942
  %v944 = vadd.f32 %v913, %v915
  %v945 = vadd.f32 %v944, %v917
  %v946 = vadd.f32 %v945, %v919
  %v947 = vadd.f32 %v946, %v921
  %v948 = vadd.f32 %v947, %v923
  %v949 = vadd.f32 %v948, %v925
  %v950 = vadd.f32 %v949, %v927
  %v951 = vadd.f32 %v950, %v929
  %v952 = vadd.f32 %v951, %v931
  %v953 = vadd.f32 %v952, %v933
  %v954 = vadd.f32 %v953, %v935
  %v955 = vadd.f32 %v954, %v937
  %v956 = vadd.f32 %v955, %v939
  %v957 = vadd.f32 %v956, %v941
  %v958 = vadd.f32 %v957, %v943
  %v959 = vrot.slane %v958, 4
  %v960 = vadd.f32 %v958, %v959
  %v961 = vrot.slane %v960, 2
  %v962 = vadd.f32 %v960, %v961
  %v963 = vrot.slane %v962, 1
  %v964 = vadd.f32 %v962, %v963
  %965 = vmatprep.subr.mxu0 0.0
  %966 = vmatpush1.msra.mxu0 %v913
  %967 = vmatprep.subr.mxu0 0.0
  %968 = vmatpush1.msra.mxu0 %v915
  %969 = vmatprep.subr.mxu0 0.0
  %970 = vmatpush1.msra.mxu0 %v917
  %971 = vmatprep.subr.mxu0 0.0
  %972 = vmatpush1.msra.mxu0 %v919
  %973 = vmatprep.subr.mxu0 0.0
  %974 = vmatpush1.msra.mxu0 %v921
  %975 = vmatprep.subr.mxu0 0.0
  %976 = vmatpush1.msra.mxu0 %v923
  %977 = vmatprep.subr.mxu0 0.0
  %978 = vmatpush1.msra.mxu0 %v925
  %979 = vmatprep.subr.mxu0 0.0
  %980 = vmatpush1.msra.mxu0 %v927
  %981 = vmatprep.subr.mxu0 0.0
  %982 = vmatpush1.msra.mxu0 %v929
  %983 = vmatprep.subr.mxu0 0.0
  %984 = vmatpush1.msra.mxu0 %v931
  %985 = vmatprep.subr.mxu0 0.0
  %986 = vmatpush1.msra.mxu0 %v933
  %987 = vmatprep.subr.mxu0 0.0
  %988 = vmatpush1.msra.mxu0 %v935
  %989 = vmatprep.subr.mxu0 0.0
  %990 = vmatpush1.msra.mxu0 %v937
  %991 = vmatprep.subr.mxu0 0.0
  %992 = vmatpush1.msra.mxu0 %v939
  %993 = vmatprep.subr.mxu0 0.0
  %994 = vmatpush1.msra.mxu0 %v941
  %995 = vmatprep.subr.mxu0 0.0
  %996 = vmatpush1.msra.mxu0 %v943
  %997 = vmatprep.subr.mxu0 0.0
  %998 = vmatpush1.msra.mxu0 0.0
  %999 = vmatprep.subr.mxu0 0.0
  %1000 = vmatpush1.msra.mxu0 0.0
  %1001 = vmatprep.subr.mxu0 0.0
  %1002 = vmatpush1.msra.mxu0 0.0
  %1003 = vmatprep.subr.mxu0 0.0
  %1004 = vmatpush1.msra.mxu0 0.0
  %1005 = vmatprep.subr.mxu0 0.0
  %1006 = vmatpush1.msra.mxu0 0.0
  %1007 = vmatprep.subr.mxu0 0.0
  %1008 = vmatpush1.msra.mxu0 0.0
  %1009 = vmatprep.subr.mxu0 0.0
  %1010 = vmatpush1.msra.mxu0 0.0
  %1011 = vmatprep.subr.mxu0 0.0
  %1012 = vmatpush1.msra.mxu0 0.0
  %1013 = vmatprep.subr.mxu0 0.0
  %1014 = vmatpush1.msra.mxu0 0.0
  %1015 = vmatprep.subr.mxu0 0.0
  %1016 = vmatpush1.msra.mxu0 0.0
  %1017 = vmatprep.subr.mxu0 0.0
  %1018 = vmatpush1.msra.mxu0 0.0
  %1019 = vmatprep.subr.mxu0 0.0
  %1020 = vmatpush1.msra.mxu0 0.0
  %1021 = vmatprep.subr.mxu0 0.0
  %1022 = vmatpush1.msra.mxu0 0.0
  %1023 = vmatprep.subr.mxu0 0.0
  %1024 = vmatpush1.msra.mxu0 0.0
  %1025 = vmatprep.subr.mxu0 0.0
  %1026 = vmatpush1.msra.mxu0 0.0
  %1027 = vmatprep.subr.mxu0 0.0
  %1028 = vmatpush1.msra.mxu0 0.0
  %1029 = vmatprep.mubr.f32.mxu0 0.0
  %1030 = vmatmul.mubr.f32.gmra.mrb[0].mxu0 %v195
  %v1031 = vpop.f32.mrb[0].mxu0
  %v1032 = vadd.f32 0.0, %v1031
  %v1033 = vpop.f32.mrb[0].mxu0
  %1034 = vdwg.mxu0
  %v1035 = vrcp.pop %v964
  %v1036 = vmul.f32 1.0, %v1035
  %v1037 = vmul.f32 %v1032, %v1036
  %v1038 = vld [vmem:[%s0 + $0x10] sm:$0xff]
  %1040 = vset.pattern.permute.xlu0 0
  %1041 = vperm.xlu0 %1040, %v220
  %v1042 = vpop.permute.xlu0 %1041
  %v1044 = vadd.f32 %v1037, %v1042
  %v1045 = vmax.f32 %v1044, 0.0
  %v1046 = vadd.f32 %v1045, %v1038
  %1047 = vst [vmem:[%s4 + $0x10] sm:$0xff] %v1046
  %1049 = vset.pattern.permute.xlu0 0
  %1050 = vperm.xlu0 %1049, %v213
  %v1051 = vpop.permute.xlu0 %1050
  %v1053 = vadd.f32 %v153, %v1051
  %1055 = vset.pattern.permute.xlu0 0
  %1056 = vperm.xlu0 %1055, %v217
  %v1057 = vpop.permute.xlu0 %1056
  %v1059 = vadd.f32 %v177, %v1057
  %1060 = vxpose.xlu0.b32.start [1/16] %v1059, 128
  %1061 = vxpose.xlu0.b32.cont [2/16] %v1053, 128
  %1062 = vxpose.xlu0.b32.cont [3/16] 0.0, 128
  %1063 = vxpose.xlu0.b32.cont [4/16] 0.0, 128
  %1064 = vxpose.xlu0.b32.cont [5/16] 0.0, 128
  %1065 = vxpose.xlu0.b32.cont [6/16] 0.0, 128
  %1066 = vxpose.xlu0.b32.cont [7/16] 0.0, 128
  %1067 = vxpose.xlu0.b32.cont [8/16] 0.0, 128
  %1068 = vxpose.xlu0.b32.cont [9/16] 0.0, 128
  %1069 = vxpose.xlu0.b32.cont [10/16] 0.0, 128
  %1070 = vxpose.xlu0.b32.cont [11/16] 0.0, 128
  %1071 = vxpose.xlu0.b32.cont [12/16] 0.0, 128
  %1072 = vxpose.xlu0.b32.cont [13/16] 0.0, 128
  %1073 = vxpose.xlu0.b32.cont [14/16] 0.0, 128
  %1074 = vxpose.xlu0.b32.cont [15/16] 0.0, 128
  %1075 = vxpose.xlu0.b32.end [16/16] 0.0, 128
  %v1076 = vpop.trf.xlu0
  %v1077 = vpop.trf.xlu0
  %v1078 = vpop.trf.xlu0
  %v1079 = vpop.trf.xlu0
  %v1080 = vpop.trf.xlu0
  %v1081 = vpop.trf.xlu0
  %v1082 = vpop.trf.xlu0
  %v1083 = vpop.trf.xlu0
  %v1084 = vpop.trf.xlu0
  %v1085 = vpop.trf.xlu0
  %v1086 = vpop.trf.xlu0
  %v1087 = vpop.trf.xlu0
  %v1088 = vpop.trf.xlu0
  %v1089 = vpop.trf.xlu0
  %v1090 = vpop.trf.xlu0
  %v1091 = vpop.trf.xlu0
  %v1093 = vsel %vm271, %v1076, 0
  %v1096 = vsel %vm271, %v1077, 0
  %v1099 = vsel %vm271, %v1078, 0
  %v1102 = vsel %vm271, %v1079, 0
  %v1105 = vsel %vm271, %v1080, 0
  %v1108 = vsel %vm271, %v1081, 0
  %v1111 = vsel %vm271, %v1082, 0
  %v1114 = vsel %vm271, %v1083, 0
  %v1117 = vsel %vm271, %v1084, 0
  %v1120 = vsel %vm271, %v1085, 0
  %v1123 = vsel %vm271, %v1086, 0
  %v1126 = vsel %vm271, %v1087, 0
  %v1129 = vsel %vm271, %v1088, 0
  %v1132 = vsel %vm271, %v1089, 0
  %v1135 = vsel %vm271, %v1090, 0
  %v1138 = vsel %vm271, %v1091, 0
  %1140 = vmatprep.subr.mxu0 0.0
  %1141 = vmatpush1.msra.mxu0 %v1053
  %1142 = vmatprep.subr.mxu0 0.0
  %1143 = vmatpush1.msra.mxu0 %v225
  %1144 = vmatprep.subr.mxu0 0.0
  %1145 = vmatpush1.msra.mxu0 0.0
  %1146 = vmatprep.subr.mxu0 0.0
  %1147 = vmatpush1.msra.mxu0 0.0
  %1148 = vmatprep.subr.mxu0 0.0
  %1149 = vmatpush1.msra.mxu0 0.0
  %1150 = vmatprep.subr.mxu0 0.0
  %1151 = vmatpush1.msra.mxu0 0.0
  %1152 = vmatprep.subr.mxu0 0.0
  %1153 = vmatpush1.msra.mxu0 0.0
  %1154 = vmatprep.subr.mxu0 0.0
  %1155 = vmatpush1.msra.mxu0 0.0
  %1156 = vmatprep.subr.mxu0 0.0
  %1157 = vmatpush1.msra.mxu0 0.0
  %1158 = vmatprep.subr.mxu0 0.0
  %1159 = vmatpush1.msra.mxu0 0.0
  %1160 = vmatprep.subr.mxu0 0.0
  %1161 = vmatpush1.msra.mxu0 0.0
  %1162 = vmatprep.subr.mxu0 0.0
  %1163 = vmatpush1.msra.mxu0 0.0
  %1164 = vmatprep.subr.mxu0 0.0
  %1165 = vmatpush1.msra.mxu0 0.0
  %1166 = vmatprep.subr.mxu0 0.0
  %1167 = vmatpush1.msra.mxu0 0.0
  %1168 = vmatprep.subr.mxu0 0.0
  %1169 = vmatpush1.msra.mxu0 0.0
  %1170 = vmatprep.subr.mxu0 0.0
  %1171 = vmatpush1.msra.mxu0 0.0
  %1172 = vmatprep.subr.mxu0 0.0
  %1173 = vmatpush1.msra.mxu0 0.0
  %1174 = vmatprep.subr.mxu0 0.0
  %1175 = vmatpush1.msra.mxu0 0.0
  %1176 = vmatprep.subr.mxu0 0.0
  %1177 = vmatpush1.msra.mxu0 0.0
  %1178 = vmatprep.subr.mxu0 0.0
  %1179 = vmatpush1.msra.mxu0 0.0
  %1180 = vmatprep.subr.mxu0 0.0
  %1181 = vmatpush1.msra.mxu0 0.0
  %1182 = vmatprep.subr.mxu0 0.0
  %1183 = vmatpush1.msra.mxu0 0.0
  %1184 = vmatprep.subr.mxu0 0.0
  %1185 = vmatpush1.msra.mxu0 0.0
  %1186 = vmatprep.subr.mxu0 0.0
  %1187 = vmatpush1.msra.mxu0 0.0
  %1188 = vmatprep.subr.mxu0 0.0
  %1189 = vmatpush1.msra.mxu0 0.0
  %1190 = vmatprep.subr.mxu0 0.0
  %1191 = vmatpush1.msra.mxu0 0.0
  %1192 = vmatprep.subr.mxu0 0.0
  %1193 = vmatpush1.msra.mxu0 0.0
  %1194 = vmatprep.subr.mxu0 0.0
  %1195 = vmatpush1.msra.mxu0 0.0
  %1196 = vmatprep.subr.mxu0 0.0
  %1197 = vmatpush1.msra.mxu0 0.0
  %1198 = vmatprep.subr.mxu0 0.0
  %1199 = vmatpush1.msra.mxu0 0.0
  %1200 = vmatprep.subr.mxu0 0.0
  %1201 = vmatpush1.msra.mxu0 0.0
  %1202 = vmatprep.subr.mxu0 0.0
  %1203 = vmatpush1.msra.mxu0 0.0
  %1204 = vmatprep.mubr.f32.mxu0 0.0
  %1205 = vmatmul.mubr.f32.gmra.mrb[0].mxu0 %v1093
  %v1206 = vpop.f32.mrb[0].mxu0
  %v1207 = vadd.f32 0.0, %v1206
  %v1208 = vpop.f32.mrb[0].mxu0
  %1209 = vmatprep.mubr.f32.mxu0 0.0
  %1210 = vmatmul.mubr.f32.gmra.mrb[0].mxu0 %v1096
  %v1211 = vpop.f32.mrb[0].mxu0
  %v1212 = vadd.f32 0.0, %v1211
  %v1213 = vpop.f32.mrb[0].mxu0
  %1214 = vmatprep.mubr.f32.mxu0 0.0
  %1215 = vmatmul.mubr.f32.gmra.mrb[0].mxu0 %v1099
  %v1216 = vpop.f32.mrb[0].mxu0
  %v1217 = vadd.f32 0.0, %v1216
  %v1218 = vpop.f32.mrb[0].mxu0
  %1219 = vmatprep.mubr.f32.mxu0 0.0
  %1220 = vmatmul.mubr.f32.gmra.mrb[0].mxu0 %v1102
  %v1221 = vpop.f32.mrb[0].mxu0
  %v1222 = vadd.f32 0.0, %v1221
  %v1223 = vpop.f32.mrb[0].mxu0
  %1224 = vmatprep.mubr.f32.mxu0 0.0
  %1225 = vmatmul.mubr.f32.gmra.mrb[0].mxu0 %v1105
  %v1226 = vpop.f32.mrb[0].mxu0
  %v1227 = vadd.f32 0.0, %v1226
  %v1228 = vpop.f32.mrb[0].mxu0
  %1229 = vmatprep.mubr.f32.mxu0 0.0
  %1230 = vmatmul.mubr.f32.gmra.mrb[0].mxu0 %v1108
  %v1231 = vpop.f32.mrb[0].mxu0
  %v1232 = vadd.f32 0.0, %v1231
  %v1233 = vpop.f32.mrb[0].mxu0
  %1234 = vmatprep.mubr.f32.mxu0 0.0
  %1235 = vmatmul.mubr.f32.gmra.mrb[0].mxu0 %v1111
  %v1236 = vpop.f32.mrb[0].mxu0
  %v1237 = vadd.f32 0.0, %v1236
  %v1238 = vpop.f32.mrb[0].mxu0
  %1239 = vmatprep.mubr.f32.mxu0 0.0
  %1240 = vmatmul.mubr.f32.gmra.mrb[0].mxu0 %v1114
  %v1241 = vpop.f32.mrb[0].mxu0
  %v1242 = vadd.f32 0.0, %v1241
  %v1243 = vpop.f32.mrb[0].mxu0
  %1244 = vmatprep.mubr.f32.mxu0 0.0
  %1245 = vmatmul.mubr.f32.gmra.mrb[0].mxu0 %v1117
  %v1246 = vpop.f32.mrb[0].mxu0
  %v1247 = vadd.f32 0.0, %v1246
  %v1248 = vpop.f32.mrb[0].mxu0
  %1249 = vmatprep.mubr.f32.mxu0 0.0
  %1250 = vmatmul.mubr.f32.gmra.mrb[0].mxu0 %v1120
  %v1251 = vpop.f32.mrb[0].mxu0
  %v1252 = vadd.f32 0.0, %v1251
  %v1253 = vpop.f32.mrb[0].mxu0
  %1254 = vmatprep.mubr.f32.mxu0 0.0
  %1255 = vmatmul.mubr.f32.gmra.mrb[0].mxu0 %v1123
  %v1256 = vpop.f32.mrb[0].mxu0
  %v1257 = vadd.f32 0.0, %v1256
  %v1258 = vpop.f32.mrb[0].mxu0
  %1259 = vmatprep.mubr.f32.mxu0 0.0
  %1260 = vmatmul.mubr.f32.gmra.mrb[0].mxu0 %v1126
  %v1261 = vpop.f32.mrb[0].mxu0
  %v1262 = vadd.f32 0.0, %v1261
  %v1263 = vpop.f32.mrb[0].mxu0
  %1264 = vmatprep.mubr.f32.mxu0 0.0
  %1265 = vmatmul.mubr.f32.gmra.mrb[0].mxu0 %v1129
  %v1266 = vpop.f32.mrb[0].mxu0
  %v1267 = vadd.f32 0.0, %v1266
  %v1268 = vpop.f32.mrb[0].mxu0
  %1269 = vmatprep.mubr.f32.mxu0 0.0
  %1270 = vmatmul.mubr.f32.gmra.mrb[0].mxu0 %v1132
  %v1271 = vpop.f32.mrb[0].mxu0
  %v1272 = vadd.f32 0.0, %v1271
  %v1273 = vpop.f32.mrb[0].mxu0
  %1274 = vmatprep.mubr.f32.mxu0 0.0
  %1275 = vmatmul.mubr.f32.gmra.mrb[0].mxu0 %v1135
  %v1276 = vpop.f32.mrb[0].mxu0
  %v1277 = vadd.f32 0.0, %v1276
  %v1278 = vpop.f32.mrb[0].mxu0
  %1279 = vmatprep.mubr.f32.mxu0 0.0
  %1280 = vmatmul.mubr.f32.gmra.mrb[0].mxu0 %v1138
  %v1281 = vpop.f32.mrb[0].mxu0
  %v1282 = vadd.f32 0.0, %v1281
  %v1283 = vpop.f32.mrb[0].mxu0
  %1284 = vdwg.mxu0
  %v1285 = vmax.f32 %v1207, %v1227
  %v1286 = vmax.f32 %v1212, %v1232
  %v1287 = vmax.f32 %v1217, %v1237
  %v1288 = vmax.f32 %v1222, %v1242
  %v1289 = vmax.f32 %v1285, %v1247
  %v1290 = vmax.f32 %v1286, %v1252
  %v1291 = vmax.f32 %v1287, %v1257
  %v1292 = vmax.f32 %v1288, %v1262
  %v1293 = vmax.f32 %v1289, %v1267
  %v1294 = vmax.f32 %v1290, %v1272
  %v1295 = vmax.f32 %v1291, %v1277
  %v1296 = vmax.f32 %v1292, %v1282
  %v1297 = vmax.f32 %v1293, %v1294
  %v1298 = vmax.f32 %v1295, %v1296
  %v1299 = vmax.f32 %v1297, %v1298
  %v1300 = vrot.slane %v1299, 4
  %v1301 = vmax.f32 %v1299, %v1300
  %v1302 = vrot.slane %v1301, 2
  %v1303 = vmax.f32 %v1301, %v1302
  %v1304 = vrot.slane %v1303, 1
  %v1305 = vmax.f32 %v1303, %v1304
  %v1306 = vsub.f32 %v1207, %v1305
  %v1307 = vsub.f32 %v1212, %v1305
  %v1308 = vsub.f32 %v1217, %v1305
  %v1309 = vsub.f32 %v1222, %v1305
  %v1310 = vsub.f32 %v1227, %v1305
  %v1311 = vsub.f32 %v1232, %v1305
  %v1312 = vsub.f32 %v1237, %v1305
  %v1313 = vsub.f32 %v1242, %v1305
  %v1314 = vsub.f32 %v1247, %v1305
  %v1315 = vsub.f32 %v1252, %v1305
  %v1316 = vsub.f32 %v1257, %v1305
  %v1317 = vsub.f32 %v1262, %v1305
  %v1318 = vsub.f32 %v1267, %v1305
  %v1319 = vsub.f32 %v1272, %v1305
  %v1320 = vsub.f32 %v1277, %v1305
  %v1321 = vsub.f32 %v1282, %v1305
  %v1322 = vmul.f32 %v1306, 1.442695
  %v1323 = vpow.pop %v1322
  %v1324 = vmul.f32 %v1307, 1.442695
  %v1325 = vpow.pop %v1324
  %v1326 = vmul.f32 %v1308, 1.442695
  %v1327 = vpow.pop %v1326
  %v1328 = vmul.f32 %v1309, 1.442695
  %v1329 = vpow.pop %v1328
  %v1330 = vmul.f32 %v1310, 1.442695
  %v1331 = vpow.pop %v1330
  %v1332 = vmul.f32 %v1311, 1.442695
  %v1333 = vpow.pop %v1332
  %v1334 = vmul.f32 %v1312, 1.442695
  %v1335 = vpow.pop %v1334
  %v1336 = vmul.f32 %v1313, 1.442695
  %v1337 = vpow.pop %v1336
  %v1338 = vmul.f32 %v1314, 1.442695
  %v1339 = vpow.pop %v1338
  %v1340 = vmul.f32 %v1315, 1.442695
  %v1341 = vpow.pop %v1340
  %v1342 = vmul.f32 %v1316, 1.442695
  %v1343 = vpow.pop %v1342
  %v1344 = vmul.f32 %v1317, 1.442695
  %v1345 = vpow.pop %v1344
  %v1346 = vmul.f32 %v1318, 1.442695
  %v1347 = vpow.pop %v1346
  %v1348 = vmul.f32 %v1319, 1.442695
  %v1349 = vpow.pop %v1348
  %v1350 = vmul.f32 %v1320, 1.442695
  %v1351 = vpow.pop %v1350
  %v1352 = vmul.f32 %v1321, 1.442695
  %v1353 = vpow.pop %v1352
  %v1354 = vadd.f32 %v1323, %v1325
  %v1355 = vadd.f32 %v1354, %v1327
  %v1356 = vadd.f32 %v1355, %v1329
  %v1357 = vadd.f32 %v1356, %v1331
  %v1358 = vadd.f32 %v1357, %v1333
  %v1359 = vadd.f32 %v1358, %v1335
  %v1360 = vadd.f32 %v1359, %v1337
  %v1361 = vadd.f32 %v1360, %v1339
  %v1362 = vadd.f32 %v1361, %v1341
  %v1363 = vadd.f32 %v1362, %v1343
  %v1364 = vadd.f32 %v1363, %v1345
  %v1365 = vadd.f32 %v1364, %v1347
  %v1366 = vadd.f32 %v1365, %v1349
  %v1367 = vadd.f32 %v1366, %v1351
  %v1368 = vadd.f32 %v1367, %v1353
  %v1369 = vrot.slane %v1368, 4
  %v1370 = vadd.f32 %v1368, %v1369
  %v1371 = vrot.slane %v1370, 2
  %v1372 = vadd.f32 %v1370, %v1371
  %v1373 = vrot.slane %v1372, 1
  %v1374 = vadd.f32 %v1372, %v1373
  %1375 = vmatprep.subr.mxu0 0.0
  %1376 = vmatpush1.msra.mxu0 %v1323
  %1377 = vmatprep.subr.mxu0 0.0
  %1378 = vmatpush1.msra.mxu0 %v1325
  %1379 = vmatprep.subr.mxu0 0.0
  %1380 = vmatpush1.msra.mxu0 %v1327
  %1381 = vmatprep.subr.mxu0 0.0
  %1382 = vmatpush1.msra.mxu0 %v1329
  %1383 = vmatprep.subr.mxu0 0.0
  %1384 = vmatpush1.msra.mxu0 %v1331
  %1385 = vmatprep.subr.mxu0 0.0
  %1386 = vmatpush1.msra.mxu0 %v1333
  %1387 = vmatprep.subr.mxu0 0.0
  %1388 = vmatpush1.msra.mxu0 %v1335
  %1389 = vmatprep.subr.mxu0 0.0
  %1390 = vmatpush1.msra.mxu0 %v1337
  %1391 = vmatprep.subr.mxu0 0.0
  %1392 = vmatpush1.msra.mxu0 %v1339
  %1393 = vmatprep.subr.mxu0 0.0
  %1394 = vmatpush1.msra.mxu0 %v1341
  %1395 = vmatprep.subr.mxu0 0.0
  %1396 = vmatpush1.msra.mxu0 %v1343
  %1397 = vmatprep.subr.mxu0 0.0
  %1398 = vmatpush1.msra.mxu0 %v1345
  %1399 = vmatprep.subr.mxu0 0.0
  %1400 = vmatpush1.msra.mxu0 %v1347
  %1401 = vmatprep.subr.mxu0 0.0
  %1402 = vmatpush1.msra.mxu0 %v1349
  %1403 = vmatprep.subr.mxu0 0.0
  %1404 = vmatpush1.msra.mxu0 %v1351
  %1405 = vmatprep.subr.mxu0 0.0
  %1406 = vmatpush1.msra.mxu0 %v1353
  %1407 = vmatprep.subr.mxu0 0.0
  %1408 = vmatpush1.msra.mxu0 0.0
  %1409 = vmatprep.subr.mxu0 0.0
  %1410 = vmatpush1.msra.mxu0 0.0
  %1411 = vmatprep.subr.mxu0 0.0
  %1412 = vmatpush1.msra.mxu0 0.0
  %1413 = vmatprep.subr.mxu0 0.0
  %1414 = vmatpush1.msra.mxu0 0.0
  %1415 = vmatprep.subr.mxu0 0.0
  %1416 = vmatpush1.msra.mxu0 0.0
  %1417 = vmatprep.subr.mxu0 0.0
  %1418 = vmatpush1.msra.mxu0 0.0
  %1419 = vmatprep.subr.mxu0 0.0
  %1420 = vmatpush1.msra.mxu0 0.0
  %1421 = vmatprep.subr.mxu0 0.0
  %1422 = vmatpush1.msra.mxu0 0.0
  %1423 = vmatprep.subr.mxu0 0.0
  %1424 = vmatpush1.msra.mxu0 0.0
  %1425 = vmatprep.subr.mxu0 0.0
  %1426 = vmatpush1.msra.mxu0 0.0
  %1427 = vmatprep.subr.mxu0 0.0
  %1428 = vmatpush1.msra.mxu0 0.0
  %1429 = vmatprep.subr.mxu0 0.0
  %1430 = vmatpush1.msra.mxu0 0.0
  %1431 = vmatprep.subr.mxu0 0.0
  %1432 = vmatpush1.msra.mxu0 0.0
  %1433 = vmatprep.subr.mxu0 0.0
  %1434 = vmatpush1.msra.mxu0 0.0
  %1435 = vmatprep.subr.mxu0 0.0
  %1436 = vmatpush1.msra.mxu0 0.0
  %1437 = vmatprep.subr.mxu0 0.0
  %1438 = vmatpush1.msra.mxu0 0.0
  %1439 = vmatprep.mubr.f32.mxu0 0.0
  %1440 = vmatmul.mubr.f32.gmra.mrb[0].mxu0 %v201
  %v1441 = vpop.f32.mrb[0].mxu0
  %v1442 = vadd.f32 0.0, %v1441
  %v1443 = vpop.f32.mrb[0].mxu0
  %1444 = vdwg.mxu0
  %v1445 = vrcp.pop %v1374
  %v1446 = vmul.f32 1.0, %v1445
  %v1447 = vmul.f32 %v1442, %v1446
  %v1448 = vld [vmem:[%s0 + $0x20] sm:$0xff]
  %1450 = vset.pattern.permute.xlu0 0
  %1451 = vperm.xlu0 %1450, %v221
  %v1452 = vpop.permute.xlu0 %1451
  %v1454 = vadd.f32 %v1447, %v1452
  %v1455 = vmax.f32 %v1454, 0.0
  %v1456 = vadd.f32 %v1455, %v1448
  %1457 = vst [vmem:[%s4 + $0x20] sm:$0xff] %v1456
  %1459 = vset.pattern.permute.xlu0 0
  %1460 = vperm.xlu0 %1459, %v214
  %v1461 = vpop.permute.xlu0 %1460
  %v1463 = vadd.f32 %v159, %v1461
  %1465 = vset.pattern.permute.xlu0 0
  %1466 = vperm.xlu0 %1465, %v218
  %v1467 = vpop.permute.xlu0 %1466
  %v1469 = vadd.f32 %v183, %v1467
  %1470 = vxpose.xlu0.b32.start [1/16] %v1469, 128
  %1471 = vxpose.xlu0.b32.cont [2/16] %v1463, 128
  %1472 = vxpose.xlu0.b32.cont [3/16] 0.0, 128
  %1473 = vxpose.xlu0.b32.cont [4/16] 0.0, 128
  %1474 = vxpose.xlu0.b32.cont [5/16] 0.0, 128
  %1475 = vxpose.xlu0.b32.cont [6/16] 0.0, 128
  %1476 = vxpose.xlu0.b32.cont [7/16] 0.0, 128
  %1477 = vxpose.xlu0.b32.cont [8/16] 0.0, 128
  %1478 = vxpose.xlu0.b32.cont [9/16] 0.0, 128
  %1479 = vxpose.xlu0.b32.cont [10/16] 0.0, 128
  %1480 = vxpose.xlu0.b32.cont [11/16] 0.0, 128
  %1481 = vxpose.xlu0.b32.cont [12/16] 0.0, 128
  %1482 = vxpose.xlu0.b32.cont [13/16] 0.0, 128
  %1483 = vxpose.xlu0.b32.cont [14/16] 0.0, 128
  %1484 = vxpose.xlu0.b32.cont [15/16] 0.0, 128
  %1485 = vxpose.xlu0.b32.end [16/16] 0.0, 128
  %v1486 = vpop.trf.xlu0
  %v1487 = vpop.trf.xlu0
  %v1488 = vpop.trf.xlu0
  %v1489 = vpop.trf.xlu0
  %v1490 = vpop.trf.xlu0
  %v1491 = vpop.trf.xlu0
  %v1492 = vpop.trf.xlu0
  %v1493 = vpop.trf.xlu0
  %v1494 = vpop.trf.xlu0
  %v1495 = vpop.trf.xlu0
  %v1496 = vpop.trf.xlu0
  %v1497 = vpop.trf.xlu0
  %v1498 = vpop.trf.xlu0
  %v1499 = vpop.trf.xlu0
  %v1500 = vpop.trf.xlu0
  %v1501 = vpop.trf.xlu0
  %v1503 = vsel %vm271, %v1486, 0
  %v1506 = vsel %vm271, %v1487, 0
  %v1509 = vsel %vm271, %v1488, 0
  %v1512 = vsel %vm271, %v1489, 0
  %v1515 = vsel %vm271, %v1490, 0
  %v1518 = vsel %vm271, %v1491, 0
  %v1521 = vsel %vm271, %v1492, 0
  %v1524 = vsel %vm271, %v1493, 0
  %v1527 = vsel %vm271, %v1494, 0
  %v1530 = vsel %vm271, %v1495, 0
  %v1533 = vsel %vm271, %v1496, 0
  %v1536 = vsel %vm271, %v1497, 0
  %v1539 = vsel %vm271, %v1498, 0
  %v1542 = vsel %vm271, %v1499, 0
  %v1545 = vsel %vm271, %v1500, 0
  %v1548 = vsel %vm271, %v1501, 0
  %1550 = vmatprep.subr.mxu0 0.0
  %1551 = vmatpush1.msra.mxu0 %v1463
  %1552 = vmatprep.subr.mxu0 0.0
  %1553 = vmatpush1.msra.mxu0 %v226
  %1554 = vmatprep.subr.mxu0 0.0
  %1555 = vmatpush1.msra.mxu0 0.0
  %1556 = vmatprep.subr.mxu0 0.0
  %1557 = vmatpush1.msra.mxu0 0.0
  %1558 = vmatprep.subr.mxu0 0.0
  %1559 = vmatpush1.msra.mxu0 0.0
  %1560 = vmatprep.subr.mxu0 0.0
  %1561 = vmatpush1.msra.mxu0 0.0
  %1562 = vmatprep.subr.mxu0 0.0
  %1563 = vmatpush1.msra.mxu0 0.0
  %1564 = vmatprep.subr.mxu0 0.0
  %1565 = vmatpush1.msra.mxu0 0.0
  %1566 = vmatprep.subr.mxu0 0.0
  %1567 = vmatpush1.msra.mxu0 0.0
  %1568 = vmatprep.subr.mxu0 0.0
  %1569 = vmatpush1.msra.mxu0 0.0
  %1570 = vmatprep.subr.mxu0 0.0
  %1571 = vmatpush1.msra.mxu0 0.0
  %1572 = vmatprep.subr.mxu0 0.0
  %1573 = vmatpush1.msra.mxu0 0.0
  %1574 = vmatprep.subr.mxu0 0.0
  %1575 = vmatpush1.msra.mxu0 0.0
  %1576 = vmatprep.subr.mxu0 0.0
  %1577 = vmatpush1.msra.mxu0 0.0
  %1578 = vmatprep.subr.mxu0 0.0
  %1579 = vmatpush1.msra.mxu0 0.0
  %1580 = vmatprep.subr.mxu0 0.0
  %1581 = vmatpush1.msra.mxu0 0.0
  %1582 = vmatprep.subr.mxu0 0.0
  %1583 = vmatpush1.msra.mxu0 0.0
  %1584 = vmatprep.subr.mxu0 0.0
  %1585 = vmatpush1.msra.mxu0 0.0
  %1586 = vmatprep.subr.mxu0 0.0
  %1587 = vmatpush1.msra.mxu0 0.0
  %1588 = vmatprep.subr.mxu0 0.0
  %1589 = vmatpush1.msra.mxu0 0.0
  %1590 = vmatprep.subr.mxu0 0.0
  %1591 = vmatpush1.msra.mxu0 0.0
  %1592 = vmatprep.subr.mxu0 0.0
  %1593 = vmatpush1.msra.mxu0 0.0
  %1594 = vmatprep.subr.mxu0 0.0
  %1595 = vmatpush1.msra.mxu0 0.0
  %1596 = vmatprep.subr.mxu0 0.0
  %1597 = vmatpush1.msra.mxu0 0.0
  %1598 = vmatprep.subr.mxu0 0.0
  %1599 = vmatpush1.msra.mxu0 0.0
  %1600 = vmatprep.subr.mxu0 0.0
  %1601 = vmatpush1.msra.mxu0 0.0
  %1602 = vmatprep.subr.mxu0 0.0
  %1603 = vmatpush1.msra.mxu0 0.0
  %1604 = vmatprep.subr.mxu0 0.0
  %1605 = vmatpush1.msra.mxu0 0.0
  %1606 = vmatprep.subr.mxu0 0.0
  %1607 = vmatpush1.msra.mxu0 0.0
  %1608 = vmatprep.subr.mxu0 0.0
  %1609 = vmatpush1.msra.mxu0 0.0
  %1610 = vmatprep.subr.mxu0 0.0
  %1611 = vmatpush1.msra.mxu0 0.0
  %1612 = vmatprep.subr.mxu0 0.0
  %1613 = vmatpush1.msra.mxu0 0.0
  %1614 = vmatprep.mubr.f32.mxu0 0.0
  %1615 = vmatmul.mubr.f32.gmra.mrb[0].mxu0 %v1503
  %v1616 = vpop.f32.mrb[0].mxu0
  %v1617 = vadd.f32 0.0, %v1616
  %v1618 = vpop.f32.mrb[0].mxu0
  %1619 = vmatprep.mubr.f32.mxu0 0.0
  %1620 = vmatmul.mubr.f32.gmra.mrb[0].mxu0 %v1506
  %v1621 = vpop.f32.mrb[0].mxu0
  %v1622 = vadd.f32 0.0, %v1621
  %v1623 = vpop.f32.mrb[0].mxu0
  %1624 = vmatprep.mubr.f32.mxu0 0.0
  %1625 = vmatmul.mubr.f32.gmra.mrb[0].mxu0 %v1509
  %v1626 = vpop.f32.mrb[0].mxu0
  %v1627 = vadd.f32 0.0, %v1626
  %v1628 = vpop.f32.mrb[0].mxu0
  %1629 = vmatprep.mubr.f32.mxu0 0.0
  %1630 = vmatmul.mubr.f32.gmra.mrb[0].mxu0 %v1512
  %v1631 = vpop.f32.mrb[0].mxu0
  %v1632 = vadd.f32 0.0, %v1631
  %v1633 = vpop.f32.mrb[0].mxu0
  %1634 = vmatprep.mubr.f32.mxu0 0.0
  %1635 = vmatmul.mubr.f32.gmra.mrb[0].mxu0 %v1515
  %v1636 = vpop.f32.mrb[0].mxu0
  %v1637 = vadd.f32 0.0, %v1636
  %v1638 = vpop.f32.mrb[0].mxu0
  %1639 = vmatprep.mubr.f32.mxu0 0.0
  %1640 = vmatmul.mubr.f32.gmra.mrb[0].mxu0 %v1518
  %v1641 = vpop.f32.mrb[0].mxu0
  %v1642 = vadd.f32 0.0, %v1641
  %v1643 = vpop.f32.mrb[0].mxu0
  %1644 = vmatprep.mubr.f32.mxu0 0.0
  %1645 = vmatmul.mubr.f32.gmra.mrb[0].mxu0 %v1521
  %v1646 = vpop.f32.mrb[0].mxu0
  %v1647 = vadd.f32 0.0, %v1646
  %v1648 = vpop.f32.mrb[0].mxu0
  %1649 = vmatprep.mubr.f32.mxu0 0.0
  %1650 = vmatmul.mubr.f32.gmra.mrb[0].mxu0 %v1524
  %v1651 = vpop.f32.mrb[0].mxu0
  %v1652 = vadd.f32 0.0, %v1651
  %v1653 = vpop.f32.mrb[0].mxu0
  %1654 = vmatprep.mubr.f32.mxu0 0.0
  %1655 = vmatmul.mubr.f32.gmra.mrb[0].mxu0 %v1527
  %v1656 = vpop.f32.mrb[0].mxu0
  %v1657 = vadd.f32 0.0, %v1656
  %v1658 = vpop.f32.mrb[0].mxu0
  %1659 = vmatprep.mubr.f32.mxu0 0.0
  %1660 = vmatmul.mubr.f32.gmra.mrb[0].mxu0 %v1530
  %v1661 = vpop.f32.mrb[0].mxu0
  %v1662 = vadd.f32 0.0, %v1661
  %v1663 = vpop.f32.mrb[0].mxu0
  %1664 = vmatprep.mubr.f32.mxu0 0.0
  %1665 = vmatmul.mubr.f32.gmra.mrb[0].mxu0 %v1533
  %v1666 = vpop.f32.mrb[0].mxu0
  %v1667 = vadd.f32 0.0, %v1666
  %v1668 = vpop.f32.mrb[0].mxu0
  %1669 = vmatprep.mubr.f32.mxu0 0.0
  %1670 = vmatmul.mubr.f32.gmra.mrb[0].mxu0 %v1536
  %v1671 = vpop.f32.mrb[0].mxu0
  %v1672 = vadd.f32 0.0, %v1671
  %v1673 = vpop.f32.mrb[0].mxu0
  %1674 = vmatprep.mubr.f32.mxu0 0.0
  %1675 = vmatmul.mubr.f32.gmra.mrb[0].mxu0 %v1539
  %v1676 = vpop.f32.mrb[0].mxu0
  %v1677 = vadd.f32 0.0, %v1676
  %v1678 = vpop.f32.mrb[0].mxu0
  %1679 = vmatprep.mubr.f32.mxu0 0.0
  %1680 = vmatmul.mubr.f32.gmra.mrb[0].mxu0 %v1542
  %v1681 = vpop.f32.mrb[0].mxu0
  %v1682 = vadd.f32 0.0, %v1681
  %v1683 = vpop.f32.mrb[0].mxu0
  %1684 = vmatprep.mubr.f32.mxu0 0.0
  %1685 = vmatmul.mubr.f32.gmra.mrb[0].mxu0 %v1545
  %v1686 = vpop.f32.mrb[0].mxu0
  %v1687 = vadd.f32 0.0, %v1686
  %v1688 = vpop.f32.mrb[0].mxu0
  %1689 = vmatprep.mubr.f32.mxu0 0.0
  %1690 = vmatmul.mubr.f32.gmra.mrb[0].mxu0 %v1548
  %v1691 = vpop.f32.mrb[0].mxu0
  %v1692 = vadd.f32 0.0, %v1691
  %v1693 = vpop.f32.mrb[0].mxu0
  %1694 = vdwg.mxu0
  %v1695 = vmax.f32 %v1617, %v1637
  %v1696 = vmax.f32 %v1622, %v1642
  %v1697 = vmax.f32 %v1627, %v1647
  %v1698 = vmax.f32 %v1632, %v1652
  %v1699 = vmax.f32 %v1695, %v1657
  %v1700 = vmax.f32 %v1696, %v1662
  %v1701 = vmax.f32 %v1697, %v1667
  %v1702 = vmax.f32 %v1698, %v1672
  %v1703 = vmax.f32 %v1699, %v1677
  %v1704 = vmax.f32 %v1700, %v1682
  %v1705 = vmax.f32 %v1701, %v1687
  %v1706 = vmax.f32 %v1702, %v1692
  %v1707 = vmax.f32 %v1703, %v1704
  %v1708 = vmax.f32 %v1705, %v1706
  %v1709 = vmax.f32 %v1707, %v1708
  %v1710 = vrot.slane %v1709, 4
  %v1711 = vmax.f32 %v1709, %v1710
  %v1712 = vrot.slane %v1711, 2
  %v1713 = vmax.f32 %v1711, %v1712
  %v1714 = vrot.slane %v1713, 1
  %v1715 = vmax.f32 %v1713, %v1714
  %v1716 = vsub.f32 %v1617, %v1715
  %v1717 = vsub.f32 %v1622, %v1715
  %v1718 = vsub.f32 %v1627, %v1715
  %v1719 = vsub.f32 %v1632, %v1715
  %v1720 = vsub.f32 %v1637, %v1715
  %v1721 = vsub.f32 %v1642, %v1715
  %v1722 = vsub.f32 %v1647, %v1715
  %v1723 = vsub.f32 %v1652, %v1715
  %v1724 = vsub.f32 %v1657, %v1715
  %v1725 = vsub.f32 %v1662, %v1715
  %v1726 = vsub.f32 %v1667, %v1715
  %v1727 = vsub.f32 %v1672, %v1715
  %v1728 = vsub.f32 %v1677, %v1715
  %v1729 = vsub.f32 %v1682, %v1715
  %v1730 = vsub.f32 %v1687, %v1715
  %v1731 = vsub.f32 %v1692, %v1715
  %v1732 = vmul.f32 %v1716, 1.442695
  %v1733 = vpow.pop %v1732
  %v1734 = vmul.f32 %v1717, 1.442695
  %v1735 = vpow.pop %v1734
  %v1736 = vmul.f32 %v1718, 1.442695
  %v1737 = vpow.pop %v1736
  %v1738 = vmul.f32 %v1719, 1.442695
  %v1739 = vpow.pop %v1738
  %v1740 = vmul.f32 %v1720, 1.442695
  %v1741 = vpow.pop %v1740
  %v1742 = vmul.f32 %v1721, 1.442695
  %v1743 = vpow.pop %v1742
  %v1744 = vmul.f32 %v1722, 1.442695
  %v1745 = vpow.pop %v1744
  %v1746 = vmul.f32 %v1723, 1.442695
  %v1747 = vpow.pop %v1746
  %v1748 = vmul.f32 %v1724, 1.442695
  %v1749 = vpow.pop %v1748
  %v1750 = vmul.f32 %v1725, 1.442695
  %v1751 = vpow.pop %v1750
  %v1752 = vmul.f32 %v1726, 1.442695
  %v1753 = vpow.pop %v1752
  %v1754 = vmul.f32 %v1727, 1.442695
  %v1755 = vpow.pop %v1754
  %v1756 = vmul.f32 %v1728, 1.442695
  %v1757 = vpow.pop %v1756
  %v1758 = vmul.f32 %v1729, 1.442695
  %v1759 = vpow.pop %v1758
  %v1760 = vmul.f32 %v1730, 1.442695
  %v1761 = vpow.pop %v1760
  %v1762 = vmul.f32 %v1731, 1.442695
  %v1763 = vpow.pop %v1762
  %v1764 = vadd.f32 %v1733, %v1735
  %v1765 = vadd.f32 %v1764, %v1737
  %v1766 = vadd.f32 %v1765, %v1739
  %v1767 = vadd.f32 %v1766, %v1741
  %v1768 = vadd.f32 %v1767, %v1743
  %v1769 = vadd.f32 %v1768, %v1745
  %v1770 = vadd.f32 %v1769, %v1747
  %v1771 = vadd.f32 %v1770, %v1749
  %v1772 = vadd.f32 %v1771, %v1751
  %v1773 = vadd.f32 %v1772, %v1753
  %v1774 = vadd.f32 %v1773, %v1755
  %v1775 = vadd.f32 %v1774, %v1757
  %v1776 = vadd.f32 %v1775, %v1759
  %v1777 = vadd.f32 %v1776, %v1761
  %v1778 = vadd.f32 %v1777, %v1763
  %v1779 = vrot.slane %v1778, 4
  %v1780 = vadd.f32 %v1778, %v1779
  %v1781 = vrot.slane %v1780, 2
  %v1782 = vadd.f32 %v1780, %v1781
  %v1783 = vrot.slane %v1782, 1
  %v1784 = vadd.f32 %v1782, %v1783
  %1785 = vmatprep.subr.mxu0 0.0
  %1786 = vmatpush1.msra.mxu0 %v1733
  %1787 = vmatprep.subr.mxu0 0.0
  %1788 = vmatpush1.msra.mxu0 %v1735
  %1789 = vmatprep.subr.mxu0 0.0
  %1790 = vmatpush1.msra.mxu0 %v1737
  %1791 = vmatprep.subr.mxu0 0.0
  %1792 = vmatpush1.msra.mxu0 %v1739
  %1793 = vmatprep.subr.mxu0 0.0
  %1794 = vmatpush1.msra.mxu0 %v1741
  %1795 = vmatprep.subr.mxu0 0.0
  %1796 = vmatpush1.msra.mxu0 %v1743
  %1797 = vmatprep.subr.mxu0 0.0
  %1798 = vmatpush1.msra.mxu0 %v1745
  %1799 = vmatprep.subr.mxu0 0.0
  %1800 = vmatpush1.msra.mxu0 %v1747
  %1801 = vmatprep.subr.mxu0 0.0
  %1802 = vmatpush1.msra.mxu0 %v1749
  %1803 = vmatprep.subr.mxu0 0.0
  %1804 = vmatpush1.msra.mxu0 %v1751
  %1805 = vmatprep.subr.mxu0 0.0
  %1806 = vmatpush1.msra.mxu0 %v1753
  %1807 = vmatprep.subr.mxu0 0.0
  %1808 = vmatpush1.msra.mxu0 %v1755
  %1809 = vmatprep.subr.mxu0 0.0
  %1810 = vmatpush1.msra.mxu0 %v1757
  %1811 = vmatprep.subr.mxu0 0.0
  %1812 = vmatpush1.msra.mxu0 %v1759
  %1813 = vmatprep.subr.mxu0 0.0
  %1814 = vmatpush1.msra.mxu0 %v1761
  %1815 = vmatprep.subr.mxu0 0.0
  %1816 = vmatpush1.msra.mxu0 %v1763
  %1817 = vmatprep.subr.mxu0 0.0
  %1818 = vmatpush1.msra.mxu0 0.0
  %1819 = vmatprep.subr.mxu0 0.0
  %1820 = vmatpush1.msra.mxu0 0.0
  %1821 = vmatprep.subr.mxu0 0.0
  %1822 = vmatpush1.msra.mxu0 0.0
  %1823 = vmatprep.subr.mxu0 0.0
  %1824 = vmatpush1.msra.mxu0 0.0
  %1825 = vmatprep.subr.mxu0 0.0
  %1826 = vmatpush1.msra.mxu0 0.0
  %1827 = vmatprep.subr.mxu0 0.0
  %1828 = vmatpush1.msra.mxu0 0.0
  %1829 = vmatprep.subr.mxu0 0.0
  %1830 = vmatpush1.msra.mxu0 0.0
  %1831 = vmatprep.subr.mxu0 0.0
  %1832 = vmatpush1.msra.mxu0 0.0
  %1833 = vmatprep.subr.mxu0 0.0
  %1834 = vmatpush1.msra.mxu0 0.0
  %1835 = vmatprep.subr.mxu0 0.0
  %1836 = vmatpush1.msra.mxu0 0.0
  %1837 = vmatprep.subr.mxu0 0.0
  %1838 = vmatpush1.msra.mxu0 0.0
  %1839 = vmatprep.subr.mxu0 0.0
  %1840 = vmatpush1.msra.mxu0 0.0
  %1841 = vmatprep.subr.mxu0 0.0
  %1842 = vmatpush1.msra.mxu0 0.0
  %1843 = vmatprep.subr.mxu0 0.0
  %1844 = vmatpush1.msra.mxu0 0.0
  %1845 = vmatprep.subr.mxu0 0.0
  %1846 = vmatpush1.msra.mxu0 0.0
  %1847 = vmatprep.subr.mxu0 0.0
  %1848 = vmatpush1.msra.mxu0 0.0
  %1849 = vmatprep.mubr.f32.mxu0 0.0
  %1850 = vmatmul.mubr.f32.gmra.mrb[0].mxu0 %v207
  %v1851 = vpop.f32.mrb[0].mxu0
  %v1852 = vadd.f32 0.0, %v1851
  %v1853 = vpop.f32.mrb[0].mxu0
  %1854 = vdwg.mxu0
  %v1855 = vrcp.pop %v1784
  %v1856 = vmul.f32 1.0, %v1855
  %v1857 = vmul.f32 %v1852, %v1856
  %v1858 = vld [vmem:[%s0 + $0x30] sm:$0xff]
  %1860 = vset.pattern.permute.xlu0 0
  %1861 = vperm.xlu0 %1860, %v222
  %v1862 = vpop.permute.xlu0 %1861
  %v1864 = vadd.f32 %v1857, %v1862
  %v1865 = vmax.f32 %v1864, 0.0
  %v1866 = vadd.f32 %v1865, %v1858
  %1867 = vst [vmem:[%s4 + $0x30] sm:$0xff] %v1866
  %v1868 = vadd.f32 %v143, %v230
  %v1869 = vadd.f32 %v167, %v236
  %1870 = vxpose.xlu0.b32.start [1/16] %v1869, 128
  %1871 = vxpose.xlu0.b32.cont [2/16] %v1868, 128
  %1872 = vxpose.xlu0.b32.cont [3/16] 0.0, 128
  %1873 = vxpose.xlu0.b32.cont [4/16] 0.0, 128
  %1874 = vxpose.xlu0.b32.cont [5/16] 0.0, 128
  %1875 = vxpose.xlu0.b32.cont [6/16] 0.0, 128
  %1876 = vxpose.xlu0.b32.cont [7/16] 0.0, 128
  %1877 = vxpose.xlu0.b32.cont [8/16] 0.0, 128
  %1878 = vxpose.xlu0.b32.cont [9/16] 0.0, 128
  %1879 = vxpose.xlu0.b32.cont [10/16] 0.0, 128
  %1880 = vxpose.xlu0.b32.cont [11/16] 0.0, 128
  %1881 = vxpose.xlu0.b32.cont [12/16] 0.0, 128
  %1882 = vxpose.xlu0.b32.cont [13/16] 0.0, 128
  %1883 = vxpose.xlu0.b32.cont [14/16] 0.0, 128
  %1884 = vxpose.xlu0.b32.cont [15/16] 0.0, 128
  %1885 = vxpose.xlu0.b32.end [16/16] 0.0, 128
  %v1886 = vpop.trf.xlu0
  %v1887 = vpop.trf.xlu0
  %v1888 = vpop.trf.xlu0
  %v1889 = vpop.trf.xlu0
  %v1890 = vpop.trf.xlu0
  %v1891 = vpop.trf.xlu0
  %v1892 = vpop.trf.xlu0
  %v1893 = vpop.trf.xlu0
  %v1894 = vpop.trf.xlu0
  %v1895 = vpop.trf.xlu0
  %v1896 = vpop.trf.xlu0
  %v1897 = vpop.trf.xlu0
  %v1898 = vpop.trf.xlu0
  %v1899 = vpop.trf.xlu0
  %v1900 = vpop.trf.xlu0
  %v1901 = vpop.trf.xlu0
  %v1903 = vsel %vm271, %v1886, 0
  %v1906 = vsel %vm271, %v1887, 0
  %v1909 = vsel %vm271, %v1888, 0
  %v1912 = vsel %vm271, %v1889, 0
  %v1915 = vsel %vm271, %v1890, 0
  %v1918 = vsel %vm271, %v1891, 0
  %v1921 = vsel %vm271, %v1892, 0
  %v1924 = vsel %vm271, %v1893, 0
  %v1927 = vsel %vm271, %v1894, 0
  %v1930 = vsel %vm271, %v1895, 0
  %v1933 = vsel %vm271, %v1896, 0
  %v1936 = vsel %vm271, %v1897, 0
  %v1939 = vsel %vm271, %v1898, 0
  %v1942 = vsel %vm271, %v1899, 0
  %v1945 = vsel %vm271, %v1900, 0
  %v1948 = vsel %vm271, %v1901, 0
  %1950 = vmatprep.subr.mxu0 0.0
  %1951 = vmatpush1.msra.mxu0 %v1868
  %1952 = vmatprep.subr.mxu0 0.0
  %1953 = vmatpush1.msra.mxu0 %v223
  %1954 = vmatprep.subr.mxu0 0.0
  %1955 = vmatpush1.msra.mxu0 0.0
  %1956 = vmatprep.subr.mxu0 0.0
  %1957 = vmatpush1.msra.mxu0 0.0
  %1958 = vmatprep.subr.mxu0 0.0
  %1959 = vmatpush1.msra.mxu0 0.0
  %1960 = vmatprep.subr.mxu0 0.0
  %1961 = vmatpush1.msra.mxu0 0.0
  %1962 = vmatprep.subr.mxu0 0.0
  %1963 = vmatpush1.msra.mxu0 0.0
  %1964 = vmatprep.subr.mxu0 0.0
  %1965 = vmatpush1.msra.mxu0 0.0
  %1966 = vmatprep.subr.mxu0 0.0
  %1967 = vmatpush1.msra.mxu0 0.0
  %1968 = vmatprep.subr.mxu0 0.0
  %1969 = vmatpush1.msra.mxu0 0.0
  %1970 = vmatprep.subr.mxu0 0.0
  %1971 = vmatpush1.msra.mxu0 0.0
  %1972 = vmatprep.subr.mxu0 0.0
  %1973 = vmatpush1.msra.mxu0 0.0
  %1974 = vmatprep.subr.mxu0 0.0
  %1975 = vmatpush1.msra.mxu0 0.0
  %1976 = vmatprep.subr.mxu0 0.0
  %1977 = vmatpush1.msra.mxu0 0.0
  %1978 = vmatprep.subr.mxu0 0.0
  %1979 = vmatpush1.msra.mxu0 0.0
  %1980 = vmatprep.subr.mxu0 0.0
  %1981 = vmatpush1.msra.mxu0 0.0
  %1982 = vmatprep.subr.mxu0 0.0
  %1983 = vmatpush1.msra.mxu0 0.0
  %1984 = vmatprep.subr.mxu0 0.0
  %1985 = vmatpush1.msra.mxu0 0.0
  %1986 = vmatprep.subr.mxu0 0.0
  %1987 = vmatpush1.msra.mxu0 0.0
  %1988 = vmatprep.subr.mxu0 0.0
  %1989 = vmatpush1.msra.mxu0 0.0
  %1990 = vmatprep.subr.mxu0 0.0
  %1991 = vmatpush1.msra.mxu0 0.0
  %1992 = vmatprep.subr.mxu0 0.0
  %1993 = vmatpush1.msra.mxu0 0.0
  %1994 = vmatprep.subr.mxu0 0.0
  %1995 = vmatpush1.msra.mxu0 0.0
  %1996 = vmatprep.subr.mxu0 0.0
  %1997 = vmatpush1.msra.mxu0 0.0
  %1998 = vmatprep.subr.mxu0 0.0
  %1999 = vmatpush1.msra.mxu0 0.0
  %2000 = vmatprep.subr.mxu0 0.0
  %2001 = vmatpush1.msra.mxu0 0.0
  %2002 = vmatprep.subr.mxu0 0.0
  %2003 = vmatpush1.msra.mxu0 0.0
  %2004 = vmatprep.subr.mxu0 0.0
  %2005 = vmatpush1.msra.mxu0 0.0
  %2006 = vmatprep.subr.mxu0 0.0
  %2007 = vmatpush1.msra.mxu0 0.0
  %2008 = vmatprep.subr.mxu0 0.0
  %2009 = vmatpush1.msra.mxu0 0.0
  %2010 = vmatprep.subr.mxu0 0.0
  %2011 = vmatpush1.msra.mxu0 0.0
  %2012 = vmatprep.subr.mxu0 0.0
  %2013 = vmatpush1.msra.mxu0 0.0
  %2014 = vmatprep.mubr.f32.mxu0 0.0
  %2015 = vmatmul.mubr.f32.gmra.mrb[0].mxu0 %v1903
  %v2016 = vpop.f32.mrb[0].mxu0
  %v2017 = vadd.f32 0.0, %v2016
  %v2018 = vpop.f32.mrb[0].mxu0
  %2019 = vmatprep.mubr.f32.mxu0 0.0
  %2020 = vmatmul.mubr.f32.gmra.mrb[0].mxu0 %v1906
  %v2021 = vpop.f32.mrb[0].mxu0
  %v2022 = vadd.f32 0.0, %v2021
  %v2023 = vpop.f32.mrb[0].mxu0
  %2024 = vmatprep.mubr.f32.mxu0 0.0
  %2025 = vmatmul.mubr.f32.gmra.mrb[0].mxu0 %v1909
  %v2026 = vpop.f32.mrb[0].mxu0
  %v2027 = vadd.f32 0.0, %v2026
  %v2028 = vpop.f32.mrb[0].mxu0
  %2029 = vmatprep.mubr.f32.mxu0 0.0
  %2030 = vmatmul.mubr.f32.gmra.mrb[0].mxu0 %v1912
  %v2031 = vpop.f32.mrb[0].mxu0
  %v2032 = vadd.f32 0.0, %v2031
  %v2033 = vpop.f32.mrb[0].mxu0
  %2034 = vmatprep.mubr.f32.mxu0 0.0
  %2035 = vmatmul.mubr.f32.gmra.mrb[0].mxu0 %v1915
  %v2036 = vpop.f32.mrb[0].mxu0
  %v2037 = vadd.f32 0.0, %v2036
  %v2038 = vpop.f32.mrb[0].mxu0
  %2039 = vmatprep.mubr.f32.mxu0 0.0
  %2040 = vmatmul.mubr.f32.gmra.mrb[0].mxu0 %v1918
  %v2041 = vpop.f32.mrb[0].mxu0
  %v2042 = vadd.f32 0.0, %v2041
  %v2043 = vpop.f32.mrb[0].mxu0
  %2044 = vmatprep.mubr.f32.mxu0 0.0
  %2045 = vmatmul.mubr.f32.gmra.mrb[0].mxu0 %v1921
  %v2046 = vpop.f32.mrb[0].mxu0
  %v2047 = vadd.f32 0.0, %v2046
  %v2048 = vpop.f32.mrb[0].mxu0
  %2049 = vmatprep.mubr.f32.mxu0 0.0
  %2050 = vmatmul.mubr.f32.gmra.mrb[0].mxu0 %v1924
  %v2051 = vpop.f32.mrb[0].mxu0
  %v2052 = vadd.f32 0.0, %v2051
  %v2053 = vpop.f32.mrb[0].mxu0
  %2054 = vmatprep.mubr.f32.mxu0 0.0
  %2055 = vmatmul.mubr.f32.gmra.mrb[0].mxu0 %v1927
  %v2056 = vpop.f32.mrb[0].mxu0
  %v2057 = vadd.f32 0.0, %v2056
  %v2058 = vpop.f32.mrb[0].mxu0
  %2059 = vmatprep.mubr.f32.mxu0 0.0
  %2060 = vmatmul.mubr.f32.gmra.mrb[0].mxu0 %v1930
  %v2061 = vpop.f32.mrb[0].mxu0
  %v2062 = vadd.f32 0.0, %v2061
  %v2063 = vpop.f32.mrb[0].mxu0
  %2064 = vmatprep.mubr.f32.mxu0 0.0
  %2065 = vmatmul.mubr.f32.gmra.mrb[0].mxu0 %v1933
  %v2066 = vpop.f32.mrb[0].mxu0
  %v2067 = vadd.f32 0.0, %v2066
  %v2068 = vpop.f32.mrb[0].mxu0
  %2069 = vmatprep.mubr.f32.mxu0 0.0
  %2070 = vmatmul.mubr.f32.gmra.mrb[0].mxu0 %v1936
  %v2071 = vpop.f32.mrb[0].mxu0
  %v2072 = vadd.f32 0.0, %v2071
  %v2073 = vpop.f32.mrb[0].mxu0
  %2074 = vmatprep.mubr.f32.mxu0 0.0
  %2075 = vmatmul.mubr.f32.gmra.mrb[0].mxu0 %v1939
  %v2076 = vpop.f32.mrb[0].mxu0
  %v2077 = vadd.f32 0.0, %v2076
  %v2078 = vpop.f32.mrb[0].mxu0
  %2079 = vmatprep.mubr.f32.mxu0 0.0
  %2080 = vmatmul.mubr.f32.gmra.mrb[0].mxu0 %v1942
  %v2081 = vpop.f32.mrb[0].mxu0
  %v2082 = vadd.f32 0.0, %v2081
  %v2083 = vpop.f32.mrb[0].mxu0
  %2084 = vmatprep.mubr.f32.mxu0 0.0
  %2085 = vmatmul.mubr.f32.gmra.mrb[0].mxu0 %v1945
  %v2086 = vpop.f32.mrb[0].mxu0
  %v2087 = vadd.f32 0.0, %v2086
  %v2088 = vpop.f32.mrb[0].mxu0
  %2089 = vmatprep.mubr.f32.mxu0 0.0
  %2090 = vmatmul.mubr.f32.gmra.mrb[0].mxu0 %v1948
  %v2091 = vpop.f32.mrb[0].mxu0
  %v2092 = vadd.f32 0.0, %v2091
  %v2093 = vpop.f32.mrb[0].mxu0
  %2094 = vdwg.mxu0
  %v2095 = vmax.f32 %v2017, %v2037
  %v2096 = vmax.f32 %v2022, %v2042
  %v2097 = vmax.f32 %v2027, %v2047
  %v2098 = vmax.f32 %v2032, %v2052
  %v2099 = vmax.f32 %v2095, %v2057
  %v2100 = vmax.f32 %v2096, %v2062
  %v2101 = vmax.f32 %v2097, %v2067
  %v2102 = vmax.f32 %v2098, %v2072
  %v2103 = vmax.f32 %v2099, %v2077
  %v2104 = vmax.f32 %v2100, %v2082
  %v2105 = vmax.f32 %v2101, %v2087
  %v2106 = vmax.f32 %v2102, %v2092
  %v2107 = vmax.f32 %v2103, %v2104
  %v2108 = vmax.f32 %v2105, %v2106
  %v2109 = vmax.f32 %v2107, %v2108
  %v2110 = vrot.slane %v2109, 4
  %v2111 = vmax.f32 %v2109, %v2110
  %v2112 = vrot.slane %v2111, 2
  %v2113 = vmax.f32 %v2111, %v2112
  %v2114 = vrot.slane %v2113, 1
  %v2115 = vmax.f32 %v2113, %v2114
  %v2116 = vsub.f32 %v2017, %v2115
  %v2117 = vsub.f32 %v2022, %v2115
  %v2118 = vsub.f32 %v2027, %v2115
  %v2119 = vsub.f32 %v2032, %v2115
  %v2120 = vsub.f32 %v2037, %v2115
  %v2121 = vsub.f32 %v2042, %v2115
  %v2122 = vsub.f32 %v2047, %v2115
  %v2123 = vsub.f32 %v2052, %v2115
  %v2124 = vsub.f32 %v2057, %v2115
  %v2125 = vsub.f32 %v2062, %v2115
  %v2126 = vsub.f32 %v2067, %v2115
  %v2127 = vsub.f32 %v2072, %v2115
  %v2128 = vsub.f32 %v2077, %v2115
  %v2129 = vsub.f32 %v2082, %v2115
  %v2130 = vsub.f32 %v2087, %v2115
  %v2131 = vsub.f32 %v2092, %v2115
  %v2132 = vmul.f32 %v2116, 1.442695
  %v2133 = vpow.pop %v2132
  %v2134 = vmul.f32 %v2117, 1.442695
  %v2135 = vpow.pop %v2134
  %v2136 = vmul.f32 %v2118, 1.442695
  %v2137 = vpow.pop %v2136
  %v2138 = vmul.f32 %v2119, 1.442695
  %v2139 = vpow.pop %v2138
  %v2140 = vmul.f32 %v2120, 1.442695
  %v2141 = vpow.pop %v2140
  %v2142 = vmul.f32 %v2121, 1.442695
  %v2143 = vpow.pop %v2142
  %v2144 = vmul.f32 %v2122, 1.442695
  %v2145 = vpow.pop %v2144
  %v2146 = vmul.f32 %v2123, 1.442695
  %v2147 = vpow.pop %v2146
  %v2148 = vmul.f32 %v2124, 1.442695
  %v2149 = vpow.pop %v2148
  %v2150 = vmul.f32 %v2125, 1.442695
  %v2151 = vpow.pop %v2150
  %v2152 = vmul.f32 %v2126, 1.442695
  %v2153 = vpow.pop %v2152
  %v2154 = vmul.f32 %v2127, 1.442695
  %v2155 = vpow.pop %v2154
  %v2156 = vmul.f32 %v2128, 1.442695
  %v2157 = vpow.pop %v2156
  %v2158 = vmul.f32 %v2129, 1.442695
  %v2159 = vpow.pop %v2158
  %v2160 = vmul.f32 %v2130, 1.442695
  %v2161 = vpow.pop %v2160
  %v2162 = vmul.f32 %v2131, 1.442695
  %v2163 = vpow.pop %v2162
  %v2164 = vadd.f32 %v2133, %v2135
  %v2165 = vadd.f32 %v2164, %v2137
  %v2166 = vadd.f32 %v2165, %v2139
  %v2167 = vadd.f32 %v2166, %v2141
  %v2168 = vadd.f32 %v2167, %v2143
  %v2169 = vadd.f32 %v2168, %v2145
  %v2170 = vadd.f32 %v2169, %v2147
  %v2171 = vadd.f32 %v2170, %v2149
  %v2172 = vadd.f32 %v2171, %v2151
  %v2173 = vadd.f32 %v2172, %v2153
  %v2174 = vadd.f32 %v2173, %v2155
  %v2175 = vadd.f32 %v2174, %v2157
  %v2176 = vadd.f32 %v2175, %v2159
  %v2177 = vadd.f32 %v2176, %v2161
  %v2178 = vadd.f32 %v2177, %v2163
  %v2179 = vrot.slane %v2178, 4
  %v2180 = vadd.f32 %v2178, %v2179
  %v2181 = vrot.slane %v2180, 2
  %v2182 = vadd.f32 %v2180, %v2181
  %v2183 = vrot.slane %v2182, 1
  %v2184 = vadd.f32 %v2182, %v2183
  %2185 = vmatprep.subr.mxu0 0.0
  %2186 = vmatpush1.msra.mxu0 %v2133
  %2187 = vmatprep.subr.mxu0 0.0
  %2188 = vmatpush1.msra.mxu0 %v2135
  %2189 = vmatprep.subr.mxu0 0.0
  %2190 = vmatpush1.msra.mxu0 %v2137
  %2191 = vmatprep.subr.mxu0 0.0
  %2192 = vmatpush1.msra.mxu0 %v2139
  %2193 = vmatprep.subr.mxu0 0.0
  %2194 = vmatpush1.msra.mxu0 %v2141
  %2195 = vmatprep.subr.mxu0 0.0
  %2196 = vmatpush1.msra.mxu0 %v2143
  %2197 = vmatprep.subr.mxu0 0.0
  %2198 = vmatpush1.msra.mxu0 %v2145
  %2199 = vmatprep.subr.mxu0 0.0
  %2200 = vmatpush1.msra.mxu0 %v2147
  %2201 = vmatprep.subr.mxu0 0.0
  %2202 = vmatpush1.msra.mxu0 %v2149
  %2203 = vmatprep.subr.mxu0 0.0
  %2204 = vmatpush1.msra.mxu0 %v2151
  %2205 = vmatprep.subr.mxu0 0.0
  %2206 = vmatpush1.msra.mxu0 %v2153
  %2207 = vmatprep.subr.mxu0 0.0
  %2208 = vmatpush1.msra.mxu0 %v2155
  %2209 = vmatprep.subr.mxu0 0.0
  %2210 = vmatpush1.msra.mxu0 %v2157
  %2211 = vmatprep.subr.mxu0 0.0
  %2212 = vmatpush1.msra.mxu0 %v2159
  %2213 = vmatprep.subr.mxu0 0.0
  %2214 = vmatpush1.msra.mxu0 %v2161
  %2215 = vmatprep.subr.mxu0 0.0
  %2216 = vmatpush1.msra.mxu0 %v2163
  %2217 = vmatprep.subr.mxu0 0.0
  %2218 = vmatpush1.msra.mxu0 0.0
  %2219 = vmatprep.subr.mxu0 0.0
  %2220 = vmatpush1.msra.mxu0 0.0
  %2221 = vmatprep.subr.mxu0 0.0
  %2222 = vmatpush1.msra.mxu0 0.0
  %2223 = vmatprep.subr.mxu0 0.0
  %2224 = vmatpush1.msra.mxu0 0.0
  %2225 = vmatprep.subr.mxu0 0.0
  %2226 = vmatpush1.msra.mxu0 0.0
  %2227 = vmatprep.subr.mxu0 0.0
  %2228 = vmatpush1.msra.mxu0 0.0
  %2229 = vmatprep.subr.mxu0 0.0
  %2230 = vmatpush1.msra.mxu0 0.0
  %2231 = vmatprep.subr.mxu0 0.0
  %2232 = vmatpush1.msra.mxu0 0.0
  %2233 = vmatprep.subr.mxu0 0.0
  %2234 = vmatpush1.msra.mxu0 0.0
  %2235 = vmatprep.subr.mxu0 0.0
  %2236 = vmatpush1.msra.mxu0 0.0
  %2237 = vmatprep.subr.mxu0 0.0
  %2238 = vmatpush1.msra.mxu0 0.0
  %2239 = vmatprep.subr.mxu0 0.0
  %2240 = vmatpush1.msra.mxu0 0.0
  %2241 = vmatprep.subr.mxu0 0.0
  %2242 = vmatpush1.msra.mxu0 0.0
  %2243 = vmatprep.subr.mxu0 0.0
  %2244 = vmatpush1.msra.mxu0 0.0
  %2245 = vmatprep.subr.mxu0 0.0
  %2246 = vmatpush1.msra.mxu0 0.0
  %2247 = vmatprep.subr.mxu0 0.0
  %2248 = vmatpush1.msra.mxu0 0.0
  %2249 = vmatprep.mubr.f32.mxu0 0.0
  %2250 = vmatmul.mubr.f32.gmra.mrb[0].mxu0 %v191
  %v2251 = vpop.f32.mrb[0].mxu0
  %v2252 = vadd.f32 0.0, %v2251
  %v2253 = vpop.f32.mrb[0].mxu0
  %2254 = vdwg.mxu0
  %v2255 = vrcp.pop %v2184
  %v2256 = vmul.f32 1.0, %v2255
  %v2257 = vmul.f32 %v2252, %v2256
  %v2258 = vld [vmem:[%s0 + $0x8] sm:$0xff]
  %v2259 = vadd.f32 %v2257, %v632
  %v2260 = vmax.f32 %v2259, 0.0
  %v2261 = vadd.f32 %v2260, %v2258
  %2262 = vst [vmem:[%s4 + $0x8] sm:$0xff] %v2261
  %v2263 = vadd.f32 %v149, %v641
  %v2264 = vadd.f32 %v173, %v647
  %2265 = vxpose.xlu0.b32.start [1/16] %v2264, 128
  %2266 = vxpose.xlu0.b32.cont [2/16] %v2263, 128
  %2267 = vxpose.xlu0.b32.cont [3/16] 0.0, 128
  %2268 = vxpose.xlu0.b32.cont [4/16] 0.0, 128
  %2269 = vxpose.xlu0.b32.cont [5/16] 0.0, 128
  %2270 = vxpose.xlu0.b32.cont [6/16] 0.0, 128
  %2271 = vxpose.xlu0.b32.cont [7/16] 0.0, 128
  %2272 = vxpose.xlu0.b32.cont [8/16] 0.0, 128
  %2273 = vxpose.xlu0.b32.cont [9/16] 0.0, 128
  %2274 = vxpose.xlu0.b32.cont [10/16] 0.0, 128
  %2275 = vxpose.xlu0.b32.cont [11/16] 0.0, 128
  %2276 = vxpose.xlu0.b32.cont [12/16] 0.0, 128
  %2277 = vxpose.xlu0.b32.cont [13/16] 0.0, 128
  %2278 = vxpose.xlu0.b32.cont [14/16] 0.0, 128
  %2279 = vxpose.xlu0.b32.cont [15/16] 0.0, 128
  %2280 = vxpose.xlu0.b32.end [16/16] 0.0, 128
  %v2281 = vpop.trf.xlu0
  %v2282 = vpop.trf.xlu0
  %v2283 = vpop.trf.xlu0
  %v2284 = vpop.trf.xlu0
  %v2285 = vpop.trf.xlu0
  %v2286 = vpop.trf.xlu0
  %v2287 = vpop.trf.xlu0
  %v2288 = vpop.trf.xlu0
  %v2289 = vpop.trf.xlu0
  %v2290 = vpop.trf.xlu0
  %v2291 = vpop.trf.xlu0
  %v2292 = vpop.trf.xlu0
  %v2293 = vpop.trf.xlu0
  %v2294 = vpop.trf.xlu0
  %v2295 = vpop.trf.xlu0
  %v2296 = vpop.trf.xlu0
  %v2298 = vsel %vm271, %v2281, 0
  %v2301 = vsel %vm271, %v2282, 0
  %v2304 = vsel %vm271, %v2283, 0
  %v2307 = vsel %vm271, %v2284, 0
  %v2310 = vsel %vm271, %v2285, 0
  %v2313 = vsel %vm271, %v2286, 0
  %v2316 = vsel %vm271, %v2287, 0
  %v2319 = vsel %vm271, %v2288, 0
  %v2322 = vsel %vm271, %v2289, 0
  %v2325 = vsel %vm271, %v2290, 0
  %v2328 = vsel %vm271, %v2291, 0
  %v2331 = vsel %vm271, %v2292, 0
  %v2334 = vsel %vm271, %v2293, 0
  %v2337 = vsel %vm271, %v2294, 0
  %v2340 = vsel %vm271, %v2295, 0
  %v2343 = vsel %vm271, %v2296, 0
  %2345 = vmatprep.subr.mxu0 0.0
  %2346 = vmatpush1.msra.mxu0 %v2263
  %2347 = vmatprep.subr.mxu0 0.0
  %2348 = vmatpush1.msra.mxu0 %v224
  %2349 = vmatprep.subr.mxu0 0.0
  %2350 = vmatpush1.msra.mxu0 0.0
  %2351 = vmatprep.subr.mxu0 0.0
  %2352 = vmatpush1.msra.mxu0 0.0
  %2353 = vmatprep.subr.mxu0 0.0
  %2354 = vmatpush1.msra.mxu0 0.0
  %2355 = vmatprep.subr.mxu0 0.0
  %2356 = vmatpush1.msra.mxu0 0.0
  %2357 = vmatprep.subr.mxu0 0.0
  %2358 = vmatpush1.msra.mxu0 0.0
  %2359 = vmatprep.subr.mxu0 0.0
  %2360 = vmatpush1.msra.mxu0 0.0
  %2361 = vmatprep.subr.mxu0 0.0
  %2362 = vmatpush1.msra.mxu0 0.0
  %2363 = vmatprep.subr.mxu0 0.0
  %2364 = vmatpush1.msra.mxu0 0.0
  %2365 = vmatprep.subr.mxu0 0.0
  %2366 = vmatpush1.msra.mxu0 0.0
  %2367 = vmatprep.subr.mxu0 0.0
  %2368 = vmatpush1.msra.mxu0 0.0
  %2369 = vmatprep.subr.mxu0 0.0
  %2370 = vmatpush1.msra.mxu0 0.0
  %2371 = vmatprep.subr.mxu0 0.0
  %2372 = vmatpush1.msra.mxu0 0.0
  %2373 = vmatprep.subr.mxu0 0.0
  %2374 = vmatpush1.msra.mxu0 0.0
  %2375 = vmatprep.subr.mxu0 0.0
  %2376 = vmatpush1.msra.mxu0 0.0
  %2377 = vmatprep.subr.mxu0 0.0
  %2378 = vmatpush1.msra.mxu0 0.0
  %2379 = vmatprep.subr.mxu0 0.0
  %2380 = vmatpush1.msra.mxu0 0.0
  %2381 = vmatprep.subr.mxu0 0.0
  %2382 = vmatpush1.msra.mxu0 0.0
  %2383 = vmatprep.subr.mxu0 0.0
  %2384 = vmatpush1.msra.mxu0 0.0
  %2385 = vmatprep.subr.mxu0 0.0
  %2386 = vmatpush1.msra.mxu0 0.0
  %2387 = vmatprep.subr.mxu0 0.0
  %2388 = vmatpush1.msra.mxu0 0.0
  %2389 = vmatprep.subr.mxu0 0.0
  %2390 = vmatpush1.msra.mxu0 0.0
  %2391 = vmatprep.subr.mxu0 0.0
  %2392 = vmatpush1.msra.mxu0 0.0
  %2393 = vmatprep.subr.mxu0 0.0
  %2394 = vmatpush1.msra.mxu0 0.0
  %2395 = vmatprep.subr.mxu0 0.0
  %2396 = vmatpush1.msra.mxu0 0.0
  %2397 = vmatprep.subr.mxu0 0.0
  %2398 = vmatpush1.msra.mxu0 0.0
  %2399 = vmatprep.subr.mxu0 0.0
  %2400 = vmatpush1.msra.mxu0 0.0
  %2401 = vmatprep.subr.mxu0 0.0
  %2402 = vmatpush1.msra.mxu0 0.0
  %2403 = vmatprep.subr.mxu0 0.0
  %2404 = vmatpush1.msra.mxu0 0.0
  %2405 = vmatprep.subr.mxu0 0.0
  %2406 = vmatpush1.msra.mxu0 0.0
  %2407 = vmatprep.subr.mxu0 0.0
  %2408 = vmatpush1.msra.mxu0 0.0
  %2409 = vmatprep.mubr.f32.mxu0 0.0
  %2410 = vmatmul.mubr.f32.gmra.mrb[0].mxu0 %v2298
  %v2411 = vpop.f32.mrb[0].mxu0
  %v2412 = vadd.f32 0.0, %v2411
  %v2413 = vpop.f32.mrb[0].mxu0
  %2414 = vmatprep.mubr.f32.mxu0 0.0
  %2415 = vmatmul.mubr.f32.gmra.mrb[0].mxu0 %v2301
  %v2416 = vpop.f32.mrb[0].mxu0
  %v2417 = vadd.f32 0.0, %v2416
  %v2418 = vpop.f32.mrb[0].mxu0
  %2419 = vmatprep.mubr.f32.mxu0 0.0
  %2420 = vmatmul.mubr.f32.gmra.mrb[0].mxu0 %v2304
  %v2421 = vpop.f32.mrb[0].mxu0
  %v2422 = vadd.f32 0.0, %v2421
  %v2423 = vpop.f32.mrb[0].mxu0
  %2424 = vmatprep.mubr.f32.mxu0 0.0
  %2425 = vmatmul.mubr.f32.gmra.mrb[0].mxu0 %v2307
  %v2426 = vpop.f32.mrb[0].mxu0
  %v2427 = vadd.f32 0.0, %v2426
  %v2428 = vpop.f32.mrb[0].mxu0
  %2429 = vmatprep.mubr.f32.mxu0 0.0
  %2430 = vmatmul.mubr.f32.gmra.mrb[0].mxu0 %v2310
  %v2431 = vpop.f32.mrb[0].mxu0
  %v2432 = vadd.f32 0.0, %v2431
  %v2433 = vpop.f32.mrb[0].mxu0
  %2434 = vmatprep.mubr.f32.mxu0 0.0
  %2435 = vmatmul.mubr.f32.gmra.mrb[0].mxu0 %v2313
  %v2436 = vpop.f32.mrb[0].mxu0
  %v2437 = vadd.f32 0.0, %v2436
  %v2438 = vpop.f32.mrb[0].mxu0
  %2439 = vmatprep.mubr.f32.mxu0 0.0
  %2440 = vmatmul.mubr.f32.gmra.mrb[0].mxu0 %v2316
  %v2441 = vpop.f32.mrb[0].mxu0
  %v2442 = vadd.f32 0.0, %v2441
  %v2443 = vpop.f32.mrb[0].mxu0
  %2444 = vmatprep.mubr.f32.mxu0 0.0
  %2445 = vmatmul.mubr.f32.gmra.mrb[0].mxu0 %v2319
  %v2446 = vpop.f32.mrb[0].mxu0
  %v2447 = vadd.f32 0.0, %v2446
  %v2448 = vpop.f32.mrb[0].mxu0
  %2449 = vmatprep.mubr.f32.mxu0 0.0
  %2450 = vmatmul.mubr.f32.gmra.mrb[0].mxu0 %v2322
  %v2451 = vpop.f32.mrb[0].mxu0
  %v2452 = vadd.f32 0.0, %v2451
  %v2453 = vpop.f32.mrb[0].mxu0
  %2454 = vmatprep.mubr.f32.mxu0 0.0
  %2455 = vmatmul.mubr.f32.gmra.mrb[0].mxu0 %v2325
  %v2456 = vpop.f32.mrb[0].mxu0
  %v2457 = vadd.f32 0.0, %v2456
  %v2458 = vpop.f32.mrb[0].mxu0
  %2459 = vmatprep.mubr.f32.mxu0 0.0
  %2460 = vmatmul.mubr.f32.gmra.mrb[0].mxu0 %v2328
  %v2461 = vpop.f32.mrb[0].mxu0
  %v2462 = vadd.f32 0.0, %v2461
  %v2463 = vpop.f32.mrb[0].mxu0
  %2464 = vmatprep.mubr.f32.mxu0 0.0
  %2465 = vmatmul.mubr.f32.gmra.mrb[0].mxu0 %v2331
  %v2466 = vpop.f32.mrb[0].mxu0
  %v2467 = vadd.f32 0.0, %v2466
  %v2468 = vpop.f32.mrb[0].mxu0
  %2469 = vmatprep.mubr.f32.mxu0 0.0
  %2470 = vmatmul.mubr.f32.gmra.mrb[0].mxu0 %v2334
  %v2471 = vpop.f32.mrb[0].mxu0
  %v2472 = vadd.f32 0.0, %v2471
  %v2473 = vpop.f32.mrb[0].mxu0
  %2474 = vmatprep.mubr.f32.mxu0 0.0
  %2475 = vmatmul.mubr.f32.gmra.mrb[0].mxu0 %v2337
  %v2476 = vpop.f32.mrb[0].mxu0
  %v2477 = vadd.f32 0.0, %v2476
  %v2478 = vpop.f32.mrb[0].mxu0
  %2479 = vmatprep.mubr.f32.mxu0 0.0
  %2480 = vmatmul.mubr.f32.gmra.mrb[0].mxu0 %v2340
  %v2481 = vpop.f32.mrb[0].mxu0
  %v2482 = vadd.f32 0.0, %v2481
  %v2483 = vpop.f32.mrb[0].mxu0
  %2484 = vmatprep.mubr.f32.mxu0 0.0
  %2485 = vmatmul.mubr.f32.gmra.mrb[0].mxu0 %v2343
  %v2486 = vpop.f32.mrb[0].mxu0
  %v2487 = vadd.f32 0.0, %v2486
  %v2488 = vpop.f32.mrb[0].mxu0
  %2489 = vdwg.mxu0
  %v2490 = vmax.f32 %v2412, %v2432
  %v2491 = vmax.f32 %v2417, %v2437
  %v2492 = vmax.f32 %v2422, %v2442
  %v2493 = vmax.f32 %v2427, %v2447
  %v2494 = vmax.f32 %v2490, %v2452
  %v2495 = vmax.f32 %v2491, %v2457
  %v2496 = vmax.f32 %v2492, %v2462
  %v2497 = vmax.f32 %v2493, %v2467
  %v2498 = vmax.f32 %v2494, %v2472
  %v2499 = vmax.f32 %v2495, %v2477
  %v2500 = vmax.f32 %v2496, %v2482
  %v2501 = vmax.f32 %v2497, %v2487
  %v2502 = vmax.f32 %v2498, %v2499
  %v2503 = vmax.f32 %v2500, %v2501
  %v2504 = vmax.f32 %v2502, %v2503
  %v2505 = vrot.slane %v2504, 4
  %v2506 = vmax.f32 %v2504, %v2505
  %v2507 = vrot.slane %v2506, 2
  %v2508 = vmax.f32 %v2506, %v2507
  %v2509 = vrot.slane %v2508, 1
  %v2510 = vmax.f32 %v2508, %v2509
  %v2511 = vsub.f32 %v2412, %v2510
  %v2512 = vsub.f32 %v2417, %v2510
  %v2513 = vsub.f32 %v2422, %v2510
  %v2514 = vsub.f32 %v2427, %v2510
  %v2515 = vsub.f32 %v2432, %v2510
  %v2516 = vsub.f32 %v2437, %v2510
  %v2517 = vsub.f32 %v2442, %v2510
  %v2518 = vsub.f32 %v2447, %v2510
  %v2519 = vsub.f32 %v2452, %v2510
  %v2520 = vsub.f32 %v2457, %v2510
  %v2521 = vsub.f32 %v2462, %v2510
  %v2522 = vsub.f32 %v2467, %v2510
  %v2523 = vsub.f32 %v2472, %v2510
  %v2524 = vsub.f32 %v2477, %v2510
  %v2525 = vsub.f32 %v2482, %v2510
  %v2526 = vsub.f32 %v2487, %v2510
  %v2527 = vmul.f32 %v2511, 1.442695
  %v2528 = vpow.pop %v2527
  %v2529 = vmul.f32 %v2512, 1.442695
  %v2530 = vpow.pop %v2529
  %v2531 = vmul.f32 %v2513, 1.442695
  %v2532 = vpow.pop %v2531
  %v2533 = vmul.f32 %v2514, 1.442695
  %v2534 = vpow.pop %v2533
  %v2535 = vmul.f32 %v2515, 1.442695
  %v2536 = vpow.pop %v2535
  %v2537 = vmul.f32 %v2516, 1.442695
  %v2538 = vpow.pop %v2537
  %v2539 = vmul.f32 %v2517, 1.442695
  %v2540 = vpow.pop %v2539
  %v2541 = vmul.f32 %v2518, 1.442695
  %v2542 = vpow.pop %v2541
  %v2543 = vmul.f32 %v2519, 1.442695
  %v2544 = vpow.pop %v2543
  %v2545 = vmul.f32 %v2520, 1.442695
  %v2546 = vpow.pop %v2545
  %v2547 = vmul.f32 %v2521, 1.442695
  %v2548 = vpow.pop %v2547
  %v2549 = vmul.f32 %v2522, 1.442695
  %v2550 = vpow.pop %v2549
  %v2551 = vmul.f32 %v2523, 1.442695
  %v2552 = vpow.pop %v2551
  %v2553 = vmul.f32 %v2524, 1.442695
  %v2554 = vpow.pop %v2553
  %v2555 = vmul.f32 %v2525, 1.442695
  %v2556 = vpow.pop %v2555
  %v2557 = vmul.f32 %v2526, 1.442695
  %v2558 = vpow.pop %v2557
  %v2559 = vadd.f32 %v2528, %v2530
  %v2560 = vadd.f32 %v2559, %v2532
  %v2561 = vadd.f32 %v2560, %v2534
  %v2562 = vadd.f32 %v2561, %v2536
  %v2563 = vadd.f32 %v2562, %v2538
  %v2564 = vadd.f32 %v2563, %v2540
  %v2565 = vadd.f32 %v2564, %v2542
  %v2566 = vadd.f32 %v2565, %v2544
  %v2567 = vadd.f32 %v2566, %v2546
  %v2568 = vadd.f32 %v2567, %v2548
  %v2569 = vadd.f32 %v2568, %v2550
  %v2570 = vadd.f32 %v2569, %v2552
  %v2571 = vadd.f32 %v2570, %v2554
  %v2572 = vadd.f32 %v2571, %v2556
  %v2573 = vadd.f32 %v2572, %v2558
  %v2574 = vrot.slane %v2573, 4
  %v2575 = vadd.f32 %v2573, %v2574
  %v2576 = vrot.slane %v2575, 2
  %v2577 = vadd.f32 %v2575, %v2576
  %v2578 = vrot.slane %v2577, 1
  %v2579 = vadd.f32 %v2577, %v2578
  %2580 = vmatprep.subr.mxu0 0.0
  %2581 = vmatpush1.msra.mxu0 %v2528
  %2582 = vmatprep.subr.mxu0 0.0
  %2583 = vmatpush1.msra.mxu0 %v2530
  %2584 = vmatprep.subr.mxu0 0.0
  %2585 = vmatpush1.msra.mxu0 %v2532
  %2586 = vmatprep.subr.mxu0 0.0
  %2587 = vmatpush1.msra.mxu0 %v2534
  %2588 = vmatprep.subr.mxu0 0.0
  %2589 = vmatpush1.msra.mxu0 %v2536
  %2590 = vmatprep.subr.mxu0 0.0
  %2591 = vmatpush1.msra.mxu0 %v2538
  %2592 = vmatprep.subr.mxu0 0.0
  %2593 = vmatpush1.msra.mxu0 %v2540
  %2594 = vmatprep.subr.mxu0 0.0
  %2595 = vmatpush1.msra.mxu0 %v2542
  %2596 = vmatprep.subr.mxu0 0.0
  %2597 = vmatpush1.msra.mxu0 %v2544
  %2598 = vmatprep.subr.mxu0 0.0
  %2599 = vmatpush1.msra.mxu0 %v2546
  %2600 = vmatprep.subr.mxu0 0.0
  %2601 = vmatpush1.msra.mxu0 %v2548
  %2602 = vmatprep.subr.mxu0 0.0
  %2603 = vmatpush1.msra.mxu0 %v2550
  %2604 = vmatprep.subr.mxu0 0.0
  %2605 = vmatpush1.msra.mxu0 %v2552
  %2606 = vmatprep.subr.mxu0 0.0
  %2607 = vmatpush1.msra.mxu0 %v2554
  %2608 = vmatprep.subr.mxu0 0.0
  %2609 = vmatpush1.msra.mxu0 %v2556
  %2610 = vmatprep.subr.mxu0 0.0
  %2611 = vmatpush1.msra.mxu0 %v2558
  %2612 = vmatprep.subr.mxu0 0.0
  %2613 = vmatpush1.msra.mxu0 0.0
  %2614 = vmatprep.subr.mxu0 0.0
  %2615 = vmatpush1.msra.mxu0 0.0
  %2616 = vmatprep.subr.mxu0 0.0
  %2617 = vmatpush1.msra.mxu0 0.0
  %2618 = vmatprep.subr.mxu0 0.0
  %2619 = vmatpush1.msra.mxu0 0.0
  %2620 = vmatprep.subr.mxu0 0.0
  %2621 = vmatpush1.msra.mxu0 0.0
  %2622 = vmatprep.subr.mxu0 0.0
  %2623 = vmatpush1.msra.mxu0 0.0
  %2624 = vmatprep.subr.mxu0 0.0
  %2625 = vmatpush1.msra.mxu0 0.0
  %2626 = vmatprep.subr.mxu0 0.0
  %2627 = vmatpush1.msra.mxu0 0.0
  %2628 = vmatprep.subr.mxu0 0.0
  %2629 = vmatpush1.msra.mxu0 0.0
  %2630 = vmatprep.subr.mxu0 0.0
  %2631 = vmatpush1.msra.mxu0 0.0
  %2632 = vmatprep.subr.mxu0 0.0
  %2633 = vmatpush1.msra.mxu0 0.0
  %2634 = vmatprep.subr.mxu0 0.0
  %2635 = vmatpush1.msra.mxu0 0.0
  %2636 = vmatprep.subr.mxu0 0.0
  %2637 = vmatpush1.msra.mxu0 0.0
  %2638 = vmatprep.subr.mxu0 0.0
  %2639 = vmatpush1.msra.mxu0 0.0
  %2640 = vmatprep.subr.mxu0 0.0
  %2641 = vmatpush1.msra.mxu0 0.0
  %2642 = vmatprep.subr.mxu0 0.0
  %2643 = vmatpush1.msra.mxu0 0.0
  %2644 = vmatprep.mubr.f32.mxu0 0.0
  %2645 = vmatmul.mubr.f32.gmra.mrb[0].mxu0 %v197
  %v2646 = vpop.f32.mrb[0].mxu0
  %v2647 = vadd.f32 0.0, %v2646
  %v2648 = vpop.f32.mrb[0].mxu0
  %2649 = vdwg.mxu0
  %v2650 = vrcp.pop %v2579
  %v2651 = vmul.f32 1.0, %v2650
  %v2652 = vmul.f32 %v2647, %v2651
  %v2653 = vld [vmem:[%s0 + $0x18] sm:$0xff]
  %v2654 = vadd.f32 %v2652, %v1042
  %v2655 = vmax.f32 %v2654, 0.0
  %v2656 = vadd.f32 %v2655, %v2653
  %2657 = vst [vmem:[%s4 + $0x18] sm:$0xff] %v2656
  %v2658 = vadd.f32 %v155, %v1051
  %v2659 = vadd.f32 %v179, %v1057
  %2660 = vxpose.xlu0.b32.start [1/16] %v2659, 128
  %2661 = vxpose.xlu0.b32.cont [2/16] %v2658, 128
  %2662 = vxpose.xlu0.b32.cont [3/16] 0.0, 128
  %2663 = vxpose.xlu0.b32.cont [4/16] 0.0, 128
  %2664 = vxpose.xlu0.b32.cont [5/16] 0.0, 128
  %2665 = vxpose.xlu0.b32.cont [6/16] 0.0, 128
  %2666 = vxpose.xlu0.b32.cont [7/16] 0.0, 128
  %2667 = vxpose.xlu0.b32.cont [8/16] 0.0, 128
  %2668 = vxpose.xlu0.b32.cont [9/16] 0.0, 128
  %2669 = vxpose.xlu0.b32.cont [10/16] 0.0, 128
  %2670 = vxpose.xlu0.b32.cont [11/16] 0.0, 128
  %2671 = vxpose.xlu0.b32.cont [12/16] 0.0, 128
  %2672 = vxpose.xlu0.b32.cont [13/16] 0.0, 128
  %2673 = vxpose.xlu0.b32.cont [14/16] 0.0, 128
  %2674 = vxpose.xlu0.b32.cont [15/16] 0.0, 128
  %2675 = vxpose.xlu0.b32.end [16/16] 0.0, 128
  %v2676 = vpop.trf.xlu0
  %v2677 = vpop.trf.xlu0
  %v2678 = vpop.trf.xlu0
  %v2679 = vpop.trf.xlu0
  %v2680 = vpop.trf.xlu0
  %v2681 = vpop.trf.xlu0
  %v2682 = vpop.trf.xlu0
  %v2683 = vpop.trf.xlu0
  %v2684 = vpop.trf.xlu0
  %v2685 = vpop.trf.xlu0
  %v2686 = vpop.trf.xlu0
  %v2687 = vpop.trf.xlu0
  %v2688 = vpop.trf.xlu0
  %v2689 = vpop.trf.xlu0
  %v2690 = vpop.trf.xlu0
  %v2691 = vpop.trf.xlu0
  %v2693 = vsel %vm271, %v2676, 0
  %v2696 = vsel %vm271, %v2677, 0
  %v2699 = vsel %vm271, %v2678, 0
  %v2702 = vsel %vm271, %v2679, 0
  %v2705 = vsel %vm271, %v2680, 0
  %v2708 = vsel %vm271, %v2681, 0
  %v2711 = vsel %vm271, %v2682, 0
  %v2714 = vsel %vm271, %v2683, 0
  %v2717 = vsel %vm271, %v2684, 0
  %v2720 = vsel %vm271, %v2685, 0
  %v2723 = vsel %vm271, %v2686, 0
  %v2726 = vsel %vm271, %v2687, 0
  %v2729 = vsel %vm271, %v2688, 0
  %v2732 = vsel %vm271, %v2689, 0
  %v2735 = vsel %vm271, %v2690, 0
  %v2738 = vsel %vm271, %v2691, 0
  %2740 = vmatprep.subr.mxu0 0.0
  %2741 = vmatpush1.msra.mxu0 %v2658
  %2742 = vmatprep.subr.mxu0 0.0
  %2743 = vmatpush1.msra.mxu0 %v225
  %2744 = vmatprep.subr.mxu0 0.0
  %2745 = vmatpush1.msra.mxu0 0.0
  %2746 = vmatprep.subr.mxu0 0.0
  %2747 = vmatpush1.msra.mxu0 0.0
  %2748 = vmatprep.subr.mxu0 0.0
  %2749 = vmatpush1.msra.mxu0 0.0
  %2750 = vmatprep.subr.mxu0 0.0
  %2751 = vmatpush1.msra.mxu0 0.0
  %2752 = vmatprep.subr.mxu0 0.0
  %2753 = vmatpush1.msra.mxu0 0.0
  %2754 = vmatprep.subr.mxu0 0.0
  %2755 = vmatpush1.msra.mxu0 0.0
  %2756 = vmatprep.subr.mxu0 0.0
  %2757 = vmatpush1.msra.mxu0 0.0
  %2758 = vmatprep.subr.mxu0 0.0
  %2759 = vmatpush1.msra.mxu0 0.0
  %2760 = vmatprep.subr.mxu0 0.0
  %2761 = vmatpush1.msra.mxu0 0.0
  %2762 = vmatprep.subr.mxu0 0.0
  %2763 = vmatpush1.msra.mxu0 0.0
  %2764 = vmatprep.subr.mxu0 0.0
  %2765 = vmatpush1.msra.mxu0 0.0
  %2766 = vmatprep.subr.mxu0 0.0
  %2767 = vmatpush1.msra.mxu0 0.0
  %2768 = vmatprep.subr.mxu0 0.0
  %2769 = vmatpush1.msra.mxu0 0.0
  %2770 = vmatprep.subr.mxu0 0.0
  %2771 = vmatpush1.msra.mxu0 0.0
  %2772 = vmatprep.subr.mxu0 0.0
  %2773 = vmatpush1.msra.mxu0 0.0
  %2774 = vmatprep.subr.mxu0 0.0
  %2775 = vmatpush1.msra.mxu0 0.0
  %2776 = vmatprep.subr.mxu0 0.0
  %2777 = vmatpush1.msra.mxu0 0.0
  %2778 = vmatprep.subr.mxu0 0.0
  %2779 = vmatpush1.msra.mxu0 0.0
  %2780 = vmatprep.subr.mxu0 0.0
  %2781 = vmatpush1.msra.mxu0 0.0
  %2782 = vmatprep.subr.mxu0 0.0
  %2783 = vmatpush1.msra.mxu0 0.0
  %2784 = vmatprep.subr.mxu0 0.0
  %2785 = vmatpush1.msra.mxu0 0.0
  %2786 = vmatprep.subr.mxu0 0.0
  %2787 = vmatpush1.msra.mxu0 0.0
  %2788 = vmatprep.subr.mxu0 0.0
  %2789 = vmatpush1.msra.mxu0 0.0
  %2790 = vmatprep.subr.mxu0 0.0
  %2791 = vmatpush1.msra.mxu0 0.0
  %2792 = vmatprep.subr.mxu0 0.0
  %2793 = vmatpush1.msra.mxu0 0.0
  %2794 = vmatprep.subr.mxu0 0.0
  %2795 = vmatpush1.msra.mxu0 0.0
  %2796 = vmatprep.subr.mxu0 0.0
  %2797 = vmatpush1.msra.mxu0 0.0
  %2798 = vmatprep.subr.mxu0 0.0
  %2799 = vmatpush1.msra.mxu0 0.0
  %2800 = vmatprep.subr.mxu0 0.0
  %2801 = vmatpush1.msra.mxu0 0.0
  %2802 = vmatprep.subr.mxu0 0.0
  %2803 = vmatpush1.msra.mxu0 0.0
  %2804 = vmatprep.mubr.f32.mxu0 0.0
  %2805 = vmatmul.mubr.f32.gmra.mrb[0].mxu0 %v2693
  %v2806 = vpop.f32.mrb[0].mxu0
  %v2807 = vadd.f32 0.0, %v2806
  %v2808 = vpop.f32.mrb[0].mxu0
  %2809 = vmatprep.mubr.f32.mxu0 0.0
  %2810 = vmatmul.mubr.f32.gmra.mrb[0].mxu0 %v2696
  %v2811 = vpop.f32.mrb[0].mxu0
  %v2812 = vadd.f32 0.0, %v2811
  %v2813 = vpop.f32.mrb[0].mxu0
  %2814 = vmatprep.mubr.f32.mxu0 0.0
  %2815 = vmatmul.mubr.f32.gmra.mrb[0].mxu0 %v2699
  %v2816 = vpop.f32.mrb[0].mxu0
  %v2817 = vadd.f32 0.0, %v2816
  %v2818 = vpop.f32.mrb[0].mxu0
  %2819 = vmatprep.mubr.f32.mxu0 0.0
  %2820 = vmatmul.mubr.f32.gmra.mrb[0].mxu0 %v2702
  %v2821 = vpop.f32.mrb[0].mxu0
  %v2822 = vadd.f32 0.0, %v2821
  %v2823 = vpop.f32.mrb[0].mxu0
  %2824 = vmatprep.mubr.f32.mxu0 0.0
  %2825 = vmatmul.mubr.f32.gmra.mrb[0].mxu0 %v2705
  %v2826 = vpop.f32.mrb[0].mxu0
  %v2827 = vadd.f32 0.0, %v2826
  %v2828 = vpop.f32.mrb[0].mxu0
  %2829 = vmatprep.mubr.f32.mxu0 0.0
  %2830 = vmatmul.mubr.f32.gmra.mrb[0].mxu0 %v2708
  %v2831 = vpop.f32.mrb[0].mxu0
  %v2832 = vadd.f32 0.0, %v2831
  %v2833 = vpop.f32.mrb[0].mxu0
  %2834 = vmatprep.mubr.f32.mxu0 0.0
  %2835 = vmatmul.mubr.f32.gmra.mrb[0].mxu0 %v2711
  %v2836 = vpop.f32.mrb[0].mxu0
  %v2837 = vadd.f32 0.0, %v2836
  %v2838 = vpop.f32.mrb[0].mxu0
  %2839 = vmatprep.mubr.f32.mxu0 0.0
  %2840 = vmatmul.mubr.f32.gmra.mrb[0].mxu0 %v2714
  %v2841 = vpop.f32.mrb[0].mxu0
  %v2842 = vadd.f32 0.0, %v2841
  %v2843 = vpop.f32.mrb[0].mxu0
  %2844 = vmatprep.mubr.f32.mxu0 0.0
  %2845 = vmatmul.mubr.f32.gmra.mrb[0].mxu0 %v2717
  %v2846 = vpop.f32.mrb[0].mxu0
  %v2847 = vadd.f32 0.0, %v2846
  %v2848 = vpop.f32.mrb[0].mxu0
  %2849 = vmatprep.mubr.f32.mxu0 0.0
  %2850 = vmatmul.mubr.f32.gmra.mrb[0].mxu0 %v2720
  %v2851 = vpop.f32.mrb[0].mxu0
  %v2852 = vadd.f32 0.0, %v2851
  %v2853 = vpop.f32.mrb[0].mxu0
  %2854 = vmatprep.mubr.f32.mxu0 0.0
  %2855 = vmatmul.mubr.f32.gmra.mrb[0].mxu0 %v2723
  %v2856 = vpop.f32.mrb[0].mxu0
  %v2857 = vadd.f32 0.0, %v2856
  %v2858 = vpop.f32.mrb[0].mxu0
  %2859 = vmatprep.mubr.f32.mxu0 0.0
  %2860 = vmatmul.mubr.f32.gmra.mrb[0].mxu0 %v2726
  %v2861 = vpop.f32.mrb[0].mxu0
  %v2862 = vadd.f32 0.0, %v2861
  %v2863 = vpop.f32.mrb[0].mxu0
  %2864 = vmatprep.mubr.f32.mxu0 0.0
  %2865 = vmatmul.mubr.f32.gmra.mrb[0].mxu0 %v2729
  %v2866 = vpop.f32.mrb[0].mxu0
  %v2867 = vadd.f32 0.0, %v2866
  %v2868 = vpop.f32.mrb[0].mxu0
  %2869 = vmatprep.mubr.f32.mxu0 0.0
  %2870 = vmatmul.mubr.f32.gmra.mrb[0].mxu0 %v2732
  %v2871 = vpop.f32.mrb[0].mxu0
  %v2872 = vadd.f32 0.0, %v2871
  %v2873 = vpop.f32.mrb[0].mxu0
  %2874 = vmatprep.mubr.f32.mxu0 0.0
  %2875 = vmatmul.mubr.f32.gmra.mrb[0].mxu0 %v2735
  %v2876 = vpop.f32.mrb[0].mxu0
  %v2877 = vadd.f32 0.0, %v2876
  %v2878 = vpop.f32.mrb[0].mxu0
  %2879 = vmatprep.mubr.f32.mxu0 0.0
  %2880 = vmatmul.mubr.f32.gmra.mrb[0].mxu0 %v2738
  %v2881 = vpop.f32.mrb[0].mxu0
  %v2882 = vadd.f32 0.0, %v2881
  %v2883 = vpop.f32.mrb[0].mxu0
  %2884 = vdwg.mxu0
  %v2885 = vmax.f32 %v2807, %v2827
  %v2886 = vmax.f32 %v2812, %v2832
  %v2887 = vmax.f32 %v2817, %v2837
  %v2888 = vmax.f32 %v2822, %v2842
  %v2889 = vmax.f32 %v2885, %v2847
  %v2890 = vmax.f32 %v2886, %v2852
  %v2891 = vmax.f32 %v2887, %v2857
  %v2892 = vmax.f32 %v2888, %v2862
  %v2893 = vmax.f32 %v2889, %v2867
  %v2894 = vmax.f32 %v2890, %v2872
  %v2895 = vmax.f32 %v2891, %v2877
  %v2896 = vmax.f32 %v2892, %v2882
  %v2897 = vmax.f32 %v2893, %v2894
  %v2898 = vmax.f32 %v2895, %v2896
  %v2899 = vmax.f32 %v2897, %v2898
  %v2900 = vrot.slane %v2899, 4
  %v2901 = vmax.f32 %v2899, %v2900
  %v2902 = vrot.slane %v2901, 2
  %v2903 = vmax.f32 %v2901, %v2902
  %v2904 = vrot.slane %v2903, 1
  %v2905 = vmax.f32 %v2903, %v2904
  %v2906 = vsub.f32 %v2807, %v2905
  %v2907 = vsub.f32 %v2812, %v2905
  %v2908 = vsub.f32 %v2817, %v2905
  %v2909 = vsub.f32 %v2822, %v2905
  %v2910 = vsub.f32 %v2827, %v2905
  %v2911 = vsub.f32 %v2832, %v2905
  %v2912 = vsub.f32 %v2837, %v2905
  %v2913 = vsub.f32 %v2842, %v2905
  %v2914 = vsub.f32 %v2847, %v2905
  %v2915 = vsub.f32 %v2852, %v2905
  %v2916 = vsub.f32 %v2857, %v2905
  %v2917 = vsub.f32 %v2862, %v2905
  %v2918 = vsub.f32 %v2867, %v2905
  %v2919 = vsub.f32 %v2872, %v2905
  %v2920 = vsub.f32 %v2877, %v2905
  %v2921 = vsub.f32 %v2882, %v2905
  %v2922 = vmul.f32 %v2906, 1.442695
  %v2923 = vpow.pop %v2922
  %v2924 = vmul.f32 %v2907, 1.442695
  %v2925 = vpow.pop %v2924
  %v2926 = vmul.f32 %v2908, 1.442695
  %v2927 = vpow.pop %v2926
  %v2928 = vmul.f32 %v2909, 1.442695
  %v2929 = vpow.pop %v2928
  %v2930 = vmul.f32 %v2910, 1.442695
  %v2931 = vpow.pop %v2930
  %v2932 = vmul.f32 %v2911, 1.442695
  %v2933 = vpow.pop %v2932
  %v2934 = vmul.f32 %v2912, 1.442695
  %v2935 = vpow.pop %v2934
  %v2936 = vmul.f32 %v2913, 1.442695
  %v2937 = vpow.pop %v2936
  %v2938 = vmul.f32 %v2914, 1.442695
  %v2939 = vpow.pop %v2938
  %v2940 = vmul.f32 %v2915, 1.442695
  %v2941 = vpow.pop %v2940
  %v2942 = vmul.f32 %v2916, 1.442695
  %v2943 = vpow.pop %v2942
  %v2944 = vmul.f32 %v2917, 1.442695
  %v2945 = vpow.pop %v2944
  %v2946 = vmul.f32 %v2918, 1.442695
  %v2947 = vpow.pop %v2946
  %v2948 = vmul.f32 %v2919, 1.442695
  %v2949 = vpow.pop %v2948
  %v2950 = vmul.f32 %v2920, 1.442695
  %v2951 = vpow.pop %v2950
  %v2952 = vmul.f32 %v2921, 1.442695
  %v2953 = vpow.pop %v2952
  %v2954 = vadd.f32 %v2923, %v2925
  %v2955 = vadd.f32 %v2954, %v2927
  %v2956 = vadd.f32 %v2955, %v2929
  %v2957 = vadd.f32 %v2956, %v2931
  %v2958 = vadd.f32 %v2957, %v2933
  %v2959 = vadd.f32 %v2958, %v2935
  %v2960 = vadd.f32 %v2959, %v2937
  %v2961 = vadd.f32 %v2960, %v2939
  %v2962 = vadd.f32 %v2961, %v2941
  %v2963 = vadd.f32 %v2962, %v2943
  %v2964 = vadd.f32 %v2963, %v2945
  %v2965 = vadd.f32 %v2964, %v2947
  %v2966 = vadd.f32 %v2965, %v2949
  %v2967 = vadd.f32 %v2966, %v2951
  %v2968 = vadd.f32 %v2967, %v2953
  %v2969 = vrot.slane %v2968, 4
  %v2970 = vadd.f32 %v2968, %v2969
  %v2971 = vrot.slane %v2970, 2
  %v2972 = vadd.f32 %v2970, %v2971
  %v2973 = vrot.slane %v2972, 1
  %v2974 = vadd.f32 %v2972, %v2973
  %2975 = vmatprep.subr.mxu0 0.0
  %2976 = vmatpush1.msra.mxu0 %v2923
  %2977 = vmatprep.subr.mxu0 0.0
  %2978 = vmatpush1.msra.mxu0 %v2925
  %2979 = vmatprep.subr.mxu0 0.0
  %2980 = vmatpush1.msra.mxu0 %v2927
  %2981 = vmatprep.subr.mxu0 0.0
  %2982 = vmatpush1.msra.mxu0 %v2929
  %2983 = vmatprep.subr.mxu0 0.0
  %2984 = vmatpush1.msra.mxu0 %v2931
  %2985 = vmatprep.subr.mxu0 0.0
  %2986 = vmatpush1.msra.mxu0 %v2933
  %2987 = vmatprep.subr.mxu0 0.0
  %2988 = vmatpush1.msra.mxu0 %v2935
  %2989 = vmatprep.subr.mxu0 0.0
  %2990 = vmatpush1.msra.mxu0 %v2937
  %2991 = vmatprep.subr.mxu0 0.0
  %2992 = vmatpush1.msra.mxu0 %v2939
  %2993 = vmatprep.subr.mxu0 0.0
  %2994 = vmatpush1.msra.mxu0 %v2941
  %2995 = vmatprep.subr.mxu0 0.0
  %2996 = vmatpush1.msra.mxu0 %v2943
  %2997 = vmatprep.subr.mxu0 0.0
  %2998 = vmatpush1.msra.mxu0 %v2945
  %2999 = vmatprep.subr.mxu0 0.0
  %3000 = vmatpush1.msra.mxu0 %v2947
  %3001 = vmatprep.subr.mxu0 0.0
  %3002 = vmatpush1.msra.mxu0 %v2949
  %3003 = vmatprep.subr.mxu0 0.0
  %3004 = vmatpush1.msra.mxu0 %v2951
  %3005 = vmatprep.subr.mxu0 0.0
  %3006 = vmatpush1.msra.mxu0 %v2953
  %3007 = vmatprep.subr.mxu0 0.0
  %3008 = vmatpush1.msra.mxu0 0.0
  %3009 = vmatprep.subr.mxu0 0.0
  %3010 = vmatpush1.msra.mxu0 0.0
  %3011 = vmatprep.subr.mxu0 0.0
  %3012 = vmatpush1.msra.mxu0 0.0
  %3013 = vmatprep.subr.mxu0 0.0
  %3014 = vmatpush1.msra.mxu0 0.0
  %3015 = vmatprep.subr.mxu0 0.0
  %3016 = vmatpush1.msra.mxu0 0.0
  %3017 = vmatprep.subr.mxu0 0.0
  %3018 = vmatpush1.msra.mxu0 0.0
  %3019 = vmatprep.subr.mxu0 0.0
  %3020 = vmatpush1.msra.mxu0 0.0
  %3021 = vmatprep.subr.mxu0 0.0
  %3022 = vmatpush1.msra.mxu0 0.0
  %3023 = vmatprep.subr.mxu0 0.0
  %3024 = vmatpush1.msra.mxu0 0.0
  %3025 = vmatprep.subr.mxu0 0.0
  %3026 = vmatpush1.msra.mxu0 0.0
  %3027 = vmatprep.subr.mxu0 0.0
  %3028 = vmatpush1.msra.mxu0 0.0
  %3029 = vmatprep.subr.mxu0 0.0
  %3030 = vmatpush1.msra.mxu0 0.0
  %3031 = vmatprep.subr.mxu0 0.0
  %3032 = vmatpush1.msra.mxu0 0.0
  %3033 = vmatprep.subr.mxu0 0.0
  %3034 = vmatpush1.msra.mxu0 0.0
  %3035 = vmatprep.subr.mxu0 0.0
  %3036 = vmatpush1.msra.mxu0 0.0
  %3037 = vmatprep.subr.mxu0 0.0
  %3038 = vmatpush1.msra.mxu0 0.0
  %3039 = vmatprep.mubr.f32.mxu0 0.0
  %3040 = vmatmul.mubr.f32.gmra.mrb[0].mxu0 %v203
  %v3041 = vpop.f32.mrb[0].mxu0
  %v3042 = vadd.f32 0.0, %v3041
  %v3043 = vpop.f32.mrb[0].mxu0
  %3044 = vdwg.mxu0
  %v3045 = vrcp.pop %v2974
  %v3046 = vmul.f32 1.0, %v3045
  %v3047 = vmul.f32 %v3042, %v3046
  %v3048 = vld [vmem:[%s0 + $0x28] sm:$0xff]
  %v3049 = vadd.f32 %v3047, %v1452
  %v3050 = vmax.f32 %v3049, 0.0
  %v3051 = vadd.f32 %v3050, %v3048
  %3052 = vst [vmem:[%s4 + $0x28] sm:$0xff] %v3051
  %v3053 = vadd.f32 %v161, %v1461
  %v3054 = vadd.f32 %v185, %v1467
  %3055 = vxpose.xlu0.b32.start [1/16] %v3054, 128
  %3056 = vxpose.xlu0.b32.cont [2/16] %v3053, 128
  %3057 = vxpose.xlu0.b32.cont [3/16] 0.0, 128
  %3058 = vxpose.xlu0.b32.cont [4/16] 0.0, 128
  %3059 = vxpose.xlu0.b32.cont [5/16] 0.0, 128
  %3060 = vxpose.xlu0.b32.cont [6/16] 0.0, 128
  %3061 = vxpose.xlu0.b32.cont [7/16] 0.0, 128
  %3062 = vxpose.xlu0.b32.cont [8/16] 0.0, 128
  %3063 = vxpose.xlu0.b32.cont [9/16] 0.0, 128
  %3064 = vxpose.xlu0.b32.cont [10/16] 0.0, 128
  %3065 = vxpose.xlu0.b32.cont [11/16] 0.0, 128
  %3066 = vxpose.xlu0.b32.cont [12/16] 0.0, 128
  %3067 = vxpose.xlu0.b32.cont [13/16] 0.0, 128
  %3068 = vxpose.xlu0.b32.cont [14/16] 0.0, 128
  %3069 = vxpose.xlu0.b32.cont [15/16] 0.0, 128
  %3070 = vxpose.xlu0.b32.end [16/16] 0.0, 128
  %v3071 = vpop.trf.xlu0
  %v3072 = vpop.trf.xlu0
  %v3073 = vpop.trf.xlu0
  %v3074 = vpop.trf.xlu0
  %v3075 = vpop.trf.xlu0
  %v3076 = vpop.trf.xlu0
  %v3077 = vpop.trf.xlu0
  %v3078 = vpop.trf.xlu0
  %v3079 = vpop.trf.xlu0
  %v3080 = vpop.trf.xlu0
  %v3081 = vpop.trf.xlu0
  %v3082 = vpop.trf.xlu0
  %v3083 = vpop.trf.xlu0
  %v3084 = vpop.trf.xlu0
  %v3085 = vpop.trf.xlu0
  %v3086 = vpop.trf.xlu0
  %v3088 = vsel %vm271, %v3071, 0
  %v3091 = vsel %vm271, %v3072, 0
  %v3094 = vsel %vm271, %v3073, 0
  %v3097 = vsel %vm271, %v3074, 0
  %v3100 = vsel %vm271, %v3075, 0
  %v3103 = vsel %vm271, %v3076, 0
  %v3106 = vsel %vm271, %v3077, 0
  %v3109 = vsel %vm271, %v3078, 0
  %v3112 = vsel %vm271, %v3079, 0
  %v3115 = vsel %vm271, %v3080, 0
  %v3118 = vsel %vm271, %v3081, 0
  %v3121 = vsel %vm271, %v3082, 0
  %v3124 = vsel %vm271, %v3083, 0
  %v3127 = vsel %vm271, %v3084, 0
  %v3130 = vsel %vm271, %v3085, 0
  %v3133 = vsel %vm271, %v3086, 0
  %3135 = vmatprep.subr.mxu0 0.0
  %3136 = vmatpush1.msra.mxu0 %v3053
  %3137 = vmatprep.subr.mxu0 0.0
  %3138 = vmatpush1.msra.mxu0 %v226
  %3139 = vmatprep.subr.mxu0 0.0
  %3140 = vmatpush1.msra.mxu0 0.0
  %3141 = vmatprep.subr.mxu0 0.0
  %3142 = vmatpush1.msra.mxu0 0.0
  %3143 = vmatprep.subr.mxu0 0.0
  %3144 = vmatpush1.msra.mxu0 0.0
  %3145 = vmatprep.subr.mxu0 0.0
  %3146 = vmatpush1.msra.mxu0 0.0
  %3147 = vmatprep.subr.mxu0 0.0
  %3148 = vmatpush1.msra.mxu0 0.0
  %3149 = vmatprep.subr.mxu0 0.0
  %3150 = vmatpush1.msra.mxu0 0.0
  %3151 = vmatprep.subr.mxu0 0.0
  %3152 = vmatpush1.msra.mxu0 0.0
  %3153 = vmatprep.subr.mxu0 0.0
  %3154 = vmatpush1.msra.mxu0 0.0
  %3155 = vmatprep.subr.mxu0 0.0
  %3156 = vmatpush1.msra.mxu0 0.0
  %3157 = vmatprep.subr.mxu0 0.0
  %3158 = vmatpush1.msra.mxu0 0.0
  %3159 = vmatprep.subr.mxu0 0.0
  %3160 = vmatpush1.msra.mxu0 0.0
  %3161 = vmatprep.subr.mxu0 0.0
  %3162 = vmatpush1.msra.mxu0 0.0
  %3163 = vmatprep.subr.mxu0 0.0
  %3164 = vmatpush1.msra.mxu0 0.0
  %3165 = vmatprep.subr.mxu0 0.0
  %3166 = vmatpush1.msra.mxu0 0.0
  %3167 = vmatprep.subr.mxu0 0.0
  %3168 = vmatpush1.msra.mxu0 0.0
  %3169 = vmatprep.subr.mxu0 0.0
  %3170 = vmatpush1.msra.mxu0 0.0
  %3171 = vmatprep.subr.mxu0 0.0
  %3172 = vmatpush1.msra.mxu0 0.0
  %3173 = vmatprep.subr.mxu0 0.0
  %3174 = vmatpush1.msra.mxu0 0.0
  %3175 = vmatprep.subr.mxu0 0.0
  %3176 = vmatpush1.msra.mxu0 0.0
  %3177 = vmatprep.subr.mxu0 0.0
  %3178 = vmatpush1.msra.mxu0 0.0
  %3179 = vmatprep.subr.mxu0 0.0
  %3180 = vmatpush1.msra.mxu0 0.0
  %3181 = vmatprep.subr.mxu0 0.0
  %3182 = vmatpush1.msra.mxu0 0.0
  %3183 = vmatprep.subr.mxu0 0.0
  %3184 = vmatpush1.msra.mxu0 0.0
  %3185 = vmatprep.subr.mxu0 0.0
  %3186 = vmatpush1.msra.mxu0 0.0
  %3187 = vmatprep.subr.mxu0 0.0
  %3188 = vmatpush1.msra.mxu0 0.0
  %3189 = vmatprep.subr.mxu0 0.0
  %3190 = vmatpush1.msra.mxu0 0.0
  %3191 = vmatprep.subr.mxu0 0.0
  %3192 = vmatpush1.msra.mxu0 0.0
  %3193 = vmatprep.subr.mxu0 0.0
  %3194 = vmatpush1.msra.mxu0 0.0
  %3195 = vmatprep.subr.mxu0 0.0
  %3196 = vmatpush1.msra.mxu0 0.0
  %3197 = vmatprep.subr.mxu0 0.0
  %3198 = vmatpush1.msra.mxu0 0.0
  %3199 = vmatprep.mubr.f32.mxu0 0.0
  %3200 = vmatmul.mubr.f32.gmra.mrb[0].mxu0 %v3088
  %v3201 = vpop.f32.mrb[0].mxu0
  %v3202 = vadd.f32 0.0, %v3201
  %v3203 = vpop.f32.mrb[0].mxu0
  %3204 = vmatprep.mubr.f32.mxu0 0.0
  %3205 = vmatmul.mubr.f32.gmra.mrb[0].mxu0 %v3091
  %v3206 = vpop.f32.mrb[0].mxu0
  %v3207 = vadd.f32 0.0, %v3206
  %v3208 = vpop.f32.mrb[0].mxu0
  %3209 = vmatprep.mubr.f32.mxu0 0.0
  %3210 = vmatmul.mubr.f32.gmra.mrb[0].mxu0 %v3094
  %v3211 = vpop.f32.mrb[0].mxu0
  %v3212 = vadd.f32 0.0, %v3211
  %v3213 = vpop.f32.mrb[0].mxu0
  %3214 = vmatprep.mubr.f32.mxu0 0.0
  %3215 = vmatmul.mubr.f32.gmra.mrb[0].mxu0 %v3097
  %v3216 = vpop.f32.mrb[0].mxu0
  %v3217 = vadd.f32 0.0, %v3216
  %v3218 = vpop.f32.mrb[0].mxu0
  %3219 = vmatprep.mubr.f32.mxu0 0.0
  %3220 = vmatmul.mubr.f32.gmra.mrb[0].mxu0 %v3100
  %v3221 = vpop.f32.mrb[0].mxu0
  %v3222 = vadd.f32 0.0, %v3221
  %v3223 = vpop.f32.mrb[0].mxu0
  %3224 = vmatprep.mubr.f32.mxu0 0.0
  %3225 = vmatmul.mubr.f32.gmra.mrb[0].mxu0 %v3103
  %v3226 = vpop.f32.mrb[0].mxu0
  %v3227 = vadd.f32 0.0, %v3226
  %v3228 = vpop.f32.mrb[0].mxu0
  %3229 = vmatprep.mubr.f32.mxu0 0.0
  %3230 = vmatmul.mubr.f32.gmra.mrb[0].mxu0 %v3106
  %v3231 = vpop.f32.mrb[0].mxu0
  %v3232 = vadd.f32 0.0, %v3231
  %v3233 = vpop.f32.mrb[0].mxu0
  %3234 = vmatprep.mubr.f32.mxu0 0.0
  %3235 = vmatmul.mubr.f32.gmra.mrb[0].mxu0 %v3109
  %v3236 = vpop.f32.mrb[0].mxu0
  %v3237 = vadd.f32 0.0, %v3236
  %v3238 = vpop.f32.mrb[0].mxu0
  %3239 = vmatprep.mubr.f32.mxu0 0.0
  %3240 = vmatmul.mubr.f32.gmra.mrb[0].mxu0 %v3112
  %v3241 = vpop.f32.mrb[0].mxu0
  %v3242 = vadd.f32 0.0, %v3241
  %v3243 = vpop.f32.mrb[0].mxu0
  %3244 = vmatprep.mubr.f32.mxu0 0.0
  %3245 = vmatmul.mubr.f32.gmra.mrb[0].mxu0 %v3115
  %v3246 = vpop.f32.mrb[0].mxu0
  %v3247 = vadd.f32 0.0, %v3246
  %v3248 = vpop.f32.mrb[0].mxu0
  %3249 = vmatprep.mubr.f32.mxu0 0.0
  %3250 = vmatmul.mubr.f32.gmra.mrb[0].mxu0 %v3118
  %v3251 = vpop.f32.mrb[0].mxu0
  %v3252 = vadd.f32 0.0, %v3251
  %v3253 = vpop.f32.mrb[0].mxu0
  %3254 = vmatprep.mubr.f32.mxu0 0.0
  %3255 = vmatmul.mubr.f32.gmra.mrb[0].mxu0 %v3121
  %v3256 = vpop.f32.mrb[0].mxu0
  %v3257 = vadd.f32 0.0, %v3256
  %v3258 = vpop.f32.mrb[0].mxu0
  %3259 = vmatprep.mubr.f32.mxu0 0.0
  %3260 = vmatmul.mubr.f32.gmra.mrb[0].mxu0 %v3124
  %v3261 = vpop.f32.mrb[0].mxu0
  %v3262 = vadd.f32 0.0, %v3261
  %v3263 = vpop.f32.mrb[0].mxu0
  %3264 = vmatprep.mubr.f32.mxu0 0.0
  %3265 = vmatmul.mubr.f32.gmra.mrb[0].mxu0 %v3127
  %v3266 = vpop.f32.mrb[0].mxu0
  %v3267 = vadd.f32 0.0, %v3266
  %v3268 = vpop.f32.mrb[0].mxu0
  %3269 = vmatprep.mubr.f32.mxu0 0.0
  %3270 = vmatmul.mubr.f32.gmra.mrb[0].mxu0 %v3130
  %v3271 = vpop.f32.mrb[0].mxu0
  %v3272 = vadd.f32 0.0, %v3271
  %v3273 = vpop.f32.mrb[0].mxu0
  %3274 = vmatprep.mubr.f32.mxu0 0.0
  %3275 = vmatmul.mubr.f32.gmra.mrb[0].mxu0 %v3133
  %v3276 = vpop.f32.mrb[0].mxu0
  %v3277 = vadd.f32 0.0, %v3276
  %v3278 = vpop.f32.mrb[0].mxu0
  %3279 = vdwg.mxu0
  %v3280 = vmax.f32 %v3202, %v3222
  %v3281 = vmax.f32 %v3207, %v3227
  %v3282 = vmax.f32 %v3212, %v3232
  %v3283 = vmax.f32 %v3217, %v3237
  %v3284 = vmax.f32 %v3280, %v3242
  %v3285 = vmax.f32 %v3281, %v3247
  %v3286 = vmax.f32 %v3282, %v3252
  %v3287 = vmax.f32 %v3283, %v3257
  %v3288 = vmax.f32 %v3284, %v3262
  %v3289 = vmax.f32 %v3285, %v3267
  %v3290 = vmax.f32 %v3286, %v3272
  %v3291 = vmax.f32 %v3287, %v3277
  %v3292 = vmax.f32 %v3288, %v3289
  %v3293 = vmax.f32 %v3290, %v3291
  %v3294 = vmax.f32 %v3292, %v3293
  %v3295 = vrot.slane %v3294, 4
  %v3296 = vmax.f32 %v3294, %v3295
  %v3297 = vrot.slane %v3296, 2
  %v3298 = vmax.f32 %v3296, %v3297
  %v3299 = vrot.slane %v3298, 1
  %v3300 = vmax.f32 %v3298, %v3299
  %v3301 = vsub.f32 %v3202, %v3300
  %v3302 = vsub.f32 %v3207, %v3300
  %v3303 = vsub.f32 %v3212, %v3300
  %v3304 = vsub.f32 %v3217, %v3300
  %v3305 = vsub.f32 %v3222, %v3300
  %v3306 = vsub.f32 %v3227, %v3300
  %v3307 = vsub.f32 %v3232, %v3300
  %v3308 = vsub.f32 %v3237, %v3300
  %v3309 = vsub.f32 %v3242, %v3300
  %v3310 = vsub.f32 %v3247, %v3300
  %v3311 = vsub.f32 %v3252, %v3300
  %v3312 = vsub.f32 %v3257, %v3300
  %v3313 = vsub.f32 %v3262, %v3300
  %v3314 = vsub.f32 %v3267, %v3300
  %v3315 = vsub.f32 %v3272, %v3300
  %v3316 = vsub.f32 %v3277, %v3300
  %v3317 = vmul.f32 %v3301, 1.442695
  %v3318 = vpow.pop %v3317
  %v3319 = vmul.f32 %v3302, 1.442695
  %v3320 = vpow.pop %v3319
  %v3321 = vmul.f32 %v3303, 1.442695
  %v3322 = vpow.pop %v3321
  %v3323 = vmul.f32 %v3304, 1.442695
  %v3324 = vpow.pop %v3323
  %v3325 = vmul.f32 %v3305, 1.442695
  %v3326 = vpow.pop %v3325
  %v3327 = vmul.f32 %v3306, 1.442695
  %v3328 = vpow.pop %v3327
  %v3329 = vmul.f32 %v3307, 1.442695
  %v3330 = vpow.pop %v3329
  %v3331 = vmul.f32 %v3308, 1.442695
  %v3332 = vpow.pop %v3331
  %v3333 = vmul.f32 %v3309, 1.442695
  %v3334 = vpow.pop %v3333
  %v3335 = vmul.f32 %v3310, 1.442695
  %v3336 = vpow.pop %v3335
  %v3337 = vmul.f32 %v3311, 1.442695
  %v3338 = vpow.pop %v3337
  %v3339 = vmul.f32 %v3312, 1.442695
  %v3340 = vpow.pop %v3339
  %v3341 = vmul.f32 %v3313, 1.442695
  %v3342 = vpow.pop %v3341
  %v3343 = vmul.f32 %v3314, 1.442695
  %v3344 = vpow.pop %v3343
  %v3345 = vmul.f32 %v3315, 1.442695
  %v3346 = vpow.pop %v3345
  %v3347 = vmul.f32 %v3316, 1.442695
  %v3348 = vpow.pop %v3347
  %v3349 = vadd.f32 %v3318, %v3320
  %v3350 = vadd.f32 %v3349, %v3322
  %v3351 = vadd.f32 %v3350, %v3324
  %v3352 = vadd.f32 %v3351, %v3326
  %v3353 = vadd.f32 %v3352, %v3328
  %v3354 = vadd.f32 %v3353, %v3330
  %v3355 = vadd.f32 %v3354, %v3332
  %v3356 = vadd.f32 %v3355, %v3334
  %v3357 = vadd.f32 %v3356, %v3336
  %v3358 = vadd.f32 %v3357, %v3338
  %v3359 = vadd.f32 %v3358, %v3340
  %v3360 = vadd.f32 %v3359, %v3342
  %v3361 = vadd.f32 %v3360, %v3344
  %v3362 = vadd.f32 %v3361, %v3346
  %v3363 = vadd.f32 %v3362, %v3348
  %v3364 = vrot.slane %v3363, 4
  %v3365 = vadd.f32 %v3363, %v3364
  %v3366 = vrot.slane %v3365, 2
  %v3367 = vadd.f32 %v3365, %v3366
  %v3368 = vrot.slane %v3367, 1
  %v3369 = vadd.f32 %v3367, %v3368
  %3370 = vmatprep.subr.mxu0 0.0
  %3371 = vmatpush1.msra.mxu0 %v3318
  %3372 = vmatprep.subr.mxu0 0.0
  %3373 = vmatpush1.msra.mxu0 %v3320
  %3374 = vmatprep.subr.mxu0 0.0
  %3375 = vmatpush1.msra.mxu0 %v3322
  %3376 = vmatprep.subr.mxu0 0.0
  %3377 = vmatpush1.msra.mxu0 %v3324
  %3378 = vmatprep.subr.mxu0 0.0
  %3379 = vmatpush1.msra.mxu0 %v3326
  %3380 = vmatprep.subr.mxu0 0.0
  %3381 = vmatpush1.msra.mxu0 %v3328
  %3382 = vmatprep.subr.mxu0 0.0
  %3383 = vmatpush1.msra.mxu0 %v3330
  %3384 = vmatprep.subr.mxu0 0.0
  %3385 = vmatpush1.msra.mxu0 %v3332
  %3386 = vmatprep.subr.mxu0 0.0
  %3387 = vmatpush1.msra.mxu0 %v3334
  %3388 = vmatprep.subr.mxu0 0.0
  %3389 = vmatpush1.msra.mxu0 %v3336
  %3390 = vmatprep.subr.mxu0 0.0
  %3391 = vmatpush1.msra.mxu0 %v3338
  %3392 = vmatprep.subr.mxu0 0.0
  %3393 = vmatpush1.msra.mxu0 %v3340
  %3394 = vmatprep.subr.mxu0 0.0
  %3395 = vmatpush1.msra.mxu0 %v3342
  %3396 = vmatprep.subr.mxu0 0.0
  %3397 = vmatpush1.msra.mxu0 %v3344
  %3398 = vmatprep.subr.mxu0 0.0
  %3399 = vmatpush1.msra.mxu0 %v3346
  %3400 = vmatprep.subr.mxu0 0.0
  %3401 = vmatpush1.msra.mxu0 %v3348
  %3402 = vmatprep.subr.mxu0 0.0
  %3403 = vmatpush1.msra.mxu0 0.0
  %3404 = vmatprep.subr.mxu0 0.0
  %3405 = vmatpush1.msra.mxu0 0.0
  %3406 = vmatprep.subr.mxu0 0.0
  %3407 = vmatpush1.msra.mxu0 0.0
  %3408 = vmatprep.subr.mxu0 0.0
  %3409 = vmatpush1.msra.mxu0 0.0
  %3410 = vmatprep.subr.mxu0 0.0
  %3411 = vmatpush1.msra.mxu0 0.0
  %3412 = vmatprep.subr.mxu0 0.0
  %3413 = vmatpush1.msra.mxu0 0.0
  %3414 = vmatprep.subr.mxu0 0.0
  %3415 = vmatpush1.msra.mxu0 0.0
  %3416 = vmatprep.subr.mxu0 0.0
  %3417 = vmatpush1.msra.mxu0 0.0
  %3418 = vmatprep.subr.mxu0 0.0
  %3419 = vmatpush1.msra.mxu0 0.0
  %3420 = vmatprep.subr.mxu0 0.0
  %3421 = vmatpush1.msra.mxu0 0.0
  %3422 = vmatprep.subr.mxu0 0.0
  %3423 = vmatpush1.msra.mxu0 0.0
  %3424 = vmatprep.subr.mxu0 0.0
  %3425 = vmatpush1.msra.mxu0 0.0
  %3426 = vmatprep.subr.mxu0 0.0
  %3427 = vmatpush1.msra.mxu0 0.0
  %3428 = vmatprep.subr.mxu0 0.0
  %3429 = vmatpush1.msra.mxu0 0.0
  %3430 = vmatprep.subr.mxu0 0.0
  %3431 = vmatpush1.msra.mxu0 0.0
  %3432 = vmatprep.subr.mxu0 0.0
  %3433 = vmatpush1.msra.mxu0 0.0
  %3434 = vmatprep.mubr.f32.mxu0 0.0
  %3435 = vmatmul.mubr.f32.gmra.mrb[0].mxu0 %v209
  %v3436 = vpop.f32.mrb[0].mxu0
  %v3437 = vadd.f32 0.0, %v3436
  %v3438 = vpop.f32.mrb[0].mxu0
  %3439 = vdwg.mxu0
  %v3440 = vrcp.pop %v3369
  %v3441 = vmul.f32 1.0, %v3440
  %v3442 = vmul.f32 %v3437, %v3441
  %v3443 = vld [vmem:[%s0 + $0x38] sm:$0xff]
  %v3444 = vadd.f32 %v3442, %v1862
  %v3445 = vmax.f32 %v3444, 0.0
  %v3446 = vadd.f32 %v3445, %v3443
  %3447 = vst [vmem:[%s4 + $0x38] sm:$0xff] %v3446
  // Predicated region
  $region18: #{vit_module_forward.1} parent=0 // pred_check
    _
  $region19: #{vit_module_forward.1} parent=0 // pred_check_branch
    %3449 = sbr.rel (0) target = $region21
  $region20: #{vit_module_forward.1} parent=0 // pred_region
    _
  $region21: #{vit_module_forward.1} parent=0 // pred_fallthru
    _
  // Predicated region
  $region22: #{vit_module_forward.1} parent=0 // pred_check
    _
  $region23: #{vit_module_forward.1} parent=0 // pred_check_branch
    %3451 = sbr.rel (0) target = $region25
  $region24: #{vit_module_forward.1} parent=0 // pred_region
    _
  $region25: #{vit_module_forward.1} parent=0 // pred_fallthru
    _

</llo_original>
